<compile_context>
chip_gen: v6e
topology: v6e:2x2x1
jax: 0.10.0
libtpu: 0.0.40
codegen_flags: <defaults>
</compile_context>

<pallas_src>
import functools
import math

import jax
import jax.numpy as jnp
from jax import lax
from jax.experimental import pallas as pl
from jax.experimental.pallas import tpu as pltpu

ALPHA = 0.1
EPS_THRESH = 1e-5
UNROLL = 8  # matvec steps between convergence checks


def _pagerank_fused_kernel(at_hbm, pi0_ref, pi_out_ref, at_vmem, dma_sem, *,
                           n, alpha, eps_thresh, unroll, max_iters):
    """Fused damped power iteration.

    at_hbm     : (N, N) A_hat^T, left in HBM (memory_space=pl.ANY)
    pi0_ref    : (1, N) initial pi (row layout, lane-dense)
    pi_out_ref : (1, N) converged pi
    at_vmem    : (N, N) VMEM scratch -- single-buffered resident copy of A_hat^T
    dma_sem    : DMA semaphore for the one-shot copy
    """
    # One-shot, single-buffered DMA of A_hat^T into VMEM. No grid => nothing to
    # pipeline, so this avoids the default double-buffer (halves the N*N footprint).
    cp = pltpu.make_async_copy(at_hbm, at_vmem, dma_sem)
    cp.start()
    cp.wait()

    thresh_sq = jnp.float32(eps_thresh * eps_thresh)
    one_minus_alpha = jnp.float32(1.0 - alpha)
    alpha_over_n = jnp.float32(alpha / n)

    def cond_fn(carry):
        _, eps_sq, it = carry
        # ||d||^2 > eps^2  <=>  ||d|| > eps ; iteration cap guards non-termination.
        return jnp.logical_and(eps_sq > thresh_sq, it < max_iters)

    def body_fn(carry):
        pi, _, it = carry                              # (1, N) f32
        pi_prev = pi
        at = at_vmem[...]                              # VMEM load; no N*N closure temp
        # Unrolled matvec steps between convergence checks: amortizes the XLU
        # reduce + scalar branch over `unroll` MXU matvecs. A few extra steps past
        # convergence are negligible for a (1 - alpha) = 0.9 contraction.
        for _ in range(unroll):
            # result[0, i] = sum_j A_hat[i, j] * pi[j]; full-precision f32 MXU path.
            prop = jnp.dot(pi, at, preferred_element_type=jnp.float32,
                           precision=lax.Precision.HIGHEST)
            pi = one_minus_alpha * prop + alpha_over_n
        diff = pi - pi_prev
        eps_sq = jnp.sum(diff * diff)                  # squared L2; no per-step sqrt
        return pi, eps_sq, it + unroll

    pi_final, _, _ = lax.while_loop(
        cond_fn, body_fn, (pi0_ref[...], jnp.float32(1e30), jnp.int32(0)))
    pi_out_ref[...] = pi_final


def _physical_vmem_bytes() -> int:
    """Physical VMEM capacity of this generation; conservative fallback if unknown."""
    try:
        info = pltpu.get_tpu_info()
        cap = getattr(info, "vmem_capacity_bytes", None)
        if cap:
            return int(cap)
    except Exception:
        pass
    return 64 << 20  # smallest per-TensorCore VMEM across v5e / v6e / v7x


def make_pagerank(n: int, alpha: float, eps_thresh: float, unroll: int = UNROLL):
    # Expected iteration count for a (1 - alpha)-contraction down to eps_thresh.
    iters_est = int(math.ceil(
        math.log(1.0 / eps_thresh) / math.log(1.0 / (1.0 - alpha)))) + unroll
    # Generous safety cap (multiple of unroll) against a plateaued residual.
    max_iters = unroll * ((4 * iters_est + unroll - 1) // unroll)

    kernel = functools.partial(
        _pagerank_fused_kernel, n=n, alpha=alpha, eps_thresh=eps_thresh,
        unroll=unroll, max_iters=max_iters)

    # Single-buffered footprint: one f32 A_hat^T scratch + a few pi rows + headroom.
    vmem_needed = n * n * 4 + 64 * n * 4 + (2 << 20)
    vmem_limit = min(max(vmem_needed, 16 << 20), _physical_vmem_bytes())

    return pl.pallas_call(
        kernel,
        out_shape=jax.ShapeDtypeStruct((1, n), jnp.float32),
        in_specs=[
            pl.BlockSpec(memory_space=pl.ANY),        # A_hat^T: stays in HBM, manual DMA
            pl.BlockSpec((1, n), lambda: (0, 0)),     # pi0 row (lane-dense)
        ],
        out_specs=pl.BlockSpec((1, n), lambda: (0, 0)),
        scratch_shapes=[
            pltpu.VMEM((n, n), jnp.float32),          # resident A_hat^T (single buffer)
            pltpu.SemaphoreType.DMA(()),
        ],
        compiler_params=pltpu.CompilerParams(vmem_limit_bytes=vmem_limit),
        cost_estimate=pl.CostEstimate(
            flops=2 * n * n * iters_est,
            transcendentals=0,
            bytes_accessed=n * n * 4 + 2 * n * 4 + n * 4,
        ),
    )


def build_normalized_adjacency(edge_index: jnp.ndarray, n: int) -> jnp.ndarray:
    """Dense A_hat = D^{-1/2} (A + I) D^{-1/2} from a (2, E) edge_index.

    Degree is the row-sum of (A + I) with adj[t, s] = weight(s -> t). This matches
    PyG's gcn_norm for the symmetric (undirected) graphs used here.
    """
    src = edge_index[0]
    dst = edge_index[1]
    adj = jnp.zeros((n, n), jnp.float32).at[dst, src].add(1.0)
    adj = adj + jnp.eye(n, dtype=jnp.float32)                    # self loops
    deg = jnp.sum(adj, axis=1)
    dinv = jnp.where(deg > 0.0, lax.rsqrt(deg), 0.0)
    return dinv[:, None] * adj * dinv[None, :]


def pagerank(edge_index: jnp.ndarray, n: int, pi0: jnp.ndarray,
             alpha: float = ALPHA, eps_thresh: float = EPS_THRESH) -> jnp.ndarray:
    """Returns pi of shape (N, 1), same semantics as PageRank.forward."""
    a_hat = build_normalized_adjacency(edge_index, n)
    a_hat_t = a_hat.T                                            # row-vector matvec layout
    pi_row0 = pi0.reshape(1, n).astype(jnp.float32)
    pi_row = make_pagerank(n, alpha, eps_thresh)(a_hat_t, pi_row0)
    return pi_row.reshape(n, 1)


if __name__ == "__main__":
    N = 128  # number of graph nodes

    key = jax.random.PRNGKey(0)
    k_adj, k_pi = jax.random.split(key)

    # Deterministic small random undirected graph (symmetric edge set, no duplicates).
    mask = jax.random.bernoulli(k_adj, 0.05, (N, N))
    mask = jnp.triu(mask, 1)
    mask = jnp.logical_or(mask, mask.T)
    src, dst = jnp.nonzero(mask)
    edge_index = jnp.stack([src, dst]).astype(jnp.int32)          # (2, E)

    # pi ~ U(0,1), L1-normalized along dim 0 (matches torch.rand + p=1 norm).
    pi0 = jax.random.uniform(k_pi, (N, 1), dtype=jnp.float32)
    pi0 = pi0 / jnp.sum(jnp.abs(pi0))

    pi = jax.jit(pagerank, static_argnums=(1,))(edge_index, N, pi0)
    pi = jax.block_until_ready(pi)

    assert pi.shape == (N, 1)
    assert bool(jnp.all(jnp.isfinite(pi)))

    # Reference: identical damped power iteration in plain JAX on the same A_hat.
    a_hat = build_normalized_adjacency(edge_index, N)

    def ref_cond(c):
        return c[1] > EPS_THRESH

    def ref_body(c):
        p, _ = c
        p_new = (1.0 - ALPHA) * (a_hat @ p) + ALPHA / N
        return p_new, jnp.sqrt(jnp.sum((p_new - p) ** 2))

    pi_ref, _ = lax.while_loop(ref_cond, ref_body, (pi0, jnp.float32(1e10)))
    pi_ref = jax.block_until_ready(pi_ref)

    # Both converge (within eps_thresh) to the unique fixed point of a 0.9-contraction;
    # the unrolled kernel checks the 8-step diff, so it is at least as converged.
    assert float(jnp.max(jnp.abs(pi - pi_ref))) < 5e-4
    # Fixed-point residual check.
    resid = jnp.sqrt(jnp.sum(((1.0 - ALPHA) * (a_hat @ pi) + ALPHA / N - pi) ** 2))
    assert float(resid) < 1e-3

    print("KERNEL_OK")
</pallas_src>

<mosaic_0001>
module attributes {stable_mosaic.version = 11 : i64} {
  func.func @_pagerank_fused_kernel(%arg0: memref<128x128xf32, #tpu.memory_space<any>>, %arg1: memref<1x128xf32, #tpu.memory_space<vmem>>, %arg2: memref<1x128xf32, #tpu.memory_space<vmem>>, %arg3: memref<128x128xf32, #tpu.memory_space<vmem>>, %arg4: memref<!tpu.dma_semaphore, #tpu.memory_space<semaphore_mem>>) attributes {dimension_semantics = [], scalar_prefetch = 0 : i64, scratch_operands = 2 : i64, tpu.core_type = #tpu.core_type<tc>} {
    tpu.enqueue_dma source(%arg0 : memref<128x128xf32, #tpu.memory_space<any>>) target(%arg3 : memref<128x128xf32, #tpu.memory_space<vmem>>) target_semaphore(%arg4 : memref<!tpu.dma_semaphore, #tpu.memory_space<semaphore_mem>>)
    tpu.wait_dma2 semaphore(%arg4 : memref<!tpu.dma_semaphore, #tpu.memory_space<semaphore_mem>>) src(%arg0 : memref<128x128xf32, #tpu.memory_space<any>>) dst(%arg3 : memref<128x128xf32, #tpu.memory_space<vmem>>)
    %c0 = arith.constant 0 : index
    %c0_0 = arith.constant 0 : index
    %0 = vector.load %arg1[%c0, %c0_0] : memref<1x128xf32, #tpu.memory_space<vmem>>, vector<1x128xf32>
    %cst = arith.constant 1.000000e-10 : f32
    %cst_1 = arith.constant 0.899999976 : f32
    %cst_2 = arith.constant 7.812500e-04 : f32
    %cst_3 = arith.constant 1.000000e+30 : f32
    %c0_i32 = arith.constant 0 : i32
    %1:3 = scf.while (%arg5 = %0, %arg6 = %cst_3, %arg7 = %c0_i32) : (vector<1x128xf32>, f32, i32) -> (vector<1x128xf32>, f32, i32) {
      %3 = arith.cmpf ogt, %arg6, %cst : f32
      %c472_i32 = arith.constant 472 : i32
      %4 = arith.cmpi slt, %arg7, %c472_i32 : i32
      %5 = arith.andi %3, %4 : i1
      scf.condition(%5) %arg5, %arg6, %arg7 : vector<1x128xf32>, f32, i32
    } do {
    ^bb0(%arg5: vector<1x128xf32>, %arg6: f32, %arg7: i32):
      %c0_6 = arith.constant 0 : index
      %c0_7 = arith.constant 0 : index
      %3 = vector.load %arg3[%c0_6, %c0_7] : memref<128x128xf32, #tpu.memory_space<vmem>>, vector<128x128xf32>
      %cst_8 = arith.constant dense<0.000000e+00> : vector<1x128xf32>
      %4 = tpu.matmul %arg5, %3, %cst_8 {dimension_numbers = #tpu.dot_dimension_numbers<[1], [0], [0], [1], [0, 0, 1, 1], [], []>, precision = #tpu.contract_precision<fp32>} : vector<1x128xf32>, vector<128x128xf32>, vector<1x128xf32> -> vector<1x128xf32>
      %5 = vector.broadcast %cst_1 : f32 to vector<1x128xf32>
      %6 = arith.mulf %5, %4 : vector<1x128xf32>
      %7 = vector.broadcast %cst_2 : f32 to vector<1x128xf32>
      %8 = arith.addf %6, %7 : vector<1x128xf32>
      %cst_9 = arith.constant dense<0.000000e+00> : vector<1x128xf32>
      %9 = tpu.matmul %8, %3, %cst_9 {dimension_numbers = #tpu.dot_dimension_numbers<[1], [0], [0], [1], [0, 0, 1, 1], [], []>, precision = #tpu.contract_precision<fp32>} : vector<1x128xf32>, vector<128x128xf32>, vector<1x128xf32> -> vector<1x128xf32>
      %10 = vector.broadcast %cst_1 : f32 to vector<1x128xf32>
      %11 = arith.mulf %10, %9 : vector<1x128xf32>
      %12 = vector.broadcast %cst_2 : f32 to vector<1x128xf32>
      %13 = arith.addf %11, %12 : vector<1x128xf32>
      %cst_10 = arith.constant dense<0.000000e+00> : vector<1x128xf32>
      %14 = tpu.matmul %13, %3, %cst_10 {dimension_numbers = #tpu.dot_dimension_numbers<[1], [0], [0], [1], [0, 0, 1, 1], [], []>, precision = #tpu.contract_precision<fp32>} : vector<1x128xf32>, vector<128x128xf32>, vector<1x128xf32> -> vector<1x128xf32>
      %15 = vector.broadcast %cst_1 : f32 to vector<1x128xf32>
      %16 = arith.mulf %15, %14 : vector<1x128xf32>
      %17 = vector.broadcast %cst_2 : f32 to vector<1x128xf32>
      %18 = arith.addf %16, %17 : vector<1x128xf32>
      %cst_11 = arith.constant dense<0.000000e+00> : vector<1x128xf32>
      %19 = tpu.matmul %18, %3, %cst_11 {dimension_numbers = #tpu.dot_dimension_numbers<[1], [0], [0], [1], [0, 0, 1, 1], [], []>, precision = #tpu.contract_precision<fp32>} : vector<1x128xf32>, vector<128x128xf32>, vector<1x128xf32> -> vector<1x128xf32>
      %20 = vector.broadcast %cst_1 : f32 to vector<1x128xf32>
      %21 = arith.mulf %20, %19 : vector<1x128xf32>
      %22 = vector.broadcast %cst_2 : f32 to vector<1x128xf32>
      %23 = arith.addf %21, %22 : vector<1x128xf32>
      %cst_12 = arith.constant dense<0.000000e+00> : vector<1x128xf32>
      %24 = tpu.matmul %23, %3, %cst_12 {dimension_numbers = #tpu.dot_dimension_numbers<[1], [0], [0], [1], [0, 0, 1, 1], [], []>, precision = #tpu.contract_precision<fp32>} : vector<1x128xf32>, vector<128x128xf32>, vector<1x128xf32> -> vector<1x128xf32>
      %25 = vector.broadcast %cst_1 : f32 to vector<1x128xf32>
      %26 = arith.mulf %25, %24 : vector<1x128xf32>
      %27 = vector.broadcast %cst_2 : f32 to vector<1x128xf32>
      %28 = arith.addf %26, %27 : vector<1x128xf32>
      %cst_13 = arith.constant dense<0.000000e+00> : vector<1x128xf32>
      %29 = tpu.matmul %28, %3, %cst_13 {dimension_numbers = #tpu.dot_dimension_numbers<[1], [0], [0], [1], [0, 0, 1, 1], [], []>, precision = #tpu.contract_precision<fp32>} : vector<1x128xf32>, vector<128x128xf32>, vector<1x128xf32> -> vector<1x128xf32>
      %30 = vector.broadcast %cst_1 : f32 to vector<1x128xf32>
      %31 = arith.mulf %30, %29 : vector<1x128xf32>
      %32 = vector.broadcast %cst_2 : f32 to vector<1x128xf32>
      %33 = arith.addf %31, %32 : vector<1x128xf32>
      %cst_14 = arith.constant dense<0.000000e+00> : vector<1x128xf32>
      %34 = tpu.matmul %33, %3, %cst_14 {dimension_numbers = #tpu.dot_dimension_numbers<[1], [0], [0], [1], [0, 0, 1, 1], [], []>, precision = #tpu.contract_precision<fp32>} : vector<1x128xf32>, vector<128x128xf32>, vector<1x128xf32> -> vector<1x128xf32>
      %35 = vector.broadcast %cst_1 : f32 to vector<1x128xf32>
      %36 = arith.mulf %35, %34 : vector<1x128xf32>
      %37 = vector.broadcast %cst_2 : f32 to vector<1x128xf32>
      %38 = arith.addf %36, %37 : vector<1x128xf32>
      %cst_15 = arith.constant dense<0.000000e+00> : vector<1x128xf32>
      %39 = tpu.matmul %38, %3, %cst_15 {dimension_numbers = #tpu.dot_dimension_numbers<[1], [0], [0], [1], [0, 0, 1, 1], [], []>, precision = #tpu.contract_precision<fp32>} : vector<1x128xf32>, vector<128x128xf32>, vector<1x128xf32> -> vector<1x128xf32>
      %40 = vector.broadcast %cst_1 : f32 to vector<1x128xf32>
      %41 = arith.mulf %40, %39 : vector<1x128xf32>
      %42 = vector.broadcast %cst_2 : f32 to vector<1x128xf32>
      %43 = arith.addf %41, %42 : vector<1x128xf32>
      %44 = arith.subf %43, %arg5 : vector<1x128xf32>
      %45 = arith.mulf %44, %44 : vector<1x128xf32>
      %46 = vector.shape_cast %45 : vector<1x128xf32> to vector<1x1x128xf32>
      %cst_16 = arith.constant dense<0.000000e+00> : vector<1xf32>
      %47 = vector.multi_reduction <add>, %46, %cst_16 [1, 2] : vector<1x1x128xf32> to vector<1xf32>
      %48 = vector.shape_cast %47 : vector<1xf32> to vector<1x1x1xf32>
      %49 = vector.extract %48[0, 0, 0] : f32 from vector<1x1x1xf32>
      %c8_i32 = arith.constant 8 : i32
      %50 = arith.addi %arg7, %c8_i32 : i32
      scf.yield %43, %49, %50 : vector<1x128xf32>, f32, i32
    }
    %c0_4 = arith.constant 0 : index
    %c0_5 = arith.constant 0 : index
    %2 = vector.load %arg2[%c0_4, %c0_5] : memref<1x128xf32, #tpu.memory_space<vmem>>, vector<1x128xf32>
    tpu.vector_store %arg2[%c0_4, %c0_5], %1#0 {strides = array<i32>} : memref<1x128xf32, #tpu.memory_space<vmem>>, vector<1x128xf32>,
    return
  }
}

</mosaic_0001>

<llo_original>
// kernel: pagerank.1
$region0: #{pagerank.1}
  #allocation0 [shape = 'u32[]', space=smem, size = 0x4, offset = 0x4, fixed_abs, tag = 'smem constant byte address 0x4 - core index']
  #allocation1 [shape = 'u32[144,128]{1,0:T(1,128)}', space=vmem, size = 0x12000, scoped, tag = 'internal scratch']
  #allocation2 [shape = 'f32[128,128]{1,0:T(8,128)}', space=vmem, size = 0x10000, scoped, tag = 'scratch operand']
  #allocation3 [shape = 's32[1]{0}', space=sflag, size = 0x4, scoped, tag = 'scratch operand']
  #allocation6 [shape = 's32[]', space=sflag, size = 0x4, offset = 0, fixed_abs, tag = 'sflag constant byte address 0x0 - dummy sync flag']
  %s0 = inlined_call_operand.vmem [shape: f32[128,128], index: 0, kind: input, shape index: {}]
  %s1 = inlined_call_operand.vmem [shape: f32[1,128], index: 1, kind: input, shape index: {}]
  %s2 = inlined_call_operand.hbm [shape: f32[1,128], index: 2, kind: output, shape index: {}]
  %s3 = sld [smem:[#allocation0]]
  $region55: #{pagerank.1} parent=0
    _
  %s5 = ssub.s32 1, %s3
  %s6 = scalar_select 0, %s5, %s3
  $region1: #{pagerank.1} parent=0
    #allocation4 [shape = 'u8[512]{0}', space=vmem, size = 0x400, scoped, tag = 'output window, operand 0, single buffered']
    #allocation5 [shape = 's32[1]{0}', space=sflag, size = 0x4, scoped, tag = 'scoped memory for pagerank.1']
    %7 = vsyncpa [#allocation5], 0
    // Predicated region
    $region2: #{pagerank.1} parent=1 // pred_check
      _
    $region3: #{pagerank.1} parent=1 // pred_check_branch
      %9 = sbr.rel (0) target = $region5
    $region4: #{pagerank.1} parent=1 // pred_region
      _
    $region5: #{pagerank.1} parent=1 // pred_fallthru
      _
    %p11 = scmp.lt.u32.totalorder 128, 8
    %p12 = pneg %p11
    // Predicated region
    $region6: #{pagerank.1} parent=1 // pred_check
      _
    $region7: #{pagerank.1} parent=1 // pred_check_branch
      %14 = sbr.rel (%p11) target = $region9
    $region8: #{pagerank.1} parent=1 // pred_region
      %s30 = sand.u32 128, 7
      %p31 = scmp.eq.s32.totalorder %s30, 0
      // Predicated region
      $region21: #{pagerank.1} parent=8 // pred_check
        %p32 = pneg %p31
      $region22: #{pagerank.1} parent=8 // pred_check_branch
        %34 = sbr.rel (%p32) target = $region24
      $region23: #{pagerank.1} parent=8 // pred_region
        loop: start=0, step=1, limit=1
        $region25: #{pagerank.1} parent=23 // loop_pre_header
          _
        $region26: #{pagerank.1} parent=23 // loop_header
          %s36 = sphi 0, %s40
          %p37 = scmp.ge.s32.totalorder %s36, 1
          %s41 = sphi %s0, %s0
          %s42 = sphi [#allocation2], [#allocation2]
        $region27: #{pagerank.1} parent=23 // loop_header_branch
          %39 = sbr.rel (%p37) target = $region31
        $region28: #{pagerank.1} parent=23 // loop_body
          %v43 = vld [vmem:[%s41] sm:$0xff]
          %44 = vst [vmem:[%s42] sm:$0xff] %v43
          %v45 = vld [vmem:[%s41 + $0x8] sm:$0xff]
          %46 = vst [vmem:[%s42 + $0x8] sm:$0xff] %v45
          %v47 = vld [vmem:[%s41 + $0x10] sm:$0xff]
          %48 = vst [vmem:[%s42 + $0x10] sm:$0xff] %v47
          %v49 = vld [vmem:[%s41 + $0x18] sm:$0xff]
          %50 = vst [vmem:[%s42 + $0x18] sm:$0xff] %v49
          %v51 = vld [vmem:[%s41 + $0x20] sm:$0xff]
          %52 = vst [vmem:[%s42 + $0x20] sm:$0xff] %v51
          %v53 = vld [vmem:[%s41 + $0x28] sm:$0xff]
          %54 = vst [vmem:[%s42 + $0x28] sm:$0xff] %v53
          %v55 = vld [vmem:[%s41 + $0x30] sm:$0xff]
          %56 = vst [vmem:[%s42 + $0x30] sm:$0xff] %v55
          %v57 = vld [vmem:[%s41 + $0x38] sm:$0xff]
          %58 = vst [vmem:[%s42 + $0x38] sm:$0xff] %v57
          %v59 = vld [vmem:[%s41 + $0x40] sm:$0xff]
          %60 = vst [vmem:[%s42 + $0x40] sm:$0xff] %v59
          %v61 = vld [vmem:[%s41 + $0x48] sm:$0xff]
          %62 = vst [vmem:[%s42 + $0x48] sm:$0xff] %v61
          %v63 = vld [vmem:[%s41 + $0x50] sm:$0xff]
          %64 = vst [vmem:[%s42 + $0x50] sm:$0xff] %v63
          %v65 = vld [vmem:[%s41 + $0x58] sm:$0xff]
          %66 = vst [vmem:[%s42 + $0x58] sm:$0xff] %v65
          %v67 = vld [vmem:[%s41 + $0x60] sm:$0xff]
          %68 = vst [vmem:[%s42 + $0x60] sm:$0xff] %v67
          %v69 = vld [vmem:[%s41 + $0x68] sm:$0xff]
          %70 = vst [vmem:[%s42 + $0x68] sm:$0xff] %v69
          %v71 = vld [vmem:[%s41 + $0x70] sm:$0xff]
          %72 = vst [vmem:[%s42 + $0x70] sm:$0xff] %v71
          %v73 = vld [vmem:[%s41 + $0x78] sm:$0xff]
          %74 = vst [vmem:[%s42 + $0x78] sm:$0xff] %v73
        $region29: #{pagerank.1} parent=23 // loop_footer
          %s40 = sadd.s32 1, %s36
        $region30: #{pagerank.1} parent=23 // loop_footer_branch
          %35 = sbr.rel target = $region26
        $region31: #{pagerank.1} parent=23 // loop_exit
          _
      $region24: #{pagerank.1} parent=8 // pred_fallthru
        _
      %p75 = pneg %p31
      // Predicated region
      $region32: #{pagerank.1} parent=8 // pred_check
        _
      $region33: #{pagerank.1} parent=8 // pred_check_branch
        %77 = sbr.rel (%p31) target = $region35
      $region34: #{pagerank.1} parent=8 // pred_region
        %s78 = sand.u32 128, 7
      $region35: #{pagerank.1} parent=8 // pred_fallthru
        _
    $region9: #{pagerank.1} parent=1 // pred_fallthru
      _
    // Predicated region
    $region10: #{pagerank.1} parent=1 // pred_check
      %p15 = pneg %p11
    $region11: #{pagerank.1} parent=1 // pred_check_branch
      %17 = sbr.rel (%p15) target = $region13
    $region12: #{pagerank.1} parent=1 // pred_region
      %s18 = sshll.u32 1, 128
      %s19 = ssub.s32 %s18, 1
      loop: start=0, step=1, limit=1
      $region14: #{pagerank.1} parent=12 // loop_pre_header
        _
      $region15: #{pagerank.1} parent=12 // loop_header
        %s21 = sphi 0, %s25
        %p22 = scmp.ge.s32.totalorder %s21, 1
        %s26 = sphi %s0, %s0
        %s27 = sphi [#allocation2], [#allocation2]
      $region16: #{pagerank.1} parent=12 // loop_header_branch
        %24 = sbr.rel (%p22) target = $region20
      $region17: #{pagerank.1} parent=12 // loop_body
        %v28 = vld [vmem:[%s26] sm:%s19]
        %29 = vst [vmem:[%s27] sm:%s19] %v28
      $region18: #{pagerank.1} parent=12 // loop_footer
        %s25 = sadd.s32 1, %s21
      $region19: #{pagerank.1} parent=12 // loop_footer_branch
        %20 = sbr.rel target = $region15
      $region20: #{pagerank.1} parent=12 // loop_exit
        _
    $region13: #{pagerank.1} parent=1 // pred_fallthru
      _
    // Predicated region
    $region36: #{pagerank.1} parent=1 // pred_check
      _
    $region37: #{pagerank.1} parent=1 // pred_check_branch
      %81 = sbr.rel (0) target = $region39
    $region38: #{pagerank.1} parent=1 // pred_region
      %82 = vsyncadd [#allocation3], 2048
    $region39: #{pagerank.1} parent=1 // pred_fallthru
      _
    %s83 = smul.u32 128, 1
    %s84 = sshll.u32 %s83, 4
    %85 = dma.done [#allocation3], %s84
    %v86 = vld [vmem:[%s1] sm:$0x1]
    // While loop
    $region40: #{pagerank.1} parent=1 // loop_pre_header
      _
    $region41: #{pagerank.1} parent=1 // loop_header
      %v88 = vphi %v86, %v5256
      %s89 = sphi 1e+30, %s5269
      %s90 = sphi 0, %s5270
      %p91 = scmp.gt.f32.partialorder %s89, 1e-10
      %p92 = scmp.lt.s32.totalorder %s90, 472
      %p93 = pnand %p91, %p92
      %p94 = pneg %p93
    $region42: #{pagerank.1} parent=1 // loop_header_branch
      %96 = sbr.rel (%p93) target = $region46
    $region43: #{pagerank.1} parent=1 // loop_body
      %v97 = vld [vmem:[#allocation2] sm:$0xff]
      %v98 = vld [vmem:[#allocation2 + $0x8] sm:$0xff]
      %v99 = vld [vmem:[#allocation2 + $0x10] sm:$0xff]
      %v100 = vld [vmem:[#allocation2 + $0x18] sm:$0xff]
      %v101 = vld [vmem:[#allocation2 + $0x20] sm:$0xff]
      %v102 = vld [vmem:[#allocation2 + $0x28] sm:$0xff]
      %v103 = vld [vmem:[#allocation2 + $0x30] sm:$0xff]
      %v104 = vld [vmem:[#allocation2 + $0x38] sm:$0xff]
      %v105 = vld [vmem:[#allocation2 + $0x40] sm:$0xff]
      %v106 = vld [vmem:[#allocation2 + $0x48] sm:$0xff]
      %v107 = vld [vmem:[#allocation2 + $0x50] sm:$0xff]
      %v108 = vld [vmem:[#allocation2 + $0x58] sm:$0xff]
      %v109 = vld [vmem:[#allocation2 + $0x60] sm:$0xff]
      %v110 = vld [vmem:[#allocation2 + $0x68] sm:$0xff]
      %v111 = vld [vmem:[#allocation2 + $0x70] sm:$0xff]
      %v112 = vld [vmem:[#allocation2 + $0x78] sm:$0xff]
      %113 = vmatprep.subr.mxu0 0.0
      %v114 = vand.u32 %v112, 4294901760
      %115 = vmatpush1.msra.mxu0 %v114
      %116 = vmatprep.subr.mxu0 0.0
      %v117 = vand.u32 %v111, 4294901760
      %118 = vmatpush1.msra.mxu0 %v117
      %119 = vmatprep.subr.mxu0 0.0
      %v120 = vand.u32 %v110, 4294901760
      %121 = vmatpush1.msra.mxu0 %v120
      %122 = vmatprep.subr.mxu0 0.0
      %v123 = vand.u32 %v109, 4294901760
      %124 = vmatpush1.msra.mxu0 %v123
      %125 = vmatprep.subr.mxu0 0.0
      %v126 = vand.u32 %v108, 4294901760
      %127 = vmatpush1.msra.mxu0 %v126
      %128 = vmatprep.subr.mxu0 0.0
      %v129 = vand.u32 %v107, 4294901760
      %130 = vmatpush1.msra.mxu0 %v129
      %131 = vmatprep.subr.mxu0 0.0
      %v132 = vand.u32 %v106, 4294901760
      %133 = vmatpush1.msra.mxu0 %v132
      %134 = vmatprep.subr.mxu0 0.0
      %v135 = vand.u32 %v105, 4294901760
      %136 = vmatpush1.msra.mxu0 %v135
      %137 = vmatprep.subr.mxu0 0.0
      %v138 = vand.u32 %v104, 4294901760
      %139 = vmatpush1.msra.mxu0 %v138
      %140 = vmatprep.subr.mxu0 0.0
      %v141 = vand.u32 %v103, 4294901760
      %142 = vmatpush1.msra.mxu0 %v141
      %143 = vmatprep.subr.mxu0 0.0
      %v144 = vand.u32 %v102, 4294901760
      %145 = vmatpush1.msra.mxu0 %v144
      %146 = vmatprep.subr.mxu0 0.0
      %v147 = vand.u32 %v101, 4294901760
      %148 = vmatpush1.msra.mxu0 %v147
      %149 = vmatprep.subr.mxu0 0.0
      %v150 = vand.u32 %v100, 4294901760
      %151 = vmatpush1.msra.mxu0 %v150
      %152 = vmatprep.subr.mxu0 0.0
      %v153 = vand.u32 %v99, 4294901760
      %154 = vmatpush1.msra.mxu0 %v153
      %155 = vmatprep.subr.mxu0 0.0
      %v156 = vand.u32 %v98, 4294901760
      %157 = vmatpush1.msra.mxu0 %v156
      %158 = vmatprep.subr.mxu0 0.0
      %v159 = vand.u32 %v97, 4294901760
      %160 = vmatpush1.msra.mxu0 %v159
      %161 = vmatprep.subr.mxu0 0.0
      %162 = vmatpush2.msra.mxu0 0.0
      %163 = vmatprep.subr.mxu0 0.0
      %164 = vmatpush2.msra.mxu0 0.0
      %165 = vmatprep.subr.mxu0 0.0
      %166 = vmatpush2.msra.mxu0 0.0
      %167 = vmatprep.subr.mxu0 0.0
      %168 = vmatpush2.msra.mxu0 0.0
      %169 = vmatprep.subr.mxu0 0.0
      %170 = vmatpush2.msra.mxu0 0.0
      %171 = vmatprep.subr.mxu0 0.0
      %172 = vmatpush2.msra.mxu0 0.0
      %173 = vmatprep.subr.mxu0 0.0
      %174 = vmatpush2.msra.mxu0 0.0
      %175 = vmatprep.subr.mxu0 0.0
      %176 = vmatpush2.msra.mxu0 0.0
      %177 = vmatprep.subr.mxu0 0.0
      %178 = vmatpush2.msra.mxu0 0.0
      %179 = vmatprep.subr.mxu0 0.0
      %180 = vmatpush2.msra.mxu0 0.0
      %181 = vmatprep.subr.mxu0 0.0
      %182 = vmatpush2.msra.mxu0 0.0
      %183 = vmatprep.subr.mxu0 0.0
      %184 = vmatpush2.msra.mxu0 0.0
      %185 = vmatprep.subr.mxu0 0.0
      %186 = vmatpush2.msra.mxu0 0.0
      %187 = vmatprep.subr.mxu0 0.0
      %188 = vmatpush2.msra.mxu0 0.0
      %189 = vmatprep.subr.mxu0 0.0
      %190 = vmatpush2.msra.mxu0 0.0
      %191 = vmatprep.subr.mxu0 0.0
      %192 = vmatpush2.msra.mxu0 0.0
      %193 = vmatprep.mubr.f32.mxu0 0.0
      %v194 = vand.u32 %v88, 4294901760
      %v195 = vsub.f32 %v88, %v194
      %v196 = vand.u32 %v195, 4294901760
      %v197 = vsub.f32 %v195, %v196
      %v198 = vand.u32 %v197, 4294901760
      %199 = vmatmul.mubr.f32.gmra.mxu0 %v198
      %v200 = vpop.f32.mrf.mxu0
      %v201 = vadd.f32 0.0, %v200
      %v202 = vpop.f32.mrf.mxu0
      %203 = vdwg.mxu0
      %204 = vmatprep.subr.mxu0 0.0
      %v205 = vand.u32 %v112, 4294901760
      %v206 = vsub.f32 %v112, %v205
      %v207 = vand.u32 %v206, 4294901760
      %v208 = vsub.f32 %v206, %v207
      %v209 = vand.u32 %v208, 4294901760
      %210 = vmatpush1.msra.mxu0 %v209
      %211 = vmatprep.subr.mxu0 0.0
      %v212 = vand.u32 %v111, 4294901760
      %v213 = vsub.f32 %v111, %v212
      %v214 = vand.u32 %v213, 4294901760
      %v215 = vsub.f32 %v213, %v214
      %v216 = vand.u32 %v215, 4294901760
      %217 = vmatpush1.msra.mxu0 %v216
      %218 = vmatprep.subr.mxu0 0.0
      %v219 = vand.u32 %v110, 4294901760
      %v220 = vsub.f32 %v110, %v219
      %v221 = vand.u32 %v220, 4294901760
      %v222 = vsub.f32 %v220, %v221
      %v223 = vand.u32 %v222, 4294901760
      %224 = vmatpush1.msra.mxu0 %v223
      %225 = vmatprep.subr.mxu0 0.0
      %v226 = vand.u32 %v109, 4294901760
      %v227 = vsub.f32 %v109, %v226
      %v228 = vand.u32 %v227, 4294901760
      %v229 = vsub.f32 %v227, %v228
      %v230 = vand.u32 %v229, 4294901760
      %231 = vmatpush1.msra.mxu0 %v230
      %232 = vmatprep.subr.mxu0 0.0
      %v233 = vand.u32 %v108, 4294901760
      %v234 = vsub.f32 %v108, %v233
      %v235 = vand.u32 %v234, 4294901760
      %v236 = vsub.f32 %v234, %v235
      %v237 = vand.u32 %v236, 4294901760
      %238 = vmatpush1.msra.mxu0 %v237
      %239 = vmatprep.subr.mxu0 0.0
      %v240 = vand.u32 %v107, 4294901760
      %v241 = vsub.f32 %v107, %v240
      %v242 = vand.u32 %v241, 4294901760
      %v243 = vsub.f32 %v241, %v242
      %v244 = vand.u32 %v243, 4294901760
      %245 = vmatpush1.msra.mxu0 %v244
      %246 = vmatprep.subr.mxu0 0.0
      %v247 = vand.u32 %v106, 4294901760
      %v248 = vsub.f32 %v106, %v247
      %v249 = vand.u32 %v248, 4294901760
      %v250 = vsub.f32 %v248, %v249
      %v251 = vand.u32 %v250, 4294901760
      %252 = vmatpush1.msra.mxu0 %v251
      %253 = vmatprep.subr.mxu0 0.0
      %v254 = vand.u32 %v105, 4294901760
      %v255 = vsub.f32 %v105, %v254
      %v256 = vand.u32 %v255, 4294901760
      %v257 = vsub.f32 %v255, %v256
      %v258 = vand.u32 %v257, 4294901760
      %259 = vmatpush1.msra.mxu0 %v258
      %260 = vmatprep.subr.mxu0 0.0
      %v261 = vand.u32 %v104, 4294901760
      %v262 = vsub.f32 %v104, %v261
      %v263 = vand.u32 %v262, 4294901760
      %v264 = vsub.f32 %v262, %v263
      %v265 = vand.u32 %v264, 4294901760
      %266 = vmatpush1.msra.mxu0 %v265
      %267 = vmatprep.subr.mxu0 0.0
      %v268 = vand.u32 %v103, 4294901760
      %v269 = vsub.f32 %v103, %v268
      %v270 = vand.u32 %v269, 4294901760
      %v271 = vsub.f32 %v269, %v270
      %v272 = vand.u32 %v271, 4294901760
      %273 = vmatpush1.msra.mxu0 %v272
      %274 = vmatprep.subr.mxu0 0.0
      %v275 = vand.u32 %v102, 4294901760
      %v276 = vsub.f32 %v102, %v275
      %v277 = vand.u32 %v276, 4294901760
      %v278 = vsub.f32 %v276, %v277
      %v279 = vand.u32 %v278, 4294901760
      %280 = vmatpush1.msra.mxu0 %v279
      %281 = vmatprep.subr.mxu0 0.0
      %v282 = vand.u32 %v101, 4294901760
      %v283 = vsub.f32 %v101, %v282
      %v284 = vand.u32 %v283, 4294901760
      %v285 = vsub.f32 %v283, %v284
      %v286 = vand.u32 %v285, 4294901760
      %287 = vmatpush1.msra.mxu0 %v286
      %288 = vmatprep.subr.mxu0 0.0
      %v289 = vand.u32 %v100, 4294901760
      %v290 = vsub.f32 %v100, %v289
      %v291 = vand.u32 %v290, 4294901760
      %v292 = vsub.f32 %v290, %v291
      %v293 = vand.u32 %v292, 4294901760
      %294 = vmatpush1.msra.mxu0 %v293
      %295 = vmatprep.subr.mxu0 0.0
      %v296 = vand.u32 %v99, 4294901760
      %v297 = vsub.f32 %v99, %v296
      %v298 = vand.u32 %v297, 4294901760
      %v299 = vsub.f32 %v297, %v298
      %v300 = vand.u32 %v299, 4294901760
      %301 = vmatpush1.msra.mxu0 %v300
      %302 = vmatprep.subr.mxu0 0.0
      %v303 = vand.u32 %v98, 4294901760
      %v304 = vsub.f32 %v98, %v303
      %v305 = vand.u32 %v304, 4294901760
      %v306 = vsub.f32 %v304, %v305
      %v307 = vand.u32 %v306, 4294901760
      %308 = vmatpush1.msra.mxu0 %v307
      %309 = vmatprep.subr.mxu0 0.0
      %v310 = vand.u32 %v97, 4294901760
      %v311 = vsub.f32 %v97, %v310
      %v312 = vand.u32 %v311, 4294901760
      %v313 = vsub.f32 %v311, %v312
      %v314 = vand.u32 %v313, 4294901760
      %315 = vmatpush1.msra.mxu0 %v314
      %316 = vmatprep.subr.mxu0 0.0
      %317 = vmatpush2.msra.mxu0 0.0
      %318 = vmatprep.subr.mxu0 0.0
      %319 = vmatpush2.msra.mxu0 0.0
      %320 = vmatprep.subr.mxu0 0.0
      %321 = vmatpush2.msra.mxu0 0.0
      %322 = vmatprep.subr.mxu0 0.0
      %323 = vmatpush2.msra.mxu0 0.0
      %324 = vmatprep.subr.mxu0 0.0
      %325 = vmatpush2.msra.mxu0 0.0
      %326 = vmatprep.subr.mxu0 0.0
      %327 = vmatpush2.msra.mxu0 0.0
      %328 = vmatprep.subr.mxu0 0.0
      %329 = vmatpush2.msra.mxu0 0.0
      %330 = vmatprep.subr.mxu0 0.0
      %331 = vmatpush2.msra.mxu0 0.0
      %332 = vmatprep.subr.mxu0 0.0
      %333 = vmatpush2.msra.mxu0 0.0
      %334 = vmatprep.subr.mxu0 0.0
      %335 = vmatpush2.msra.mxu0 0.0
      %336 = vmatprep.subr.mxu0 0.0
      %337 = vmatpush2.msra.mxu0 0.0
      %338 = vmatprep.subr.mxu0 0.0
      %339 = vmatpush2.msra.mxu0 0.0
      %340 = vmatprep.subr.mxu0 0.0
      %341 = vmatpush2.msra.mxu0 0.0
      %342 = vmatprep.subr.mxu0 0.0
      %343 = vmatpush2.msra.mxu0 0.0
      %344 = vmatprep.subr.mxu0 0.0
      %345 = vmatpush2.msra.mxu0 0.0
      %346 = vmatprep.subr.mxu0 0.0
      %347 = vmatpush2.msra.mxu0 0.0
      %348 = vmatprep.mubr.f32.mxu0 0.0
      %v349 = vand.u32 %v88, 4294901760
      %350 = vmatmul.mubr.f32.gmra.mxu0 %v349
      %v351 = vpop.f32.mrf.mxu0
      %v352 = vadd.f32 %v201, %v351
      %v353 = vpop.f32.mrf.mxu0
      %354 = vdwg.mxu0
      %355 = vmatprep.subr.mxu0 0.0
      %v356 = vand.u32 %v112, 4294901760
      %v357 = vsub.f32 %v112, %v356
      %358 = vmatpush1.msra.mxu0 %v357
      %359 = vmatprep.subr.mxu0 0.0
      %v360 = vand.u32 %v111, 4294901760
      %v361 = vsub.f32 %v111, %v360
      %362 = vmatpush1.msra.mxu0 %v361
      %363 = vmatprep.subr.mxu0 0.0
      %v364 = vand.u32 %v110, 4294901760
      %v365 = vsub.f32 %v110, %v364
      %366 = vmatpush1.msra.mxu0 %v365
      %367 = vmatprep.subr.mxu0 0.0
      %v368 = vand.u32 %v109, 4294901760
      %v369 = vsub.f32 %v109, %v368
      %370 = vmatpush1.msra.mxu0 %v369
      %371 = vmatprep.subr.mxu0 0.0
      %v372 = vand.u32 %v108, 4294901760
      %v373 = vsub.f32 %v108, %v372
      %374 = vmatpush1.msra.mxu0 %v373
      %375 = vmatprep.subr.mxu0 0.0
      %v376 = vand.u32 %v107, 4294901760
      %v377 = vsub.f32 %v107, %v376
      %378 = vmatpush1.msra.mxu0 %v377
      %379 = vmatprep.subr.mxu0 0.0
      %v380 = vand.u32 %v106, 4294901760
      %v381 = vsub.f32 %v106, %v380
      %382 = vmatpush1.msra.mxu0 %v381
      %383 = vmatprep.subr.mxu0 0.0
      %v384 = vand.u32 %v105, 4294901760
      %v385 = vsub.f32 %v105, %v384
      %386 = vmatpush1.msra.mxu0 %v385
      %387 = vmatprep.subr.mxu0 0.0
      %v388 = vand.u32 %v104, 4294901760
      %v389 = vsub.f32 %v104, %v388
      %390 = vmatpush1.msra.mxu0 %v389
      %391 = vmatprep.subr.mxu0 0.0
      %v392 = vand.u32 %v103, 4294901760
      %v393 = vsub.f32 %v103, %v392
      %394 = vmatpush1.msra.mxu0 %v393
      %395 = vmatprep.subr.mxu0 0.0
      %v396 = vand.u32 %v102, 4294901760
      %v397 = vsub.f32 %v102, %v396
      %398 = vmatpush1.msra.mxu0 %v397
      %399 = vmatprep.subr.mxu0 0.0
      %v400 = vand.u32 %v101, 4294901760
      %v401 = vsub.f32 %v101, %v400
      %402 = vmatpush1.msra.mxu0 %v401
      %403 = vmatprep.subr.mxu0 0.0
      %v404 = vand.u32 %v100, 4294901760
      %v405 = vsub.f32 %v100, %v404
      %406 = vmatpush1.msra.mxu0 %v405
      %407 = vmatprep.subr.mxu0 0.0
      %v408 = vand.u32 %v99, 4294901760
      %v409 = vsub.f32 %v99, %v408
      %410 = vmatpush1.msra.mxu0 %v409
      %411 = vmatprep.subr.mxu0 0.0
      %v412 = vand.u32 %v98, 4294901760
      %v413 = vsub.f32 %v98, %v412
      %414 = vmatpush1.msra.mxu0 %v413
      %415 = vmatprep.subr.mxu0 0.0
      %v416 = vand.u32 %v97, 4294901760
      %v417 = vsub.f32 %v97, %v416
      %418 = vmatpush1.msra.mxu0 %v417
      %419 = vmatprep.subr.mxu0 0.0
      %420 = vmatpush2.msra.mxu0 0.0
      %421 = vmatprep.subr.mxu0 0.0
      %422 = vmatpush2.msra.mxu0 0.0
      %423 = vmatprep.subr.mxu0 0.0
      %424 = vmatpush2.msra.mxu0 0.0
      %425 = vmatprep.subr.mxu0 0.0
      %426 = vmatpush2.msra.mxu0 0.0
      %427 = vmatprep.subr.mxu0 0.0
      %428 = vmatpush2.msra.mxu0 0.0
      %429 = vmatprep.subr.mxu0 0.0
      %430 = vmatpush2.msra.mxu0 0.0
      %431 = vmatprep.subr.mxu0 0.0
      %432 = vmatpush2.msra.mxu0 0.0
      %433 = vmatprep.subr.mxu0 0.0
      %434 = vmatpush2.msra.mxu0 0.0
      %435 = vmatprep.subr.mxu0 0.0
      %436 = vmatpush2.msra.mxu0 0.0
      %437 = vmatprep.subr.mxu0 0.0
      %438 = vmatpush2.msra.mxu0 0.0
      %439 = vmatprep.subr.mxu0 0.0
      %440 = vmatpush2.msra.mxu0 0.0
      %441 = vmatprep.subr.mxu0 0.0
      %442 = vmatpush2.msra.mxu0 0.0
      %443 = vmatprep.subr.mxu0 0.0
      %444 = vmatpush2.msra.mxu0 0.0
      %445 = vmatprep.subr.mxu0 0.0
      %446 = vmatpush2.msra.mxu0 0.0
      %447 = vmatprep.subr.mxu0 0.0
      %448 = vmatpush2.msra.mxu0 0.0
      %449 = vmatprep.subr.mxu0 0.0
      %450 = vmatpush2.msra.mxu0 0.0
      %451 = vmatprep.mubr.f32.mxu0 0.0
      %v452 = vand.u32 %v88, 4294901760
      %v453 = vsub.f32 %v88, %v452
      %454 = vmatmul.mubr.f32.gmra.mxu0 %v453
      %v455 = vpop.f32.mrf.mxu0
      %v456 = vadd.f32 %v352, %v455
      %v457 = vpop.f32.mrf.mxu0
      %458 = vdwg.mxu0
      %459 = vmatprep.subr.mxu0 0.0
      %v460 = vand.u32 %v112, 4294901760
      %461 = vmatpush1.msra.mxu0 %v460
      %462 = vmatprep.subr.mxu0 0.0
      %v463 = vand.u32 %v111, 4294901760
      %464 = vmatpush1.msra.mxu0 %v463
      %465 = vmatprep.subr.mxu0 0.0
      %v466 = vand.u32 %v110, 4294901760
      %467 = vmatpush1.msra.mxu0 %v466
      %468 = vmatprep.subr.mxu0 0.0
      %v469 = vand.u32 %v109, 4294901760
      %470 = vmatpush1.msra.mxu0 %v469
      %471 = vmatprep.subr.mxu0 0.0
      %v472 = vand.u32 %v108, 4294901760
      %473 = vmatpush1.msra.mxu0 %v472
      %474 = vmatprep.subr.mxu0 0.0
      %v475 = vand.u32 %v107, 4294901760
      %476 = vmatpush1.msra.mxu0 %v475
      %477 = vmatprep.subr.mxu0 0.0
      %v478 = vand.u32 %v106, 4294901760
      %479 = vmatpush1.msra.mxu0 %v478
      %480 = vmatprep.subr.mxu0 0.0
      %v481 = vand.u32 %v105, 4294901760
      %482 = vmatpush1.msra.mxu0 %v481
      %483 = vmatprep.subr.mxu0 0.0
      %v484 = vand.u32 %v104, 4294901760
      %485 = vmatpush1.msra.mxu0 %v484
      %486 = vmatprep.subr.mxu0 0.0
      %v487 = vand.u32 %v103, 4294901760
      %488 = vmatpush1.msra.mxu0 %v487
      %489 = vmatprep.subr.mxu0 0.0
      %v490 = vand.u32 %v102, 4294901760
      %491 = vmatpush1.msra.mxu0 %v490
      %492 = vmatprep.subr.mxu0 0.0
      %v493 = vand.u32 %v101, 4294901760
      %494 = vmatpush1.msra.mxu0 %v493
      %495 = vmatprep.subr.mxu0 0.0
      %v496 = vand.u32 %v100, 4294901760
      %497 = vmatpush1.msra.mxu0 %v496
      %498 = vmatprep.subr.mxu0 0.0
      %v499 = vand.u32 %v99, 4294901760
      %500 = vmatpush1.msra.mxu0 %v499
      %501 = vmatprep.subr.mxu0 0.0
      %v502 = vand.u32 %v98, 4294901760
      %503 = vmatpush1.msra.mxu0 %v502
      %504 = vmatprep.subr.mxu0 0.0
      %v505 = vand.u32 %v97, 4294901760
      %506 = vmatpush1.msra.mxu0 %v505
      %507 = vmatprep.subr.mxu0 0.0
      %508 = vmatpush2.msra.mxu0 0.0
      %509 = vmatprep.subr.mxu0 0.0
      %510 = vmatpush2.msra.mxu0 0.0
      %511 = vmatprep.subr.mxu0 0.0
      %512 = vmatpush2.msra.mxu0 0.0
      %513 = vmatprep.subr.mxu0 0.0
      %514 = vmatpush2.msra.mxu0 0.0
      %515 = vmatprep.subr.mxu0 0.0
      %516 = vmatpush2.msra.mxu0 0.0
      %517 = vmatprep.subr.mxu0 0.0
      %518 = vmatpush2.msra.mxu0 0.0
      %519 = vmatprep.subr.mxu0 0.0
      %520 = vmatpush2.msra.mxu0 0.0
      %521 = vmatprep.subr.mxu0 0.0
      %522 = vmatpush2.msra.mxu0 0.0
      %523 = vmatprep.subr.mxu0 0.0
      %524 = vmatpush2.msra.mxu0 0.0
      %525 = vmatprep.subr.mxu0 0.0
      %526 = vmatpush2.msra.mxu0 0.0
      %527 = vmatprep.subr.mxu0 0.0
      %528 = vmatpush2.msra.mxu0 0.0
      %529 = vmatprep.subr.mxu0 0.0
      %530 = vmatpush2.msra.mxu0 0.0
      %531 = vmatprep.subr.mxu0 0.0
      %532 = vmatpush2.msra.mxu0 0.0
      %533 = vmatprep.subr.mxu0 0.0
      %534 = vmatpush2.msra.mxu0 0.0
      %535 = vmatprep.subr.mxu0 0.0
      %536 = vmatpush2.msra.mxu0 0.0
      %537 = vmatprep.subr.mxu0 0.0
      %538 = vmatpush2.msra.mxu0 0.0
      %539 = vmatprep.mubr.f32.mxu0 0.0
      %v540 = vand.u32 %v88, 4294901760
      %v541 = vsub.f32 %v88, %v540
      %v542 = vand.u32 %v541, 4294901760
      %543 = vmatmul.mubr.f32.gmra.mxu0 %v542
      %v544 = vpop.f32.mrf.mxu0
      %v545 = vadd.f32 %v456, %v544
      %v546 = vpop.f32.mrf.mxu0
      %547 = vdwg.mxu0
      %548 = vmatprep.subr.mxu0 0.0
      %v549 = vand.u32 %v112, 4294901760
      %v550 = vsub.f32 %v112, %v549
      %v551 = vand.u32 %v550, 4294901760
      %552 = vmatpush1.msra.mxu0 %v551
      %553 = vmatprep.subr.mxu0 0.0
      %v554 = vand.u32 %v111, 4294901760
      %v555 = vsub.f32 %v111, %v554
      %v556 = vand.u32 %v555, 4294901760
      %557 = vmatpush1.msra.mxu0 %v556
      %558 = vmatprep.subr.mxu0 0.0
      %v559 = vand.u32 %v110, 4294901760
      %v560 = vsub.f32 %v110, %v559
      %v561 = vand.u32 %v560, 4294901760
      %562 = vmatpush1.msra.mxu0 %v561
      %563 = vmatprep.subr.mxu0 0.0
      %v564 = vand.u32 %v109, 4294901760
      %v565 = vsub.f32 %v109, %v564
      %v566 = vand.u32 %v565, 4294901760
      %567 = vmatpush1.msra.mxu0 %v566
      %568 = vmatprep.subr.mxu0 0.0
      %v569 = vand.u32 %v108, 4294901760
      %v570 = vsub.f32 %v108, %v569
      %v571 = vand.u32 %v570, 4294901760
      %572 = vmatpush1.msra.mxu0 %v571
      %573 = vmatprep.subr.mxu0 0.0
      %v574 = vand.u32 %v107, 4294901760
      %v575 = vsub.f32 %v107, %v574
      %v576 = vand.u32 %v575, 4294901760
      %577 = vmatpush1.msra.mxu0 %v576
      %578 = vmatprep.subr.mxu0 0.0
      %v579 = vand.u32 %v106, 4294901760
      %v580 = vsub.f32 %v106, %v579
      %v581 = vand.u32 %v580, 4294901760
      %582 = vmatpush1.msra.mxu0 %v581
      %583 = vmatprep.subr.mxu0 0.0
      %v584 = vand.u32 %v105, 4294901760
      %v585 = vsub.f32 %v105, %v584
      %v586 = vand.u32 %v585, 4294901760
      %587 = vmatpush1.msra.mxu0 %v586
      %588 = vmatprep.subr.mxu0 0.0
      %v589 = vand.u32 %v104, 4294901760
      %v590 = vsub.f32 %v104, %v589
      %v591 = vand.u32 %v590, 4294901760
      %592 = vmatpush1.msra.mxu0 %v591
      %593 = vmatprep.subr.mxu0 0.0
      %v594 = vand.u32 %v103, 4294901760
      %v595 = vsub.f32 %v103, %v594
      %v596 = vand.u32 %v595, 4294901760
      %597 = vmatpush1.msra.mxu0 %v596
      %598 = vmatprep.subr.mxu0 0.0
      %v599 = vand.u32 %v102, 4294901760
      %v600 = vsub.f32 %v102, %v599
      %v601 = vand.u32 %v600, 4294901760
      %602 = vmatpush1.msra.mxu0 %v601
      %603 = vmatprep.subr.mxu0 0.0
      %v604 = vand.u32 %v101, 4294901760
      %v605 = vsub.f32 %v101, %v604
      %v606 = vand.u32 %v605, 4294901760
      %607 = vmatpush1.msra.mxu0 %v606
      %608 = vmatprep.subr.mxu0 0.0
      %v609 = vand.u32 %v100, 4294901760
      %v610 = vsub.f32 %v100, %v609
      %v611 = vand.u32 %v610, 4294901760
      %612 = vmatpush1.msra.mxu0 %v611
      %613 = vmatprep.subr.mxu0 0.0
      %v614 = vand.u32 %v99, 4294901760
      %v615 = vsub.f32 %v99, %v614
      %v616 = vand.u32 %v615, 4294901760
      %617 = vmatpush1.msra.mxu0 %v616
      %618 = vmatprep.subr.mxu0 0.0
      %v619 = vand.u32 %v98, 4294901760
      %v620 = vsub.f32 %v98, %v619
      %v621 = vand.u32 %v620, 4294901760
      %622 = vmatpush1.msra.mxu0 %v621
      %623 = vmatprep.subr.mxu0 0.0
      %v624 = vand.u32 %v97, 4294901760
      %v625 = vsub.f32 %v97, %v624
      %v626 = vand.u32 %v625, 4294901760
      %627 = vmatpush1.msra.mxu0 %v626
      %628 = vmatprep.subr.mxu0 0.0
      %629 = vmatpush2.msra.mxu0 0.0
      %630 = vmatprep.subr.mxu0 0.0
      %631 = vmatpush2.msra.mxu0 0.0
      %632 = vmatprep.subr.mxu0 0.0
      %633 = vmatpush2.msra.mxu0 0.0
      %634 = vmatprep.subr.mxu0 0.0
      %635 = vmatpush2.msra.mxu0 0.0
      %636 = vmatprep.subr.mxu0 0.0
      %637 = vmatpush2.msra.mxu0 0.0
      %638 = vmatprep.subr.mxu0 0.0
      %639 = vmatpush2.msra.mxu0 0.0
      %640 = vmatprep.subr.mxu0 0.0
      %641 = vmatpush2.msra.mxu0 0.0
      %642 = vmatprep.subr.mxu0 0.0
      %643 = vmatpush2.msra.mxu0 0.0
      %644 = vmatprep.subr.mxu0 0.0
      %645 = vmatpush2.msra.mxu0 0.0
      %646 = vmatprep.subr.mxu0 0.0
      %647 = vmatpush2.msra.mxu0 0.0
      %648 = vmatprep.subr.mxu0 0.0
      %649 = vmatpush2.msra.mxu0 0.0
      %650 = vmatprep.subr.mxu0 0.0
      %651 = vmatpush2.msra.mxu0 0.0
      %652 = vmatprep.subr.mxu0 0.0
      %653 = vmatpush2.msra.mxu0 0.0
      %654 = vmatprep.subr.mxu0 0.0
      %655 = vmatpush2.msra.mxu0 0.0
      %656 = vmatprep.subr.mxu0 0.0
      %657 = vmatpush2.msra.mxu0 0.0
      %658 = vmatprep.subr.mxu0 0.0
      %659 = vmatpush2.msra.mxu0 0.0
      %660 = vmatprep.mubr.f32.mxu0 0.0
      %v661 = vand.u32 %v88, 4294901760
      %662 = vmatmul.mubr.f32.gmra.mxu0 %v661
      %v663 = vpop.f32.mrf.mxu0
      %v664 = vadd.f32 %v545, %v663
      %v665 = vpop.f32.mrf.mxu0
      %666 = vdwg.mxu0
      %667 = vmatprep.subr.mxu0 0.0
      %v668 = vand.u32 %v112, 4294901760
      %669 = vmatpush1.msra.mxu0 %v668
      %670 = vmatprep.subr.mxu0 0.0
      %v671 = vand.u32 %v111, 4294901760
      %672 = vmatpush1.msra.mxu0 %v671
      %673 = vmatprep.subr.mxu0 0.0
      %v674 = vand.u32 %v110, 4294901760
      %675 = vmatpush1.msra.mxu0 %v674
      %676 = vmatprep.subr.mxu0 0.0
      %v677 = vand.u32 %v109, 4294901760
      %678 = vmatpush1.msra.mxu0 %v677
      %679 = vmatprep.subr.mxu0 0.0
      %v680 = vand.u32 %v108, 4294901760
      %681 = vmatpush1.msra.mxu0 %v680
      %682 = vmatprep.subr.mxu0 0.0
      %v683 = vand.u32 %v107, 4294901760
      %684 = vmatpush1.msra.mxu0 %v683
      %685 = vmatprep.subr.mxu0 0.0
      %v686 = vand.u32 %v106, 4294901760
      %687 = vmatpush1.msra.mxu0 %v686
      %688 = vmatprep.subr.mxu0 0.0
      %v689 = vand.u32 %v105, 4294901760
      %690 = vmatpush1.msra.mxu0 %v689
      %691 = vmatprep.subr.mxu0 0.0
      %v692 = vand.u32 %v104, 4294901760
      %693 = vmatpush1.msra.mxu0 %v692
      %694 = vmatprep.subr.mxu0 0.0
      %v695 = vand.u32 %v103, 4294901760
      %696 = vmatpush1.msra.mxu0 %v695
      %697 = vmatprep.subr.mxu0 0.0
      %v698 = vand.u32 %v102, 4294901760
      %699 = vmatpush1.msra.mxu0 %v698
      %700 = vmatprep.subr.mxu0 0.0
      %v701 = vand.u32 %v101, 4294901760
      %702 = vmatpush1.msra.mxu0 %v701
      %703 = vmatprep.subr.mxu0 0.0
      %v704 = vand.u32 %v100, 4294901760
      %705 = vmatpush1.msra.mxu0 %v704
      %706 = vmatprep.subr.mxu0 0.0
      %v707 = vand.u32 %v99, 4294901760
      %708 = vmatpush1.msra.mxu0 %v707
      %709 = vmatprep.subr.mxu0 0.0
      %v710 = vand.u32 %v98, 4294901760
      %711 = vmatpush1.msra.mxu0 %v710
      %712 = vmatprep.subr.mxu0 0.0
      %v713 = vand.u32 %v97, 4294901760
      %714 = vmatpush1.msra.mxu0 %v713
      %715 = vmatprep.subr.mxu0 0.0
      %716 = vmatpush2.msra.mxu0 0.0
      %717 = vmatprep.subr.mxu0 0.0
      %718 = vmatpush2.msra.mxu0 0.0
      %719 = vmatprep.subr.mxu0 0.0
      %720 = vmatpush2.msra.mxu0 0.0
      %721 = vmatprep.subr.mxu0 0.0
      %722 = vmatpush2.msra.mxu0 0.0
      %723 = vmatprep.subr.mxu0 0.0
      %724 = vmatpush2.msra.mxu0 0.0
      %725 = vmatprep.subr.mxu0 0.0
      %726 = vmatpush2.msra.mxu0 0.0
      %727 = vmatprep.subr.mxu0 0.0
      %728 = vmatpush2.msra.mxu0 0.0
      %729 = vmatprep.subr.mxu0 0.0
      %730 = vmatpush2.msra.mxu0 0.0
      %731 = vmatprep.subr.mxu0 0.0
      %732 = vmatpush2.msra.mxu0 0.0
      %733 = vmatprep.subr.mxu0 0.0
      %734 = vmatpush2.msra.mxu0 0.0
      %735 = vmatprep.subr.mxu0 0.0
      %736 = vmatpush2.msra.mxu0 0.0
      %737 = vmatprep.subr.mxu0 0.0
      %738 = vmatpush2.msra.mxu0 0.0
      %739 = vmatprep.subr.mxu0 0.0
      %740 = vmatpush2.msra.mxu0 0.0
      %741 = vmatprep.subr.mxu0 0.0
      %742 = vmatpush2.msra.mxu0 0.0
      %743 = vmatprep.subr.mxu0 0.0
      %744 = vmatpush2.msra.mxu0 0.0
      %745 = vmatprep.subr.mxu0 0.0
      %746 = vmatpush2.msra.mxu0 0.0
      %747 = vmatprep.mubr.f32.mxu0 0.0
      %v748 = vand.u32 %v88, 4294901760
      %749 = vmatmul.mubr.f32.gmra.mxu0 %v748
      %v750 = vpop.f32.mrf.mxu0
      %v751 = vadd.f32 %v664, %v750
      %v752 = vpop.f32.mrf.mxu0
      %753 = vdwg.mxu0
      %v754 = vmul.f32 %v751, 0.9
      %v755 = vadd.f32 %v754, 0.00078125
      %756 = vmatprep.subr.mxu0 0.0
      %v757 = vand.u32 %v112, 4294901760
      %758 = vmatpush1.msra.mxu0 %v757
      %759 = vmatprep.subr.mxu0 0.0
      %v760 = vand.u32 %v111, 4294901760
      %761 = vmatpush1.msra.mxu0 %v760
      %762 = vmatprep.subr.mxu0 0.0
      %v763 = vand.u32 %v110, 4294901760
      %764 = vmatpush1.msra.mxu0 %v763
      %765 = vmatprep.subr.mxu0 0.0
      %v766 = vand.u32 %v109, 4294901760
      %767 = vmatpush1.msra.mxu0 %v766
      %768 = vmatprep.subr.mxu0 0.0
      %v769 = vand.u32 %v108, 4294901760
      %770 = vmatpush1.msra.mxu0 %v769
      %771 = vmatprep.subr.mxu0 0.0
      %v772 = vand.u32 %v107, 4294901760
      %773 = vmatpush1.msra.mxu0 %v772
      %774 = vmatprep.subr.mxu0 0.0
      %v775 = vand.u32 %v106, 4294901760
      %776 = vmatpush1.msra.mxu0 %v775
      %777 = vmatprep.subr.mxu0 0.0
      %v778 = vand.u32 %v105, 4294901760
      %779 = vmatpush1.msra.mxu0 %v778
      %780 = vmatprep.subr.mxu0 0.0
      %v781 = vand.u32 %v104, 4294901760
      %782 = vmatpush1.msra.mxu0 %v781
      %783 = vmatprep.subr.mxu0 0.0
      %v784 = vand.u32 %v103, 4294901760
      %785 = vmatpush1.msra.mxu0 %v784
      %786 = vmatprep.subr.mxu0 0.0
      %v787 = vand.u32 %v102, 4294901760
      %788 = vmatpush1.msra.mxu0 %v787
      %789 = vmatprep.subr.mxu0 0.0
      %v790 = vand.u32 %v101, 4294901760
      %791 = vmatpush1.msra.mxu0 %v790
      %792 = vmatprep.subr.mxu0 0.0
      %v793 = vand.u32 %v100, 4294901760
      %794 = vmatpush1.msra.mxu0 %v793
      %795 = vmatprep.subr.mxu0 0.0
      %v796 = vand.u32 %v99, 4294901760
      %797 = vmatpush1.msra.mxu0 %v796
      %798 = vmatprep.subr.mxu0 0.0
      %v799 = vand.u32 %v98, 4294901760
      %800 = vmatpush1.msra.mxu0 %v799
      %801 = vmatprep.subr.mxu0 0.0
      %v802 = vand.u32 %v97, 4294901760
      %803 = vmatpush1.msra.mxu0 %v802
      %804 = vmatprep.subr.mxu0 0.0
      %805 = vmatpush2.msra.mxu0 0.0
      %806 = vmatprep.subr.mxu0 0.0
      %807 = vmatpush2.msra.mxu0 0.0
      %808 = vmatprep.subr.mxu0 0.0
      %809 = vmatpush2.msra.mxu0 0.0
      %810 = vmatprep.subr.mxu0 0.0
      %811 = vmatpush2.msra.mxu0 0.0
      %812 = vmatprep.subr.mxu0 0.0
      %813 = vmatpush2.msra.mxu0 0.0
      %814 = vmatprep.subr.mxu0 0.0
      %815 = vmatpush2.msra.mxu0 0.0
      %816 = vmatprep.subr.mxu0 0.0
      %817 = vmatpush2.msra.mxu0 0.0
      %818 = vmatprep.subr.mxu0 0.0
      %819 = vmatpush2.msra.mxu0 0.0
      %820 = vmatprep.subr.mxu0 0.0
      %821 = vmatpush2.msra.mxu0 0.0
      %822 = vmatprep.subr.mxu0 0.0
      %823 = vmatpush2.msra.mxu0 0.0
      %824 = vmatprep.subr.mxu0 0.0
      %825 = vmatpush2.msra.mxu0 0.0
      %826 = vmatprep.subr.mxu0 0.0
      %827 = vmatpush2.msra.mxu0 0.0
      %828 = vmatprep.subr.mxu0 0.0
      %829 = vmatpush2.msra.mxu0 0.0
      %830 = vmatprep.subr.mxu0 0.0
      %831 = vmatpush2.msra.mxu0 0.0
      %832 = vmatprep.subr.mxu0 0.0
      %833 = vmatpush2.msra.mxu0 0.0
      %834 = vmatprep.subr.mxu0 0.0
      %835 = vmatpush2.msra.mxu0 0.0
      %836 = vmatprep.mubr.f32.mxu0 0.0
      %v837 = vand.u32 %v755, 4294901760
      %v838 = vsub.f32 %v755, %v837
      %v839 = vand.u32 %v838, 4294901760
      %v840 = vsub.f32 %v838, %v839
      %v841 = vand.u32 %v840, 4294901760
      %842 = vmatmul.mubr.f32.gmra.mxu0 %v841
      %v843 = vpop.f32.mrf.mxu0
      %v844 = vadd.f32 0.0, %v843
      %v845 = vpop.f32.mrf.mxu0
      %846 = vdwg.mxu0
      %847 = vmatprep.subr.mxu0 0.0
      %v848 = vand.u32 %v112, 4294901760
      %v849 = vsub.f32 %v112, %v848
      %v850 = vand.u32 %v849, 4294901760
      %v851 = vsub.f32 %v849, %v850
      %v852 = vand.u32 %v851, 4294901760
      %853 = vmatpush1.msra.mxu0 %v852
      %854 = vmatprep.subr.mxu0 0.0
      %v855 = vand.u32 %v111, 4294901760
      %v856 = vsub.f32 %v111, %v855
      %v857 = vand.u32 %v856, 4294901760
      %v858 = vsub.f32 %v856, %v857
      %v859 = vand.u32 %v858, 4294901760
      %860 = vmatpush1.msra.mxu0 %v859
      %861 = vmatprep.subr.mxu0 0.0
      %v862 = vand.u32 %v110, 4294901760
      %v863 = vsub.f32 %v110, %v862
      %v864 = vand.u32 %v863, 4294901760
      %v865 = vsub.f32 %v863, %v864
      %v866 = vand.u32 %v865, 4294901760
      %867 = vmatpush1.msra.mxu0 %v866
      %868 = vmatprep.subr.mxu0 0.0
      %v869 = vand.u32 %v109, 4294901760
      %v870 = vsub.f32 %v109, %v869
      %v871 = vand.u32 %v870, 4294901760
      %v872 = vsub.f32 %v870, %v871
      %v873 = vand.u32 %v872, 4294901760
      %874 = vmatpush1.msra.mxu0 %v873
      %875 = vmatprep.subr.mxu0 0.0
      %v876 = vand.u32 %v108, 4294901760
      %v877 = vsub.f32 %v108, %v876
      %v878 = vand.u32 %v877, 4294901760
      %v879 = vsub.f32 %v877, %v878
      %v880 = vand.u32 %v879, 4294901760
      %881 = vmatpush1.msra.mxu0 %v880
      %882 = vmatprep.subr.mxu0 0.0
      %v883 = vand.u32 %v107, 4294901760
      %v884 = vsub.f32 %v107, %v883
      %v885 = vand.u32 %v884, 4294901760
      %v886 = vsub.f32 %v884, %v885
      %v887 = vand.u32 %v886, 4294901760
      %888 = vmatpush1.msra.mxu0 %v887
      %889 = vmatprep.subr.mxu0 0.0
      %v890 = vand.u32 %v106, 4294901760
      %v891 = vsub.f32 %v106, %v890
      %v892 = vand.u32 %v891, 4294901760
      %v893 = vsub.f32 %v891, %v892
      %v894 = vand.u32 %v893, 4294901760
      %895 = vmatpush1.msra.mxu0 %v894
      %896 = vmatprep.subr.mxu0 0.0
      %v897 = vand.u32 %v105, 4294901760
      %v898 = vsub.f32 %v105, %v897
      %v899 = vand.u32 %v898, 4294901760
      %v900 = vsub.f32 %v898, %v899
      %v901 = vand.u32 %v900, 4294901760
      %902 = vmatpush1.msra.mxu0 %v901
      %903 = vmatprep.subr.mxu0 0.0
      %v904 = vand.u32 %v104, 4294901760
      %v905 = vsub.f32 %v104, %v904
      %v906 = vand.u32 %v905, 4294901760
      %v907 = vsub.f32 %v905, %v906
      %v908 = vand.u32 %v907, 4294901760
      %909 = vmatpush1.msra.mxu0 %v908
      %910 = vmatprep.subr.mxu0 0.0
      %v911 = vand.u32 %v103, 4294901760
      %v912 = vsub.f32 %v103, %v911
      %v913 = vand.u32 %v912, 4294901760
      %v914 = vsub.f32 %v912, %v913
      %v915 = vand.u32 %v914, 4294901760
      %916 = vmatpush1.msra.mxu0 %v915
      %917 = vmatprep.subr.mxu0 0.0
      %v918 = vand.u32 %v102, 4294901760
      %v919 = vsub.f32 %v102, %v918
      %v920 = vand.u32 %v919, 4294901760
      %v921 = vsub.f32 %v919, %v920
      %v922 = vand.u32 %v921, 4294901760
      %923 = vmatpush1.msra.mxu0 %v922
      %924 = vmatprep.subr.mxu0 0.0
      %v925 = vand.u32 %v101, 4294901760
      %v926 = vsub.f32 %v101, %v925
      %v927 = vand.u32 %v926, 4294901760
      %v928 = vsub.f32 %v926, %v927
      %v929 = vand.u32 %v928, 4294901760
      %930 = vmatpush1.msra.mxu0 %v929
      %931 = vmatprep.subr.mxu0 0.0
      %v932 = vand.u32 %v100, 4294901760
      %v933 = vsub.f32 %v100, %v932
      %v934 = vand.u32 %v933, 4294901760
      %v935 = vsub.f32 %v933, %v934
      %v936 = vand.u32 %v935, 4294901760
      %937 = vmatpush1.msra.mxu0 %v936
      %938 = vmatprep.subr.mxu0 0.0
      %v939 = vand.u32 %v99, 4294901760
      %v940 = vsub.f32 %v99, %v939
      %v941 = vand.u32 %v940, 4294901760
      %v942 = vsub.f32 %v940, %v941
      %v943 = vand.u32 %v942, 4294901760
      %944 = vmatpush1.msra.mxu0 %v943
      %945 = vmatprep.subr.mxu0 0.0
      %v946 = vand.u32 %v98, 4294901760
      %v947 = vsub.f32 %v98, %v946
      %v948 = vand.u32 %v947, 4294901760
      %v949 = vsub.f32 %v947, %v948
      %v950 = vand.u32 %v949, 4294901760
      %951 = vmatpush1.msra.mxu0 %v950
      %952 = vmatprep.subr.mxu0 0.0
      %v953 = vand.u32 %v97, 4294901760
      %v954 = vsub.f32 %v97, %v953
      %v955 = vand.u32 %v954, 4294901760
      %v956 = vsub.f32 %v954, %v955
      %v957 = vand.u32 %v956, 4294901760
      %958 = vmatpush1.msra.mxu0 %v957
      %959 = vmatprep.subr.mxu0 0.0
      %960 = vmatpush2.msra.mxu0 0.0
      %961 = vmatprep.subr.mxu0 0.0
      %962 = vmatpush2.msra.mxu0 0.0
      %963 = vmatprep.subr.mxu0 0.0
      %964 = vmatpush2.msra.mxu0 0.0
      %965 = vmatprep.subr.mxu0 0.0
      %966 = vmatpush2.msra.mxu0 0.0
      %967 = vmatprep.subr.mxu0 0.0
      %968 = vmatpush2.msra.mxu0 0.0
      %969 = vmatprep.subr.mxu0 0.0
      %970 = vmatpush2.msra.mxu0 0.0
      %971 = vmatprep.subr.mxu0 0.0
      %972 = vmatpush2.msra.mxu0 0.0
      %973 = vmatprep.subr.mxu0 0.0
      %974 = vmatpush2.msra.mxu0 0.0
      %975 = vmatprep.subr.mxu0 0.0
      %976 = vmatpush2.msra.mxu0 0.0
      %977 = vmatprep.subr.mxu0 0.0
      %978 = vmatpush2.msra.mxu0 0.0
      %979 = vmatprep.subr.mxu0 0.0
      %980 = vmatpush2.msra.mxu0 0.0
      %981 = vmatprep.subr.mxu0 0.0
      %982 = vmatpush2.msra.mxu0 0.0
      %983 = vmatprep.subr.mxu0 0.0
      %984 = vmatpush2.msra.mxu0 0.0
      %985 = vmatprep.subr.mxu0 0.0
      %986 = vmatpush2.msra.mxu0 0.0
      %987 = vmatprep.subr.mxu0 0.0
      %988 = vmatpush2.msra.mxu0 0.0
      %989 = vmatprep.subr.mxu0 0.0
      %990 = vmatpush2.msra.mxu0 0.0
      %991 = vmatprep.mubr.f32.mxu0 0.0
      %v992 = vand.u32 %v755, 4294901760
      %993 = vmatmul.mubr.f32.gmra.mxu0 %v992
      %v994 = vpop.f32.mrf.mxu0
      %v995 = vadd.f32 %v844, %v994
      %v996 = vpop.f32.mrf.mxu0
      %997 = vdwg.mxu0
      %998 = vmatprep.subr.mxu0 0.0
      %v999 = vand.u32 %v112, 4294901760
      %v1000 = vsub.f32 %v112, %v999
      %1001 = vmatpush1.msra.mxu0 %v1000
      %1002 = vmatprep.subr.mxu0 0.0
      %v1003 = vand.u32 %v111, 4294901760
      %v1004 = vsub.f32 %v111, %v1003
      %1005 = vmatpush1.msra.mxu0 %v1004
      %1006 = vmatprep.subr.mxu0 0.0
      %v1007 = vand.u32 %v110, 4294901760
      %v1008 = vsub.f32 %v110, %v1007
      %1009 = vmatpush1.msra.mxu0 %v1008
      %1010 = vmatprep.subr.mxu0 0.0
      %v1011 = vand.u32 %v109, 4294901760
      %v1012 = vsub.f32 %v109, %v1011
      %1013 = vmatpush1.msra.mxu0 %v1012
      %1014 = vmatprep.subr.mxu0 0.0
      %v1015 = vand.u32 %v108, 4294901760
      %v1016 = vsub.f32 %v108, %v1015
      %1017 = vmatpush1.msra.mxu0 %v1016
      %1018 = vmatprep.subr.mxu0 0.0
      %v1019 = vand.u32 %v107, 4294901760
      %v1020 = vsub.f32 %v107, %v1019
      %1021 = vmatpush1.msra.mxu0 %v1020
      %1022 = vmatprep.subr.mxu0 0.0
      %v1023 = vand.u32 %v106, 4294901760
      %v1024 = vsub.f32 %v106, %v1023
      %1025 = vmatpush1.msra.mxu0 %v1024
      %1026 = vmatprep.subr.mxu0 0.0
      %v1027 = vand.u32 %v105, 4294901760
      %v1028 = vsub.f32 %v105, %v1027
      %1029 = vmatpush1.msra.mxu0 %v1028
      %1030 = vmatprep.subr.mxu0 0.0
      %v1031 = vand.u32 %v104, 4294901760
      %v1032 = vsub.f32 %v104, %v1031
      %1033 = vmatpush1.msra.mxu0 %v1032
      %1034 = vmatprep.subr.mxu0 0.0
      %v1035 = vand.u32 %v103, 4294901760
      %v1036 = vsub.f32 %v103, %v1035
      %1037 = vmatpush1.msra.mxu0 %v1036
      %1038 = vmatprep.subr.mxu0 0.0
      %v1039 = vand.u32 %v102, 4294901760
      %v1040 = vsub.f32 %v102, %v1039
      %1041 = vmatpush1.msra.mxu0 %v1040
      %1042 = vmatprep.subr.mxu0 0.0
      %v1043 = vand.u32 %v101, 4294901760
      %v1044 = vsub.f32 %v101, %v1043
      %1045 = vmatpush1.msra.mxu0 %v1044
      %1046 = vmatprep.subr.mxu0 0.0
      %v1047 = vand.u32 %v100, 4294901760
      %v1048 = vsub.f32 %v100, %v1047
      %1049 = vmatpush1.msra.mxu0 %v1048
      %1050 = vmatprep.subr.mxu0 0.0
      %v1051 = vand.u32 %v99, 4294901760
      %v1052 = vsub.f32 %v99, %v1051
      %1053 = vmatpush1.msra.mxu0 %v1052
      %1054 = vmatprep.subr.mxu0 0.0
      %v1055 = vand.u32 %v98, 4294901760
      %v1056 = vsub.f32 %v98, %v1055
      %1057 = vmatpush1.msra.mxu0 %v1056
      %1058 = vmatprep.subr.mxu0 0.0
      %v1059 = vand.u32 %v97, 4294901760
      %v1060 = vsub.f32 %v97, %v1059
      %1061 = vmatpush1.msra.mxu0 %v1060
      %1062 = vmatprep.subr.mxu0 0.0
      %1063 = vmatpush2.msra.mxu0 0.0
      %1064 = vmatprep.subr.mxu0 0.0
      %1065 = vmatpush2.msra.mxu0 0.0
      %1066 = vmatprep.subr.mxu0 0.0
      %1067 = vmatpush2.msra.mxu0 0.0
      %1068 = vmatprep.subr.mxu0 0.0
      %1069 = vmatpush2.msra.mxu0 0.0
      %1070 = vmatprep.subr.mxu0 0.0
      %1071 = vmatpush2.msra.mxu0 0.0
      %1072 = vmatprep.subr.mxu0 0.0
      %1073 = vmatpush2.msra.mxu0 0.0
      %1074 = vmatprep.subr.mxu0 0.0
      %1075 = vmatpush2.msra.mxu0 0.0
      %1076 = vmatprep.subr.mxu0 0.0
      %1077 = vmatpush2.msra.mxu0 0.0
      %1078 = vmatprep.subr.mxu0 0.0
      %1079 = vmatpush2.msra.mxu0 0.0
      %1080 = vmatprep.subr.mxu0 0.0
      %1081 = vmatpush2.msra.mxu0 0.0
      %1082 = vmatprep.subr.mxu0 0.0
      %1083 = vmatpush2.msra.mxu0 0.0
      %1084 = vmatprep.subr.mxu0 0.0
      %1085 = vmatpush2.msra.mxu0 0.0
      %1086 = vmatprep.subr.mxu0 0.0
      %1087 = vmatpush2.msra.mxu0 0.0
      %1088 = vmatprep.subr.mxu0 0.0
      %1089 = vmatpush2.msra.mxu0 0.0
      %1090 = vmatprep.subr.mxu0 0.0
      %1091 = vmatpush2.msra.mxu0 0.0
      %1092 = vmatprep.subr.mxu0 0.0
      %1093 = vmatpush2.msra.mxu0 0.0
      %1094 = vmatprep.mubr.f32.mxu0 0.0
      %v1095 = vand.u32 %v755, 4294901760
      %v1096 = vsub.f32 %v755, %v1095
      %1097 = vmatmul.mubr.f32.gmra.mxu0 %v1096
      %v1098 = vpop.f32.mrf.mxu0
      %v1099 = vadd.f32 %v995, %v1098
      %v1100 = vpop.f32.mrf.mxu0
      %1101 = vdwg.mxu0
      %1102 = vmatprep.subr.mxu0 0.0
      %v1103 = vand.u32 %v112, 4294901760
      %1104 = vmatpush1.msra.mxu0 %v1103
      %1105 = vmatprep.subr.mxu0 0.0
      %v1106 = vand.u32 %v111, 4294901760
      %1107 = vmatpush1.msra.mxu0 %v1106
      %1108 = vmatprep.subr.mxu0 0.0
      %v1109 = vand.u32 %v110, 4294901760
      %1110 = vmatpush1.msra.mxu0 %v1109
      %1111 = vmatprep.subr.mxu0 0.0
      %v1112 = vand.u32 %v109, 4294901760
      %1113 = vmatpush1.msra.mxu0 %v1112
      %1114 = vmatprep.subr.mxu0 0.0
      %v1115 = vand.u32 %v108, 4294901760
      %1116 = vmatpush1.msra.mxu0 %v1115
      %1117 = vmatprep.subr.mxu0 0.0
      %v1118 = vand.u32 %v107, 4294901760
      %1119 = vmatpush1.msra.mxu0 %v1118
      %1120 = vmatprep.subr.mxu0 0.0
      %v1121 = vand.u32 %v106, 4294901760
      %1122 = vmatpush1.msra.mxu0 %v1121
      %1123 = vmatprep.subr.mxu0 0.0
      %v1124 = vand.u32 %v105, 4294901760
      %1125 = vmatpush1.msra.mxu0 %v1124
      %1126 = vmatprep.subr.mxu0 0.0
      %v1127 = vand.u32 %v104, 4294901760
      %1128 = vmatpush1.msra.mxu0 %v1127
      %1129 = vmatprep.subr.mxu0 0.0
      %v1130 = vand.u32 %v103, 4294901760
      %1131 = vmatpush1.msra.mxu0 %v1130
      %1132 = vmatprep.subr.mxu0 0.0
      %v1133 = vand.u32 %v102, 4294901760
      %1134 = vmatpush1.msra.mxu0 %v1133
      %1135 = vmatprep.subr.mxu0 0.0
      %v1136 = vand.u32 %v101, 4294901760
      %1137 = vmatpush1.msra.mxu0 %v1136
      %1138 = vmatprep.subr.mxu0 0.0
      %v1139 = vand.u32 %v100, 4294901760
      %1140 = vmatpush1.msra.mxu0 %v1139
      %1141 = vmatprep.subr.mxu0 0.0
      %v1142 = vand.u32 %v99, 4294901760
      %1143 = vmatpush1.msra.mxu0 %v1142
      %1144 = vmatprep.subr.mxu0 0.0
      %v1145 = vand.u32 %v98, 4294901760
      %1146 = vmatpush1.msra.mxu0 %v1145
      %1147 = vmatprep.subr.mxu0 0.0
      %v1148 = vand.u32 %v97, 4294901760
      %1149 = vmatpush1.msra.mxu0 %v1148
      %1150 = vmatprep.subr.mxu0 0.0
      %1151 = vmatpush2.msra.mxu0 0.0
      %1152 = vmatprep.subr.mxu0 0.0
      %1153 = vmatpush2.msra.mxu0 0.0
      %1154 = vmatprep.subr.mxu0 0.0
      %1155 = vmatpush2.msra.mxu0 0.0
      %1156 = vmatprep.subr.mxu0 0.0
      %1157 = vmatpush2.msra.mxu0 0.0
      %1158 = vmatprep.subr.mxu0 0.0
      %1159 = vmatpush2.msra.mxu0 0.0
      %1160 = vmatprep.subr.mxu0 0.0
      %1161 = vmatpush2.msra.mxu0 0.0
      %1162 = vmatprep.subr.mxu0 0.0
      %1163 = vmatpush2.msra.mxu0 0.0
      %1164 = vmatprep.subr.mxu0 0.0
      %1165 = vmatpush2.msra.mxu0 0.0
      %1166 = vmatprep.subr.mxu0 0.0
      %1167 = vmatpush2.msra.mxu0 0.0
      %1168 = vmatprep.subr.mxu0 0.0
      %1169 = vmatpush2.msra.mxu0 0.0
      %1170 = vmatprep.subr.mxu0 0.0
      %1171 = vmatpush2.msra.mxu0 0.0
      %1172 = vmatprep.subr.mxu0 0.0
      %1173 = vmatpush2.msra.mxu0 0.0
      %1174 = vmatprep.subr.mxu0 0.0
      %1175 = vmatpush2.msra.mxu0 0.0
      %1176 = vmatprep.subr.mxu0 0.0
      %1177 = vmatpush2.msra.mxu0 0.0
      %1178 = vmatprep.subr.mxu0 0.0
      %1179 = vmatpush2.msra.mxu0 0.0
      %1180 = vmatprep.subr.mxu0 0.0
      %1181 = vmatpush2.msra.mxu0 0.0
      %1182 = vmatprep.mubr.f32.mxu0 0.0
      %v1183 = vand.u32 %v755, 4294901760
      %v1184 = vsub.f32 %v755, %v1183
      %v1185 = vand.u32 %v1184, 4294901760
      %1186 = vmatmul.mubr.f32.gmra.mxu0 %v1185
      %v1187 = vpop.f32.mrf.mxu0
      %v1188 = vadd.f32 %v1099, %v1187
      %v1189 = vpop.f32.mrf.mxu0
      %1190 = vdwg.mxu0
      %1191 = vmatprep.subr.mxu0 0.0
      %v1192 = vand.u32 %v112, 4294901760
      %v1193 = vsub.f32 %v112, %v1192
      %v1194 = vand.u32 %v1193, 4294901760
      %1195 = vmatpush1.msra.mxu0 %v1194
      %1196 = vmatprep.subr.mxu0 0.0
      %v1197 = vand.u32 %v111, 4294901760
      %v1198 = vsub.f32 %v111, %v1197
      %v1199 = vand.u32 %v1198, 4294901760
      %1200 = vmatpush1.msra.mxu0 %v1199
      %1201 = vmatprep.subr.mxu0 0.0
      %v1202 = vand.u32 %v110, 4294901760
      %v1203 = vsub.f32 %v110, %v1202
      %v1204 = vand.u32 %v1203, 4294901760
      %1205 = vmatpush1.msra.mxu0 %v1204
      %1206 = vmatprep.subr.mxu0 0.0
      %v1207 = vand.u32 %v109, 4294901760
      %v1208 = vsub.f32 %v109, %v1207
      %v1209 = vand.u32 %v1208, 4294901760
      %1210 = vmatpush1.msra.mxu0 %v1209
      %1211 = vmatprep.subr.mxu0 0.0
      %v1212 = vand.u32 %v108, 4294901760
      %v1213 = vsub.f32 %v108, %v1212
      %v1214 = vand.u32 %v1213, 4294901760
      %1215 = vmatpush1.msra.mxu0 %v1214
      %1216 = vmatprep.subr.mxu0 0.0
      %v1217 = vand.u32 %v107, 4294901760
      %v1218 = vsub.f32 %v107, %v1217
      %v1219 = vand.u32 %v1218, 4294901760
      %1220 = vmatpush1.msra.mxu0 %v1219
      %1221 = vmatprep.subr.mxu0 0.0
      %v1222 = vand.u32 %v106, 4294901760
      %v1223 = vsub.f32 %v106, %v1222
      %v1224 = vand.u32 %v1223, 4294901760
      %1225 = vmatpush1.msra.mxu0 %v1224
      %1226 = vmatprep.subr.mxu0 0.0
      %v1227 = vand.u32 %v105, 4294901760
      %v1228 = vsub.f32 %v105, %v1227
      %v1229 = vand.u32 %v1228, 4294901760
      %1230 = vmatpush1.msra.mxu0 %v1229
      %1231 = vmatprep.subr.mxu0 0.0
      %v1232 = vand.u32 %v104, 4294901760
      %v1233 = vsub.f32 %v104, %v1232
      %v1234 = vand.u32 %v1233, 4294901760
      %1235 = vmatpush1.msra.mxu0 %v1234
      %1236 = vmatprep.subr.mxu0 0.0
      %v1237 = vand.u32 %v103, 4294901760
      %v1238 = vsub.f32 %v103, %v1237
      %v1239 = vand.u32 %v1238, 4294901760
      %1240 = vmatpush1.msra.mxu0 %v1239
      %1241 = vmatprep.subr.mxu0 0.0
      %v1242 = vand.u32 %v102, 4294901760
      %v1243 = vsub.f32 %v102, %v1242
      %v1244 = vand.u32 %v1243, 4294901760
      %1245 = vmatpush1.msra.mxu0 %v1244
      %1246 = vmatprep.subr.mxu0 0.0
      %v1247 = vand.u32 %v101, 4294901760
      %v1248 = vsub.f32 %v101, %v1247
      %v1249 = vand.u32 %v1248, 4294901760
      %1250 = vmatpush1.msra.mxu0 %v1249
      %1251 = vmatprep.subr.mxu0 0.0
      %v1252 = vand.u32 %v100, 4294901760
      %v1253 = vsub.f32 %v100, %v1252
      %v1254 = vand.u32 %v1253, 4294901760
      %1255 = vmatpush1.msra.mxu0 %v1254
      %1256 = vmatprep.subr.mxu0 0.0
      %v1257 = vand.u32 %v99, 4294901760
      %v1258 = vsub.f32 %v99, %v1257
      %v1259 = vand.u32 %v1258, 4294901760
      %1260 = vmatpush1.msra.mxu0 %v1259
      %1261 = vmatprep.subr.mxu0 0.0
      %v1262 = vand.u32 %v98, 4294901760
      %v1263 = vsub.f32 %v98, %v1262
      %v1264 = vand.u32 %v1263, 4294901760
      %1265 = vmatpush1.msra.mxu0 %v1264
      %1266 = vmatprep.subr.mxu0 0.0
      %v1267 = vand.u32 %v97, 4294901760
      %v1268 = vsub.f32 %v97, %v1267
      %v1269 = vand.u32 %v1268, 4294901760
      %1270 = vmatpush1.msra.mxu0 %v1269
      %1271 = vmatprep.subr.mxu0 0.0
      %1272 = vmatpush2.msra.mxu0 0.0
      %1273 = vmatprep.subr.mxu0 0.0
      %1274 = vmatpush2.msra.mxu0 0.0
      %1275 = vmatprep.subr.mxu0 0.0
      %1276 = vmatpush2.msra.mxu0 0.0
      %1277 = vmatprep.subr.mxu0 0.0
      %1278 = vmatpush2.msra.mxu0 0.0
      %1279 = vmatprep.subr.mxu0 0.0
      %1280 = vmatpush2.msra.mxu0 0.0
      %1281 = vmatprep.subr.mxu0 0.0
      %1282 = vmatpush2.msra.mxu0 0.0
      %1283 = vmatprep.subr.mxu0 0.0
      %1284 = vmatpush2.msra.mxu0 0.0
      %1285 = vmatprep.subr.mxu0 0.0
      %1286 = vmatpush2.msra.mxu0 0.0
      %1287 = vmatprep.subr.mxu0 0.0
      %1288 = vmatpush2.msra.mxu0 0.0
      %1289 = vmatprep.subr.mxu0 0.0
      %1290 = vmatpush2.msra.mxu0 0.0
      %1291 = vmatprep.subr.mxu0 0.0
      %1292 = vmatpush2.msra.mxu0 0.0
      %1293 = vmatprep.subr.mxu0 0.0
      %1294 = vmatpush2.msra.mxu0 0.0
      %1295 = vmatprep.subr.mxu0 0.0
      %1296 = vmatpush2.msra.mxu0 0.0
      %1297 = vmatprep.subr.mxu0 0.0
      %1298 = vmatpush2.msra.mxu0 0.0
      %1299 = vmatprep.subr.mxu0 0.0
      %1300 = vmatpush2.msra.mxu0 0.0
      %1301 = vmatprep.subr.mxu0 0.0
      %1302 = vmatpush2.msra.mxu0 0.0
      %1303 = vmatprep.mubr.f32.mxu0 0.0
      %v1304 = vand.u32 %v755, 4294901760
      %1305 = vmatmul.mubr.f32.gmra.mxu0 %v1304
      %v1306 = vpop.f32.mrf.mxu0
      %v1307 = vadd.f32 %v1188, %v1306
      %v1308 = vpop.f32.mrf.mxu0
      %1309 = vdwg.mxu0
      %1310 = vmatprep.subr.mxu0 0.0
      %v1311 = vand.u32 %v112, 4294901760
      %1312 = vmatpush1.msra.mxu0 %v1311
      %1313 = vmatprep.subr.mxu0 0.0
      %v1314 = vand.u32 %v111, 4294901760
      %1315 = vmatpush1.msra.mxu0 %v1314
      %1316 = vmatprep.subr.mxu0 0.0
      %v1317 = vand.u32 %v110, 4294901760
      %1318 = vmatpush1.msra.mxu0 %v1317
      %1319 = vmatprep.subr.mxu0 0.0
      %v1320 = vand.u32 %v109, 4294901760
      %1321 = vmatpush1.msra.mxu0 %v1320
      %1322 = vmatprep.subr.mxu0 0.0
      %v1323 = vand.u32 %v108, 4294901760
      %1324 = vmatpush1.msra.mxu0 %v1323
      %1325 = vmatprep.subr.mxu0 0.0
      %v1326 = vand.u32 %v107, 4294901760
      %1327 = vmatpush1.msra.mxu0 %v1326
      %1328 = vmatprep.subr.mxu0 0.0
      %v1329 = vand.u32 %v106, 4294901760
      %1330 = vmatpush1.msra.mxu0 %v1329
      %1331 = vmatprep.subr.mxu0 0.0
      %v1332 = vand.u32 %v105, 4294901760
      %1333 = vmatpush1.msra.mxu0 %v1332
      %1334 = vmatprep.subr.mxu0 0.0
      %v1335 = vand.u32 %v104, 4294901760
      %1336 = vmatpush1.msra.mxu0 %v1335
      %1337 = vmatprep.subr.mxu0 0.0
      %v1338 = vand.u32 %v103, 4294901760
      %1339 = vmatpush1.msra.mxu0 %v1338
      %1340 = vmatprep.subr.mxu0 0.0
      %v1341 = vand.u32 %v102, 4294901760
      %1342 = vmatpush1.msra.mxu0 %v1341
      %1343 = vmatprep.subr.mxu0 0.0
      %v1344 = vand.u32 %v101, 4294901760
      %1345 = vmatpush1.msra.mxu0 %v1344
      %1346 = vmatprep.subr.mxu0 0.0
      %v1347 = vand.u32 %v100, 4294901760
      %1348 = vmatpush1.msra.mxu0 %v1347
      %1349 = vmatprep.subr.mxu0 0.0
      %v1350 = vand.u32 %v99, 4294901760
      %1351 = vmatpush1.msra.mxu0 %v1350
      %1352 = vmatprep.subr.mxu0 0.0
      %v1353 = vand.u32 %v98, 4294901760
      %1354 = vmatpush1.msra.mxu0 %v1353
      %1355 = vmatprep.subr.mxu0 0.0
      %v1356 = vand.u32 %v97, 4294901760
      %1357 = vmatpush1.msra.mxu0 %v1356
      %1358 = vmatprep.subr.mxu0 0.0
      %1359 = vmatpush2.msra.mxu0 0.0
      %1360 = vmatprep.subr.mxu0 0.0
      %1361 = vmatpush2.msra.mxu0 0.0
      %1362 = vmatprep.subr.mxu0 0.0
      %1363 = vmatpush2.msra.mxu0 0.0
      %1364 = vmatprep.subr.mxu0 0.0
      %1365 = vmatpush2.msra.mxu0 0.0
      %1366 = vmatprep.subr.mxu0 0.0
      %1367 = vmatpush2.msra.mxu0 0.0
      %1368 = vmatprep.subr.mxu0 0.0
      %1369 = vmatpush2.msra.mxu0 0.0
      %1370 = vmatprep.subr.mxu0 0.0
      %1371 = vmatpush2.msra.mxu0 0.0
      %1372 = vmatprep.subr.mxu0 0.0
      %1373 = vmatpush2.msra.mxu0 0.0
      %1374 = vmatprep.subr.mxu0 0.0
      %1375 = vmatpush2.msra.mxu0 0.0
      %1376 = vmatprep.subr.mxu0 0.0
      %1377 = vmatpush2.msra.mxu0 0.0
      %1378 = vmatprep.subr.mxu0 0.0
      %1379 = vmatpush2.msra.mxu0 0.0
      %1380 = vmatprep.subr.mxu0 0.0
      %1381 = vmatpush2.msra.mxu0 0.0
      %1382 = vmatprep.subr.mxu0 0.0
      %1383 = vmatpush2.msra.mxu0 0.0
      %1384 = vmatprep.subr.mxu0 0.0
      %1385 = vmatpush2.msra.mxu0 0.0
      %1386 = vmatprep.subr.mxu0 0.0
      %1387 = vmatpush2.msra.mxu0 0.0
      %1388 = vmatprep.subr.mxu0 0.0
      %1389 = vmatpush2.msra.mxu0 0.0
      %1390 = vmatprep.mubr.f32.mxu0 0.0
      %v1391 = vand.u32 %v755, 4294901760
      %1392 = vmatmul.mubr.f32.gmra.mxu0 %v1391
      %v1393 = vpop.f32.mrf.mxu0
      %v1394 = vadd.f32 %v1307, %v1393
      %v1395 = vpop.f32.mrf.mxu0
      %1396 = vdwg.mxu0
      %v1397 = vmul.f32 %v1394, 0.9
      %v1398 = vadd.f32 %v1397, 0.00078125
      %1399 = vmatprep.subr.mxu0 0.0
      %v1400 = vand.u32 %v112, 4294901760
      %1401 = vmatpush1.msra.mxu0 %v1400
      %1402 = vmatprep.subr.mxu0 0.0
      %v1403 = vand.u32 %v111, 4294901760
      %1404 = vmatpush1.msra.mxu0 %v1403
      %1405 = vmatprep.subr.mxu0 0.0
      %v1406 = vand.u32 %v110, 4294901760
      %1407 = vmatpush1.msra.mxu0 %v1406
      %1408 = vmatprep.subr.mxu0 0.0
      %v1409 = vand.u32 %v109, 4294901760
      %1410 = vmatpush1.msra.mxu0 %v1409
      %1411 = vmatprep.subr.mxu0 0.0
      %v1412 = vand.u32 %v108, 4294901760
      %1413 = vmatpush1.msra.mxu0 %v1412
      %1414 = vmatprep.subr.mxu0 0.0
      %v1415 = vand.u32 %v107, 4294901760
      %1416 = vmatpush1.msra.mxu0 %v1415
      %1417 = vmatprep.subr.mxu0 0.0
      %v1418 = vand.u32 %v106, 4294901760
      %1419 = vmatpush1.msra.mxu0 %v1418
      %1420 = vmatprep.subr.mxu0 0.0
      %v1421 = vand.u32 %v105, 4294901760
      %1422 = vmatpush1.msra.mxu0 %v1421
      %1423 = vmatprep.subr.mxu0 0.0
      %v1424 = vand.u32 %v104, 4294901760
      %1425 = vmatpush1.msra.mxu0 %v1424
      %1426 = vmatprep.subr.mxu0 0.0
      %v1427 = vand.u32 %v103, 4294901760
      %1428 = vmatpush1.msra.mxu0 %v1427
      %1429 = vmatprep.subr.mxu0 0.0
      %v1430 = vand.u32 %v102, 4294901760
      %1431 = vmatpush1.msra.mxu0 %v1430
      %1432 = vmatprep.subr.mxu0 0.0
      %v1433 = vand.u32 %v101, 4294901760
      %1434 = vmatpush1.msra.mxu0 %v1433
      %1435 = vmatprep.subr.mxu0 0.0
      %v1436 = vand.u32 %v100, 4294901760
      %1437 = vmatpush1.msra.mxu0 %v1436
      %1438 = vmatprep.subr.mxu0 0.0
      %v1439 = vand.u32 %v99, 4294901760
      %1440 = vmatpush1.msra.mxu0 %v1439
      %1441 = vmatprep.subr.mxu0 0.0
      %v1442 = vand.u32 %v98, 4294901760
      %1443 = vmatpush1.msra.mxu0 %v1442
      %1444 = vmatprep.subr.mxu0 0.0
      %v1445 = vand.u32 %v97, 4294901760
      %1446 = vmatpush1.msra.mxu0 %v1445
      %1447 = vmatprep.subr.mxu0 0.0
      %1448 = vmatpush2.msra.mxu0 0.0
      %1449 = vmatprep.subr.mxu0 0.0
      %1450 = vmatpush2.msra.mxu0 0.0
      %1451 = vmatprep.subr.mxu0 0.0
      %1452 = vmatpush2.msra.mxu0 0.0
      %1453 = vmatprep.subr.mxu0 0.0
      %1454 = vmatpush2.msra.mxu0 0.0
      %1455 = vmatprep.subr.mxu0 0.0
      %1456 = vmatpush2.msra.mxu0 0.0
      %1457 = vmatprep.subr.mxu0 0.0
      %1458 = vmatpush2.msra.mxu0 0.0
      %1459 = vmatprep.subr.mxu0 0.0
      %1460 = vmatpush2.msra.mxu0 0.0
      %1461 = vmatprep.subr.mxu0 0.0
      %1462 = vmatpush2.msra.mxu0 0.0
      %1463 = vmatprep.subr.mxu0 0.0
      %1464 = vmatpush2.msra.mxu0 0.0
      %1465 = vmatprep.subr.mxu0 0.0
      %1466 = vmatpush2.msra.mxu0 0.0
      %1467 = vmatprep.subr.mxu0 0.0
      %1468 = vmatpush2.msra.mxu0 0.0
      %1469 = vmatprep.subr.mxu0 0.0
      %1470 = vmatpush2.msra.mxu0 0.0
      %1471 = vmatprep.subr.mxu0 0.0
      %1472 = vmatpush2.msra.mxu0 0.0
      %1473 = vmatprep.subr.mxu0 0.0
      %1474 = vmatpush2.msra.mxu0 0.0
      %1475 = vmatprep.subr.mxu0 0.0
      %1476 = vmatpush2.msra.mxu0 0.0
      %1477 = vmatprep.subr.mxu0 0.0
      %1478 = vmatpush2.msra.mxu0 0.0
      %1479 = vmatprep.mubr.f32.mxu0 0.0
      %v1480 = vand.u32 %v1398, 4294901760
      %v1481 = vsub.f32 %v1398, %v1480
      %v1482 = vand.u32 %v1481, 4294901760
      %v1483 = vsub.f32 %v1481, %v1482
      %v1484 = vand.u32 %v1483, 4294901760
      %1485 = vmatmul.mubr.f32.gmra.mxu0 %v1484
      %v1486 = vpop.f32.mrf.mxu0
      %v1487 = vadd.f32 0.0, %v1486
      %v1488 = vpop.f32.mrf.mxu0
      %1489 = vdwg.mxu0
      %1490 = vmatprep.subr.mxu0 0.0
      %v1491 = vand.u32 %v112, 4294901760
      %v1492 = vsub.f32 %v112, %v1491
      %v1493 = vand.u32 %v1492, 4294901760
      %v1494 = vsub.f32 %v1492, %v1493
      %v1495 = vand.u32 %v1494, 4294901760
      %1496 = vmatpush1.msra.mxu0 %v1495
      %1497 = vmatprep.subr.mxu0 0.0
      %v1498 = vand.u32 %v111, 4294901760
      %v1499 = vsub.f32 %v111, %v1498
      %v1500 = vand.u32 %v1499, 4294901760
      %v1501 = vsub.f32 %v1499, %v1500
      %v1502 = vand.u32 %v1501, 4294901760
      %1503 = vmatpush1.msra.mxu0 %v1502
      %1504 = vmatprep.subr.mxu0 0.0
      %v1505 = vand.u32 %v110, 4294901760
      %v1506 = vsub.f32 %v110, %v1505
      %v1507 = vand.u32 %v1506, 4294901760
      %v1508 = vsub.f32 %v1506, %v1507
      %v1509 = vand.u32 %v1508, 4294901760
      %1510 = vmatpush1.msra.mxu0 %v1509
      %1511 = vmatprep.subr.mxu0 0.0
      %v1512 = vand.u32 %v109, 4294901760
      %v1513 = vsub.f32 %v109, %v1512
      %v1514 = vand.u32 %v1513, 4294901760
      %v1515 = vsub.f32 %v1513, %v1514
      %v1516 = vand.u32 %v1515, 4294901760
      %1517 = vmatpush1.msra.mxu0 %v1516
      %1518 = vmatprep.subr.mxu0 0.0
      %v1519 = vand.u32 %v108, 4294901760
      %v1520 = vsub.f32 %v108, %v1519
      %v1521 = vand.u32 %v1520, 4294901760
      %v1522 = vsub.f32 %v1520, %v1521
      %v1523 = vand.u32 %v1522, 4294901760
      %1524 = vmatpush1.msra.mxu0 %v1523
      %1525 = vmatprep.subr.mxu0 0.0
      %v1526 = vand.u32 %v107, 4294901760
      %v1527 = vsub.f32 %v107, %v1526
      %v1528 = vand.u32 %v1527, 4294901760
      %v1529 = vsub.f32 %v1527, %v1528
      %v1530 = vand.u32 %v1529, 4294901760
      %1531 = vmatpush1.msra.mxu0 %v1530
      %1532 = vmatprep.subr.mxu0 0.0
      %v1533 = vand.u32 %v106, 4294901760
      %v1534 = vsub.f32 %v106, %v1533
      %v1535 = vand.u32 %v1534, 4294901760
      %v1536 = vsub.f32 %v1534, %v1535
      %v1537 = vand.u32 %v1536, 4294901760
      %1538 = vmatpush1.msra.mxu0 %v1537
      %1539 = vmatprep.subr.mxu0 0.0
      %v1540 = vand.u32 %v105, 4294901760
      %v1541 = vsub.f32 %v105, %v1540
      %v1542 = vand.u32 %v1541, 4294901760
      %v1543 = vsub.f32 %v1541, %v1542
      %v1544 = vand.u32 %v1543, 4294901760
      %1545 = vmatpush1.msra.mxu0 %v1544
      %1546 = vmatprep.subr.mxu0 0.0
      %v1547 = vand.u32 %v104, 4294901760
      %v1548 = vsub.f32 %v104, %v1547
      %v1549 = vand.u32 %v1548, 4294901760
      %v1550 = vsub.f32 %v1548, %v1549
      %v1551 = vand.u32 %v1550, 4294901760
      %1552 = vmatpush1.msra.mxu0 %v1551
      %1553 = vmatprep.subr.mxu0 0.0
      %v1554 = vand.u32 %v103, 4294901760
      %v1555 = vsub.f32 %v103, %v1554
      %v1556 = vand.u32 %v1555, 4294901760
      %v1557 = vsub.f32 %v1555, %v1556
      %v1558 = vand.u32 %v1557, 4294901760
      %1559 = vmatpush1.msra.mxu0 %v1558
      %1560 = vmatprep.subr.mxu0 0.0
      %v1561 = vand.u32 %v102, 4294901760
      %v1562 = vsub.f32 %v102, %v1561
      %v1563 = vand.u32 %v1562, 4294901760
      %v1564 = vsub.f32 %v1562, %v1563
      %v1565 = vand.u32 %v1564, 4294901760
      %1566 = vmatpush1.msra.mxu0 %v1565
      %1567 = vmatprep.subr.mxu0 0.0
      %v1568 = vand.u32 %v101, 4294901760
      %v1569 = vsub.f32 %v101, %v1568
      %v1570 = vand.u32 %v1569, 4294901760
      %v1571 = vsub.f32 %v1569, %v1570
      %v1572 = vand.u32 %v1571, 4294901760
      %1573 = vmatpush1.msra.mxu0 %v1572
      %1574 = vmatprep.subr.mxu0 0.0
      %v1575 = vand.u32 %v100, 4294901760
      %v1576 = vsub.f32 %v100, %v1575
      %v1577 = vand.u32 %v1576, 4294901760
      %v1578 = vsub.f32 %v1576, %v1577
      %v1579 = vand.u32 %v1578, 4294901760
      %1580 = vmatpush1.msra.mxu0 %v1579
      %1581 = vmatprep.subr.mxu0 0.0
      %v1582 = vand.u32 %v99, 4294901760
      %v1583 = vsub.f32 %v99, %v1582
      %v1584 = vand.u32 %v1583, 4294901760
      %v1585 = vsub.f32 %v1583, %v1584
      %v1586 = vand.u32 %v1585, 4294901760
      %1587 = vmatpush1.msra.mxu0 %v1586
      %1588 = vmatprep.subr.mxu0 0.0
      %v1589 = vand.u32 %v98, 4294901760
      %v1590 = vsub.f32 %v98, %v1589
      %v1591 = vand.u32 %v1590, 4294901760
      %v1592 = vsub.f32 %v1590, %v1591
      %v1593 = vand.u32 %v1592, 4294901760
      %1594 = vmatpush1.msra.mxu0 %v1593
      %1595 = vmatprep.subr.mxu0 0.0
      %v1596 = vand.u32 %v97, 4294901760
      %v1597 = vsub.f32 %v97, %v1596
      %v1598 = vand.u32 %v1597, 4294901760
      %v1599 = vsub.f32 %v1597, %v1598
      %v1600 = vand.u32 %v1599, 4294901760
      %1601 = vmatpush1.msra.mxu0 %v1600
      %1602 = vmatprep.subr.mxu0 0.0
      %1603 = vmatpush2.msra.mxu0 0.0
      %1604 = vmatprep.subr.mxu0 0.0
      %1605 = vmatpush2.msra.mxu0 0.0
      %1606 = vmatprep.subr.mxu0 0.0
      %1607 = vmatpush2.msra.mxu0 0.0
      %1608 = vmatprep.subr.mxu0 0.0
      %1609 = vmatpush2.msra.mxu0 0.0
      %1610 = vmatprep.subr.mxu0 0.0
      %1611 = vmatpush2.msra.mxu0 0.0
      %1612 = vmatprep.subr.mxu0 0.0
      %1613 = vmatpush2.msra.mxu0 0.0
      %1614 = vmatprep.subr.mxu0 0.0
      %1615 = vmatpush2.msra.mxu0 0.0
      %1616 = vmatprep.subr.mxu0 0.0
      %1617 = vmatpush2.msra.mxu0 0.0
      %1618 = vmatprep.subr.mxu0 0.0
      %1619 = vmatpush2.msra.mxu0 0.0
      %1620 = vmatprep.subr.mxu0 0.0
      %1621 = vmatpush2.msra.mxu0 0.0
      %1622 = vmatprep.subr.mxu0 0.0
      %1623 = vmatpush2.msra.mxu0 0.0
      %1624 = vmatprep.subr.mxu0 0.0
      %1625 = vmatpush2.msra.mxu0 0.0
      %1626 = vmatprep.subr.mxu0 0.0
      %1627 = vmatpush2.msra.mxu0 0.0
      %1628 = vmatprep.subr.mxu0 0.0
      %1629 = vmatpush2.msra.mxu0 0.0
      %1630 = vmatprep.subr.mxu0 0.0
      %1631 = vmatpush2.msra.mxu0 0.0
      %1632 = vmatprep.subr.mxu0 0.0
      %1633 = vmatpush2.msra.mxu0 0.0
      %1634 = vmatprep.mubr.f32.mxu0 0.0
      %v1635 = vand.u32 %v1398, 4294901760
      %1636 = vmatmul.mubr.f32.gmra.mxu0 %v1635
      %v1637 = vpop.f32.mrf.mxu0
      %v1638 = vadd.f32 %v1487, %v1637
      %v1639 = vpop.f32.mrf.mxu0
      %1640 = vdwg.mxu0
      %1641 = vmatprep.subr.mxu0 0.0
      %v1642 = vand.u32 %v112, 4294901760
      %v1643 = vsub.f32 %v112, %v1642
      %1644 = vmatpush1.msra.mxu0 %v1643
      %1645 = vmatprep.subr.mxu0 0.0
      %v1646 = vand.u32 %v111, 4294901760
      %v1647 = vsub.f32 %v111, %v1646
      %1648 = vmatpush1.msra.mxu0 %v1647
      %1649 = vmatprep.subr.mxu0 0.0
      %v1650 = vand.u32 %v110, 4294901760
      %v1651 = vsub.f32 %v110, %v1650
      %1652 = vmatpush1.msra.mxu0 %v1651
      %1653 = vmatprep.subr.mxu0 0.0
      %v1654 = vand.u32 %v109, 4294901760
      %v1655 = vsub.f32 %v109, %v1654
      %1656 = vmatpush1.msra.mxu0 %v1655
      %1657 = vmatprep.subr.mxu0 0.0
      %v1658 = vand.u32 %v108, 4294901760
      %v1659 = vsub.f32 %v108, %v1658
      %1660 = vmatpush1.msra.mxu0 %v1659
      %1661 = vmatprep.subr.mxu0 0.0
      %v1662 = vand.u32 %v107, 4294901760
      %v1663 = vsub.f32 %v107, %v1662
      %1664 = vmatpush1.msra.mxu0 %v1663
      %1665 = vmatprep.subr.mxu0 0.0
      %v1666 = vand.u32 %v106, 4294901760
      %v1667 = vsub.f32 %v106, %v1666
      %1668 = vmatpush1.msra.mxu0 %v1667
      %1669 = vmatprep.subr.mxu0 0.0
      %v1670 = vand.u32 %v105, 4294901760
      %v1671 = vsub.f32 %v105, %v1670
      %1672 = vmatpush1.msra.mxu0 %v1671
      %1673 = vmatprep.subr.mxu0 0.0
      %v1674 = vand.u32 %v104, 4294901760
      %v1675 = vsub.f32 %v104, %v1674
      %1676 = vmatpush1.msra.mxu0 %v1675
      %1677 = vmatprep.subr.mxu0 0.0
      %v1678 = vand.u32 %v103, 4294901760
      %v1679 = vsub.f32 %v103, %v1678
      %1680 = vmatpush1.msra.mxu0 %v1679
      %1681 = vmatprep.subr.mxu0 0.0
      %v1682 = vand.u32 %v102, 4294901760
      %v1683 = vsub.f32 %v102, %v1682
      %1684 = vmatpush1.msra.mxu0 %v1683
      %1685 = vmatprep.subr.mxu0 0.0
      %v1686 = vand.u32 %v101, 4294901760
      %v1687 = vsub.f32 %v101, %v1686
      %1688 = vmatpush1.msra.mxu0 %v1687
      %1689 = vmatprep.subr.mxu0 0.0
      %v1690 = vand.u32 %v100, 4294901760
      %v1691 = vsub.f32 %v100, %v1690
      %1692 = vmatpush1.msra.mxu0 %v1691
      %1693 = vmatprep.subr.mxu0 0.0
      %v1694 = vand.u32 %v99, 4294901760
      %v1695 = vsub.f32 %v99, %v1694
      %1696 = vmatpush1.msra.mxu0 %v1695
      %1697 = vmatprep.subr.mxu0 0.0
      %v1698 = vand.u32 %v98, 4294901760
      %v1699 = vsub.f32 %v98, %v1698
      %1700 = vmatpush1.msra.mxu0 %v1699
      %1701 = vmatprep.subr.mxu0 0.0
      %v1702 = vand.u32 %v97, 4294901760
      %v1703 = vsub.f32 %v97, %v1702
      %1704 = vmatpush1.msra.mxu0 %v1703
      %1705 = vmatprep.subr.mxu0 0.0
      %1706 = vmatpush2.msra.mxu0 0.0
      %1707 = vmatprep.subr.mxu0 0.0
      %1708 = vmatpush2.msra.mxu0 0.0
      %1709 = vmatprep.subr.mxu0 0.0
      %1710 = vmatpush2.msra.mxu0 0.0
      %1711 = vmatprep.subr.mxu0 0.0
      %1712 = vmatpush2.msra.mxu0 0.0
      %1713 = vmatprep.subr.mxu0 0.0
      %1714 = vmatpush2.msra.mxu0 0.0
      %1715 = vmatprep.subr.mxu0 0.0
      %1716 = vmatpush2.msra.mxu0 0.0
      %1717 = vmatprep.subr.mxu0 0.0
      %1718 = vmatpush2.msra.mxu0 0.0
      %1719 = vmatprep.subr.mxu0 0.0
      %1720 = vmatpush2.msra.mxu0 0.0
      %1721 = vmatprep.subr.mxu0 0.0
      %1722 = vmatpush2.msra.mxu0 0.0
      %1723 = vmatprep.subr.mxu0 0.0
      %1724 = vmatpush2.msra.mxu0 0.0
      %1725 = vmatprep.subr.mxu0 0.0
      %1726 = vmatpush2.msra.mxu0 0.0
      %1727 = vmatprep.subr.mxu0 0.0
      %1728 = vmatpush2.msra.mxu0 0.0
      %1729 = vmatprep.subr.mxu0 0.0
      %1730 = vmatpush2.msra.mxu0 0.0
      %1731 = vmatprep.subr.mxu0 0.0
      %1732 = vmatpush2.msra.mxu0 0.0
      %1733 = vmatprep.subr.mxu0 0.0
      %1734 = vmatpush2.msra.mxu0 0.0
      %1735 = vmatprep.subr.mxu0 0.0
      %1736 = vmatpush2.msra.mxu0 0.0
      %1737 = vmatprep.mubr.f32.mxu0 0.0
      %v1738 = vand.u32 %v1398, 4294901760
      %v1739 = vsub.f32 %v1398, %v1738
      %1740 = vmatmul.mubr.f32.gmra.mxu0 %v1739
      %v1741 = vpop.f32.mrf.mxu0
      %v1742 = vadd.f32 %v1638, %v1741
      %v1743 = vpop.f32.mrf.mxu0
      %1744 = vdwg.mxu0
      %1745 = vmatprep.subr.mxu0 0.0
      %v1746 = vand.u32 %v112, 4294901760
      %1747 = vmatpush1.msra.mxu0 %v1746
      %1748 = vmatprep.subr.mxu0 0.0
      %v1749 = vand.u32 %v111, 4294901760
      %1750 = vmatpush1.msra.mxu0 %v1749
      %1751 = vmatprep.subr.mxu0 0.0
      %v1752 = vand.u32 %v110, 4294901760
      %1753 = vmatpush1.msra.mxu0 %v1752
      %1754 = vmatprep.subr.mxu0 0.0
      %v1755 = vand.u32 %v109, 4294901760
      %1756 = vmatpush1.msra.mxu0 %v1755
      %1757 = vmatprep.subr.mxu0 0.0
      %v1758 = vand.u32 %v108, 4294901760
      %1759 = vmatpush1.msra.mxu0 %v1758
      %1760 = vmatprep.subr.mxu0 0.0
      %v1761 = vand.u32 %v107, 4294901760
      %1762 = vmatpush1.msra.mxu0 %v1761
      %1763 = vmatprep.subr.mxu0 0.0
      %v1764 = vand.u32 %v106, 4294901760
      %1765 = vmatpush1.msra.mxu0 %v1764
      %1766 = vmatprep.subr.mxu0 0.0
      %v1767 = vand.u32 %v105, 4294901760
      %1768 = vmatpush1.msra.mxu0 %v1767
      %1769 = vmatprep.subr.mxu0 0.0
      %v1770 = vand.u32 %v104, 4294901760
      %1771 = vmatpush1.msra.mxu0 %v1770
      %1772 = vmatprep.subr.mxu0 0.0
      %v1773 = vand.u32 %v103, 4294901760
      %1774 = vmatpush1.msra.mxu0 %v1773
      %1775 = vmatprep.subr.mxu0 0.0
      %v1776 = vand.u32 %v102, 4294901760
      %1777 = vmatpush1.msra.mxu0 %v1776
      %1778 = vmatprep.subr.mxu0 0.0
      %v1779 = vand.u32 %v101, 4294901760
      %1780 = vmatpush1.msra.mxu0 %v1779
      %1781 = vmatprep.subr.mxu0 0.0
      %v1782 = vand.u32 %v100, 4294901760
      %1783 = vmatpush1.msra.mxu0 %v1782
      %1784 = vmatprep.subr.mxu0 0.0
      %v1785 = vand.u32 %v99, 4294901760
      %1786 = vmatpush1.msra.mxu0 %v1785
      %1787 = vmatprep.subr.mxu0 0.0
      %v1788 = vand.u32 %v98, 4294901760
      %1789 = vmatpush1.msra.mxu0 %v1788
      %1790 = vmatprep.subr.mxu0 0.0
      %v1791 = vand.u32 %v97, 4294901760
      %1792 = vmatpush1.msra.mxu0 %v1791
      %1793 = vmatprep.subr.mxu0 0.0
      %1794 = vmatpush2.msra.mxu0 0.0
      %1795 = vmatprep.subr.mxu0 0.0
      %1796 = vmatpush2.msra.mxu0 0.0
      %1797 = vmatprep.subr.mxu0 0.0
      %1798 = vmatpush2.msra.mxu0 0.0
      %1799 = vmatprep.subr.mxu0 0.0
      %1800 = vmatpush2.msra.mxu0 0.0
      %1801 = vmatprep.subr.mxu0 0.0
      %1802 = vmatpush2.msra.mxu0 0.0
      %1803 = vmatprep.subr.mxu0 0.0
      %1804 = vmatpush2.msra.mxu0 0.0
      %1805 = vmatprep.subr.mxu0 0.0
      %1806 = vmatpush2.msra.mxu0 0.0
      %1807 = vmatprep.subr.mxu0 0.0
      %1808 = vmatpush2.msra.mxu0 0.0
      %1809 = vmatprep.subr.mxu0 0.0
      %1810 = vmatpush2.msra.mxu0 0.0
      %1811 = vmatprep.subr.mxu0 0.0
      %1812 = vmatpush2.msra.mxu0 0.0
      %1813 = vmatprep.subr.mxu0 0.0
      %1814 = vmatpush2.msra.mxu0 0.0
      %1815 = vmatprep.subr.mxu0 0.0
      %1816 = vmatpush2.msra.mxu0 0.0
      %1817 = vmatprep.subr.mxu0 0.0
      %1818 = vmatpush2.msra.mxu0 0.0
      %1819 = vmatprep.subr.mxu0 0.0
      %1820 = vmatpush2.msra.mxu0 0.0
      %1821 = vmatprep.subr.mxu0 0.0
      %1822 = vmatpush2.msra.mxu0 0.0
      %1823 = vmatprep.subr.mxu0 0.0
      %1824 = vmatpush2.msra.mxu0 0.0
      %1825 = vmatprep.mubr.f32.mxu0 0.0
      %v1826 = vand.u32 %v1398, 4294901760
      %v1827 = vsub.f32 %v1398, %v1826
      %v1828 = vand.u32 %v1827, 4294901760
      %1829 = vmatmul.mubr.f32.gmra.mxu0 %v1828
      %v1830 = vpop.f32.mrf.mxu0
      %v1831 = vadd.f32 %v1742, %v1830
      %v1832 = vpop.f32.mrf.mxu0
      %1833 = vdwg.mxu0
      %1834 = vmatprep.subr.mxu0 0.0
      %v1835 = vand.u32 %v112, 4294901760
      %v1836 = vsub.f32 %v112, %v1835
      %v1837 = vand.u32 %v1836, 4294901760
      %1838 = vmatpush1.msra.mxu0 %v1837
      %1839 = vmatprep.subr.mxu0 0.0
      %v1840 = vand.u32 %v111, 4294901760
      %v1841 = vsub.f32 %v111, %v1840
      %v1842 = vand.u32 %v1841, 4294901760
      %1843 = vmatpush1.msra.mxu0 %v1842
      %1844 = vmatprep.subr.mxu0 0.0
      %v1845 = vand.u32 %v110, 4294901760
      %v1846 = vsub.f32 %v110, %v1845
      %v1847 = vand.u32 %v1846, 4294901760
      %1848 = vmatpush1.msra.mxu0 %v1847
      %1849 = vmatprep.subr.mxu0 0.0
      %v1850 = vand.u32 %v109, 4294901760
      %v1851 = vsub.f32 %v109, %v1850
      %v1852 = vand.u32 %v1851, 4294901760
      %1853 = vmatpush1.msra.mxu0 %v1852
      %1854 = vmatprep.subr.mxu0 0.0
      %v1855 = vand.u32 %v108, 4294901760
      %v1856 = vsub.f32 %v108, %v1855
      %v1857 = vand.u32 %v1856, 4294901760
      %1858 = vmatpush1.msra.mxu0 %v1857
      %1859 = vmatprep.subr.mxu0 0.0
      %v1860 = vand.u32 %v107, 4294901760
      %v1861 = vsub.f32 %v107, %v1860
      %v1862 = vand.u32 %v1861, 4294901760
      %1863 = vmatpush1.msra.mxu0 %v1862
      %1864 = vmatprep.subr.mxu0 0.0
      %v1865 = vand.u32 %v106, 4294901760
      %v1866 = vsub.f32 %v106, %v1865
      %v1867 = vand.u32 %v1866, 4294901760
      %1868 = vmatpush1.msra.mxu0 %v1867
      %1869 = vmatprep.subr.mxu0 0.0
      %v1870 = vand.u32 %v105, 4294901760
      %v1871 = vsub.f32 %v105, %v1870
      %v1872 = vand.u32 %v1871, 4294901760
      %1873 = vmatpush1.msra.mxu0 %v1872
      %1874 = vmatprep.subr.mxu0 0.0
      %v1875 = vand.u32 %v104, 4294901760
      %v1876 = vsub.f32 %v104, %v1875
      %v1877 = vand.u32 %v1876, 4294901760
      %1878 = vmatpush1.msra.mxu0 %v1877
      %1879 = vmatprep.subr.mxu0 0.0
      %v1880 = vand.u32 %v103, 4294901760
      %v1881 = vsub.f32 %v103, %v1880
      %v1882 = vand.u32 %v1881, 4294901760
      %1883 = vmatpush1.msra.mxu0 %v1882
      %1884 = vmatprep.subr.mxu0 0.0
      %v1885 = vand.u32 %v102, 4294901760
      %v1886 = vsub.f32 %v102, %v1885
      %v1887 = vand.u32 %v1886, 4294901760
      %1888 = vmatpush1.msra.mxu0 %v1887
      %1889 = vmatprep.subr.mxu0 0.0
      %v1890 = vand.u32 %v101, 4294901760
      %v1891 = vsub.f32 %v101, %v1890
      %v1892 = vand.u32 %v1891, 4294901760
      %1893 = vmatpush1.msra.mxu0 %v1892
      %1894 = vmatprep.subr.mxu0 0.0
      %v1895 = vand.u32 %v100, 4294901760
      %v1896 = vsub.f32 %v100, %v1895
      %v1897 = vand.u32 %v1896, 4294901760
      %1898 = vmatpush1.msra.mxu0 %v1897
      %1899 = vmatprep.subr.mxu0 0.0
      %v1900 = vand.u32 %v99, 4294901760
      %v1901 = vsub.f32 %v99, %v1900
      %v1902 = vand.u32 %v1901, 4294901760
      %1903 = vmatpush1.msra.mxu0 %v1902
      %1904 = vmatprep.subr.mxu0 0.0
      %v1905 = vand.u32 %v98, 4294901760
      %v1906 = vsub.f32 %v98, %v1905
      %v1907 = vand.u32 %v1906, 4294901760
      %1908 = vmatpush1.msra.mxu0 %v1907
      %1909 = vmatprep.subr.mxu0 0.0
      %v1910 = vand.u32 %v97, 4294901760
      %v1911 = vsub.f32 %v97, %v1910
      %v1912 = vand.u32 %v1911, 4294901760
      %1913 = vmatpush1.msra.mxu0 %v1912
      %1914 = vmatprep.subr.mxu0 0.0
      %1915 = vmatpush2.msra.mxu0 0.0
      %1916 = vmatprep.subr.mxu0 0.0
      %1917 = vmatpush2.msra.mxu0 0.0
      %1918 = vmatprep.subr.mxu0 0.0
      %1919 = vmatpush2.msra.mxu0 0.0
      %1920 = vmatprep.subr.mxu0 0.0
      %1921 = vmatpush2.msra.mxu0 0.0
      %1922 = vmatprep.subr.mxu0 0.0
      %1923 = vmatpush2.msra.mxu0 0.0
      %1924 = vmatprep.subr.mxu0 0.0
      %1925 = vmatpush2.msra.mxu0 0.0
      %1926 = vmatprep.subr.mxu0 0.0
      %1927 = vmatpush2.msra.mxu0 0.0
      %1928 = vmatprep.subr.mxu0 0.0
      %1929 = vmatpush2.msra.mxu0 0.0
      %1930 = vmatprep.subr.mxu0 0.0
      %1931 = vmatpush2.msra.mxu0 0.0
      %1932 = vmatprep.subr.mxu0 0.0
      %1933 = vmatpush2.msra.mxu0 0.0
      %1934 = vmatprep.subr.mxu0 0.0
      %1935 = vmatpush2.msra.mxu0 0.0
      %1936 = vmatprep.subr.mxu0 0.0
      %1937 = vmatpush2.msra.mxu0 0.0
      %1938 = vmatprep.subr.mxu0 0.0
      %1939 = vmatpush2.msra.mxu0 0.0
      %1940 = vmatprep.subr.mxu0 0.0
      %1941 = vmatpush2.msra.mxu0 0.0
      %1942 = vmatprep.subr.mxu0 0.0
      %1943 = vmatpush2.msra.mxu0 0.0
      %1944 = vmatprep.subr.mxu0 0.0
      %1945 = vmatpush2.msra.mxu0 0.0
      %1946 = vmatprep.mubr.f32.mxu0 0.0
      %v1947 = vand.u32 %v1398, 4294901760
      %1948 = vmatmul.mubr.f32.gmra.mxu0 %v1947
      %v1949 = vpop.f32.mrf.mxu0
      %v1950 = vadd.f32 %v1831, %v1949
      %v1951 = vpop.f32.mrf.mxu0
      %1952 = vdwg.mxu0
      %1953 = vmatprep.subr.mxu0 0.0
      %v1954 = vand.u32 %v112, 4294901760
      %1955 = vmatpush1.msra.mxu0 %v1954
      %1956 = vmatprep.subr.mxu0 0.0
      %v1957 = vand.u32 %v111, 4294901760
      %1958 = vmatpush1.msra.mxu0 %v1957
      %1959 = vmatprep.subr.mxu0 0.0
      %v1960 = vand.u32 %v110, 4294901760
      %1961 = vmatpush1.msra.mxu0 %v1960
      %1962 = vmatprep.subr.mxu0 0.0
      %v1963 = vand.u32 %v109, 4294901760
      %1964 = vmatpush1.msra.mxu0 %v1963
      %1965 = vmatprep.subr.mxu0 0.0
      %v1966 = vand.u32 %v108, 4294901760
      %1967 = vmatpush1.msra.mxu0 %v1966
      %1968 = vmatprep.subr.mxu0 0.0
      %v1969 = vand.u32 %v107, 4294901760
      %1970 = vmatpush1.msra.mxu0 %v1969
      %1971 = vmatprep.subr.mxu0 0.0
      %v1972 = vand.u32 %v106, 4294901760
      %1973 = vmatpush1.msra.mxu0 %v1972
      %1974 = vmatprep.subr.mxu0 0.0
      %v1975 = vand.u32 %v105, 4294901760
      %1976 = vmatpush1.msra.mxu0 %v1975
      %1977 = vmatprep.subr.mxu0 0.0
      %v1978 = vand.u32 %v104, 4294901760
      %1979 = vmatpush1.msra.mxu0 %v1978
      %1980 = vmatprep.subr.mxu0 0.0
      %v1981 = vand.u32 %v103, 4294901760
      %1982 = vmatpush1.msra.mxu0 %v1981
      %1983 = vmatprep.subr.mxu0 0.0
      %v1984 = vand.u32 %v102, 4294901760
      %1985 = vmatpush1.msra.mxu0 %v1984
      %1986 = vmatprep.subr.mxu0 0.0
      %v1987 = vand.u32 %v101, 4294901760
      %1988 = vmatpush1.msra.mxu0 %v1987
      %1989 = vmatprep.subr.mxu0 0.0
      %v1990 = vand.u32 %v100, 4294901760
      %1991 = vmatpush1.msra.mxu0 %v1990
      %1992 = vmatprep.subr.mxu0 0.0
      %v1993 = vand.u32 %v99, 4294901760
      %1994 = vmatpush1.msra.mxu0 %v1993
      %1995 = vmatprep.subr.mxu0 0.0
      %v1996 = vand.u32 %v98, 4294901760
      %1997 = vmatpush1.msra.mxu0 %v1996
      %1998 = vmatprep.subr.mxu0 0.0
      %v1999 = vand.u32 %v97, 4294901760
      %2000 = vmatpush1.msra.mxu0 %v1999
      %2001 = vmatprep.subr.mxu0 0.0
      %2002 = vmatpush2.msra.mxu0 0.0
      %2003 = vmatprep.subr.mxu0 0.0
      %2004 = vmatpush2.msra.mxu0 0.0
      %2005 = vmatprep.subr.mxu0 0.0
      %2006 = vmatpush2.msra.mxu0 0.0
      %2007 = vmatprep.subr.mxu0 0.0
      %2008 = vmatpush2.msra.mxu0 0.0
      %2009 = vmatprep.subr.mxu0 0.0
      %2010 = vmatpush2.msra.mxu0 0.0
      %2011 = vmatprep.subr.mxu0 0.0
      %2012 = vmatpush2.msra.mxu0 0.0
      %2013 = vmatprep.subr.mxu0 0.0
      %2014 = vmatpush2.msra.mxu0 0.0
      %2015 = vmatprep.subr.mxu0 0.0
      %2016 = vmatpush2.msra.mxu0 0.0
      %2017 = vmatprep.subr.mxu0 0.0
      %2018 = vmatpush2.msra.mxu0 0.0
      %2019 = vmatprep.subr.mxu0 0.0
      %2020 = vmatpush2.msra.mxu0 0.0
      %2021 = vmatprep.subr.mxu0 0.0
      %2022 = vmatpush2.msra.mxu0 0.0
      %2023 = vmatprep.subr.mxu0 0.0
      %2024 = vmatpush2.msra.mxu0 0.0
      %2025 = vmatprep.subr.mxu0 0.0
      %2026 = vmatpush2.msra.mxu0 0.0
      %2027 = vmatprep.subr.mxu0 0.0
      %2028 = vmatpush2.msra.mxu0 0.0
      %2029 = vmatprep.subr.mxu0 0.0
      %2030 = vmatpush2.msra.mxu0 0.0
      %2031 = vmatprep.subr.mxu0 0.0
      %2032 = vmatpush2.msra.mxu0 0.0
      %2033 = vmatprep.mubr.f32.mxu0 0.0
      %v2034 = vand.u32 %v1398, 4294901760
      %2035 = vmatmul.mubr.f32.gmra.mxu0 %v2034
      %v2036 = vpop.f32.mrf.mxu0
      %v2037 = vadd.f32 %v1950, %v2036
      %v2038 = vpop.f32.mrf.mxu0
      %2039 = vdwg.mxu0
      %v2040 = vmul.f32 %v2037, 0.9
      %v2041 = vadd.f32 %v2040, 0.00078125
      %2042 = vmatprep.subr.mxu0 0.0
      %v2043 = vand.u32 %v112, 4294901760
      %2044 = vmatpush1.msra.mxu0 %v2043
      %2045 = vmatprep.subr.mxu0 0.0
      %v2046 = vand.u32 %v111, 4294901760
      %2047 = vmatpush1.msra.mxu0 %v2046
      %2048 = vmatprep.subr.mxu0 0.0
      %v2049 = vand.u32 %v110, 4294901760
      %2050 = vmatpush1.msra.mxu0 %v2049
      %2051 = vmatprep.subr.mxu0 0.0
      %v2052 = vand.u32 %v109, 4294901760
      %2053 = vmatpush1.msra.mxu0 %v2052
      %2054 = vmatprep.subr.mxu0 0.0
      %v2055 = vand.u32 %v108, 4294901760
      %2056 = vmatpush1.msra.mxu0 %v2055
      %2057 = vmatprep.subr.mxu0 0.0
      %v2058 = vand.u32 %v107, 4294901760
      %2059 = vmatpush1.msra.mxu0 %v2058
      %2060 = vmatprep.subr.mxu0 0.0
      %v2061 = vand.u32 %v106, 4294901760
      %2062 = vmatpush1.msra.mxu0 %v2061
      %2063 = vmatprep.subr.mxu0 0.0
      %v2064 = vand.u32 %v105, 4294901760
      %2065 = vmatpush1.msra.mxu0 %v2064
      %2066 = vmatprep.subr.mxu0 0.0
      %v2067 = vand.u32 %v104, 4294901760
      %2068 = vmatpush1.msra.mxu0 %v2067
      %2069 = vmatprep.subr.mxu0 0.0
      %v2070 = vand.u32 %v103, 4294901760
      %2071 = vmatpush1.msra.mxu0 %v2070
      %2072 = vmatprep.subr.mxu0 0.0
      %v2073 = vand.u32 %v102, 4294901760
      %2074 = vmatpush1.msra.mxu0 %v2073
      %2075 = vmatprep.subr.mxu0 0.0
      %v2076 = vand.u32 %v101, 4294901760
      %2077 = vmatpush1.msra.mxu0 %v2076
      %2078 = vmatprep.subr.mxu0 0.0
      %v2079 = vand.u32 %v100, 4294901760
      %2080 = vmatpush1.msra.mxu0 %v2079
      %2081 = vmatprep.subr.mxu0 0.0
      %v2082 = vand.u32 %v99, 4294901760
      %2083 = vmatpush1.msra.mxu0 %v2082
      %2084 = vmatprep.subr.mxu0 0.0
      %v2085 = vand.u32 %v98, 4294901760
      %2086 = vmatpush1.msra.mxu0 %v2085
      %2087 = vmatprep.subr.mxu0 0.0
      %v2088 = vand.u32 %v97, 4294901760
      %2089 = vmatpush1.msra.mxu0 %v2088
      %2090 = vmatprep.subr.mxu0 0.0
      %2091 = vmatpush2.msra.mxu0 0.0
      %2092 = vmatprep.subr.mxu0 0.0
      %2093 = vmatpush2.msra.mxu0 0.0
      %2094 = vmatprep.subr.mxu0 0.0
      %2095 = vmatpush2.msra.mxu0 0.0
      %2096 = vmatprep.subr.mxu0 0.0
      %2097 = vmatpush2.msra.mxu0 0.0
      %2098 = vmatprep.subr.mxu0 0.0
      %2099 = vmatpush2.msra.mxu0 0.0
      %2100 = vmatprep.subr.mxu0 0.0
      %2101 = vmatpush2.msra.mxu0 0.0
      %2102 = vmatprep.subr.mxu0 0.0
      %2103 = vmatpush2.msra.mxu0 0.0
      %2104 = vmatprep.subr.mxu0 0.0
      %2105 = vmatpush2.msra.mxu0 0.0
      %2106 = vmatprep.subr.mxu0 0.0
      %2107 = vmatpush2.msra.mxu0 0.0
      %2108 = vmatprep.subr.mxu0 0.0
      %2109 = vmatpush2.msra.mxu0 0.0
      %2110 = vmatprep.subr.mxu0 0.0
      %2111 = vmatpush2.msra.mxu0 0.0
      %2112 = vmatprep.subr.mxu0 0.0
      %2113 = vmatpush2.msra.mxu0 0.0
      %2114 = vmatprep.subr.mxu0 0.0
      %2115 = vmatpush2.msra.mxu0 0.0
      %2116 = vmatprep.subr.mxu0 0.0
      %2117 = vmatpush2.msra.mxu0 0.0
      %2118 = vmatprep.subr.mxu0 0.0
      %2119 = vmatpush2.msra.mxu0 0.0
      %2120 = vmatprep.subr.mxu0 0.0
      %2121 = vmatpush2.msra.mxu0 0.0
      %2122 = vmatprep.mubr.f32.mxu0 0.0
      %v2123 = vand.u32 %v2041, 4294901760
      %v2124 = vsub.f32 %v2041, %v2123
      %v2125 = vand.u32 %v2124, 4294901760
      %v2126 = vsub.f32 %v2124, %v2125
      %v2127 = vand.u32 %v2126, 4294901760
      %2128 = vmatmul.mubr.f32.gmra.mxu0 %v2127
      %v2129 = vpop.f32.mrf.mxu0
      %v2130 = vadd.f32 0.0, %v2129
      %v2131 = vpop.f32.mrf.mxu0
      %2132 = vdwg.mxu0
      %2133 = vmatprep.subr.mxu0 0.0
      %v2134 = vand.u32 %v112, 4294901760
      %v2135 = vsub.f32 %v112, %v2134
      %v2136 = vand.u32 %v2135, 4294901760
      %v2137 = vsub.f32 %v2135, %v2136
      %v2138 = vand.u32 %v2137, 4294901760
      %2139 = vmatpush1.msra.mxu0 %v2138
      %2140 = vmatprep.subr.mxu0 0.0
      %v2141 = vand.u32 %v111, 4294901760
      %v2142 = vsub.f32 %v111, %v2141
      %v2143 = vand.u32 %v2142, 4294901760
      %v2144 = vsub.f32 %v2142, %v2143
      %v2145 = vand.u32 %v2144, 4294901760
      %2146 = vmatpush1.msra.mxu0 %v2145
      %2147 = vmatprep.subr.mxu0 0.0
      %v2148 = vand.u32 %v110, 4294901760
      %v2149 = vsub.f32 %v110, %v2148
      %v2150 = vand.u32 %v2149, 4294901760
      %v2151 = vsub.f32 %v2149, %v2150
      %v2152 = vand.u32 %v2151, 4294901760
      %2153 = vmatpush1.msra.mxu0 %v2152
      %2154 = vmatprep.subr.mxu0 0.0
      %v2155 = vand.u32 %v109, 4294901760
      %v2156 = vsub.f32 %v109, %v2155
      %v2157 = vand.u32 %v2156, 4294901760
      %v2158 = vsub.f32 %v2156, %v2157
      %v2159 = vand.u32 %v2158, 4294901760
      %2160 = vmatpush1.msra.mxu0 %v2159
      %2161 = vmatprep.subr.mxu0 0.0
      %v2162 = vand.u32 %v108, 4294901760
      %v2163 = vsub.f32 %v108, %v2162
      %v2164 = vand.u32 %v2163, 4294901760
      %v2165 = vsub.f32 %v2163, %v2164
      %v2166 = vand.u32 %v2165, 4294901760
      %2167 = vmatpush1.msra.mxu0 %v2166
      %2168 = vmatprep.subr.mxu0 0.0
      %v2169 = vand.u32 %v107, 4294901760
      %v2170 = vsub.f32 %v107, %v2169
      %v2171 = vand.u32 %v2170, 4294901760
      %v2172 = vsub.f32 %v2170, %v2171
      %v2173 = vand.u32 %v2172, 4294901760
      %2174 = vmatpush1.msra.mxu0 %v2173
      %2175 = vmatprep.subr.mxu0 0.0
      %v2176 = vand.u32 %v106, 4294901760
      %v2177 = vsub.f32 %v106, %v2176
      %v2178 = vand.u32 %v2177, 4294901760
      %v2179 = vsub.f32 %v2177, %v2178
      %v2180 = vand.u32 %v2179, 4294901760
      %2181 = vmatpush1.msra.mxu0 %v2180
      %2182 = vmatprep.subr.mxu0 0.0
      %v2183 = vand.u32 %v105, 4294901760
      %v2184 = vsub.f32 %v105, %v2183
      %v2185 = vand.u32 %v2184, 4294901760
      %v2186 = vsub.f32 %v2184, %v2185
      %v2187 = vand.u32 %v2186, 4294901760
      %2188 = vmatpush1.msra.mxu0 %v2187
      %2189 = vmatprep.subr.mxu0 0.0
      %v2190 = vand.u32 %v104, 4294901760
      %v2191 = vsub.f32 %v104, %v2190
      %v2192 = vand.u32 %v2191, 4294901760
      %v2193 = vsub.f32 %v2191, %v2192
      %v2194 = vand.u32 %v2193, 4294901760
      %2195 = vmatpush1.msra.mxu0 %v2194
      %2196 = vmatprep.subr.mxu0 0.0
      %v2197 = vand.u32 %v103, 4294901760
      %v2198 = vsub.f32 %v103, %v2197
      %v2199 = vand.u32 %v2198, 4294901760
      %v2200 = vsub.f32 %v2198, %v2199
      %v2201 = vand.u32 %v2200, 4294901760
      %2202 = vmatpush1.msra.mxu0 %v2201
      %2203 = vmatprep.subr.mxu0 0.0
      %v2204 = vand.u32 %v102, 4294901760
      %v2205 = vsub.f32 %v102, %v2204
      %v2206 = vand.u32 %v2205, 4294901760
      %v2207 = vsub.f32 %v2205, %v2206
      %v2208 = vand.u32 %v2207, 4294901760
      %2209 = vmatpush1.msra.mxu0 %v2208
      %2210 = vmatprep.subr.mxu0 0.0
      %v2211 = vand.u32 %v101, 4294901760
      %v2212 = vsub.f32 %v101, %v2211
      %v2213 = vand.u32 %v2212, 4294901760
      %v2214 = vsub.f32 %v2212, %v2213
      %v2215 = vand.u32 %v2214, 4294901760
      %2216 = vmatpush1.msra.mxu0 %v2215
      %2217 = vmatprep.subr.mxu0 0.0
      %v2218 = vand.u32 %v100, 4294901760
      %v2219 = vsub.f32 %v100, %v2218
      %v2220 = vand.u32 %v2219, 4294901760
      %v2221 = vsub.f32 %v2219, %v2220
      %v2222 = vand.u32 %v2221, 4294901760
      %2223 = vmatpush1.msra.mxu0 %v2222
      %2224 = vmatprep.subr.mxu0 0.0
      %v2225 = vand.u32 %v99, 4294901760
      %v2226 = vsub.f32 %v99, %v2225
      %v2227 = vand.u32 %v2226, 4294901760
      %v2228 = vsub.f32 %v2226, %v2227
      %v2229 = vand.u32 %v2228, 4294901760
      %2230 = vmatpush1.msra.mxu0 %v2229
      %2231 = vmatprep.subr.mxu0 0.0
      %v2232 = vand.u32 %v98, 4294901760
      %v2233 = vsub.f32 %v98, %v2232
      %v2234 = vand.u32 %v2233, 4294901760
      %v2235 = vsub.f32 %v2233, %v2234
      %v2236 = vand.u32 %v2235, 4294901760
      %2237 = vmatpush1.msra.mxu0 %v2236
      %2238 = vmatprep.subr.mxu0 0.0
      %v2239 = vand.u32 %v97, 4294901760
      %v2240 = vsub.f32 %v97, %v2239
      %v2241 = vand.u32 %v2240, 4294901760
      %v2242 = vsub.f32 %v2240, %v2241
      %v2243 = vand.u32 %v2242, 4294901760
      %2244 = vmatpush1.msra.mxu0 %v2243
      %2245 = vmatprep.subr.mxu0 0.0
      %2246 = vmatpush2.msra.mxu0 0.0
      %2247 = vmatprep.subr.mxu0 0.0
      %2248 = vmatpush2.msra.mxu0 0.0
      %2249 = vmatprep.subr.mxu0 0.0
      %2250 = vmatpush2.msra.mxu0 0.0
      %2251 = vmatprep.subr.mxu0 0.0
      %2252 = vmatpush2.msra.mxu0 0.0
      %2253 = vmatprep.subr.mxu0 0.0
      %2254 = vmatpush2.msra.mxu0 0.0
      %2255 = vmatprep.subr.mxu0 0.0
      %2256 = vmatpush2.msra.mxu0 0.0
      %2257 = vmatprep.subr.mxu0 0.0
      %2258 = vmatpush2.msra.mxu0 0.0
      %2259 = vmatprep.subr.mxu0 0.0
      %2260 = vmatpush2.msra.mxu0 0.0
      %2261 = vmatprep.subr.mxu0 0.0
      %2262 = vmatpush2.msra.mxu0 0.0
      %2263 = vmatprep.subr.mxu0 0.0
      %2264 = vmatpush2.msra.mxu0 0.0
      %2265 = vmatprep.subr.mxu0 0.0
      %2266 = vmatpush2.msra.mxu0 0.0
      %2267 = vmatprep.subr.mxu0 0.0
      %2268 = vmatpush2.msra.mxu0 0.0
      %2269 = vmatprep.subr.mxu0 0.0
      %2270 = vmatpush2.msra.mxu0 0.0
      %2271 = vmatprep.subr.mxu0 0.0
      %2272 = vmatpush2.msra.mxu0 0.0
      %2273 = vmatprep.subr.mxu0 0.0
      %2274 = vmatpush2.msra.mxu0 0.0
      %2275 = vmatprep.subr.mxu0 0.0
      %2276 = vmatpush2.msra.mxu0 0.0
      %2277 = vmatprep.mubr.f32.mxu0 0.0
      %v2278 = vand.u32 %v2041, 4294901760
      %2279 = vmatmul.mubr.f32.gmra.mxu0 %v2278
      %v2280 = vpop.f32.mrf.mxu0
      %v2281 = vadd.f32 %v2130, %v2280
      %v2282 = vpop.f32.mrf.mxu0
      %2283 = vdwg.mxu0
      %2284 = vmatprep.subr.mxu0 0.0
      %v2285 = vand.u32 %v112, 4294901760
      %v2286 = vsub.f32 %v112, %v2285
      %2287 = vmatpush1.msra.mxu0 %v2286
      %2288 = vmatprep.subr.mxu0 0.0
      %v2289 = vand.u32 %v111, 4294901760
      %v2290 = vsub.f32 %v111, %v2289
      %2291 = vmatpush1.msra.mxu0 %v2290
      %2292 = vmatprep.subr.mxu0 0.0
      %v2293 = vand.u32 %v110, 4294901760
      %v2294 = vsub.f32 %v110, %v2293
      %2295 = vmatpush1.msra.mxu0 %v2294
      %2296 = vmatprep.subr.mxu0 0.0
      %v2297 = vand.u32 %v109, 4294901760
      %v2298 = vsub.f32 %v109, %v2297
      %2299 = vmatpush1.msra.mxu0 %v2298
      %2300 = vmatprep.subr.mxu0 0.0
      %v2301 = vand.u32 %v108, 4294901760
      %v2302 = vsub.f32 %v108, %v2301
      %2303 = vmatpush1.msra.mxu0 %v2302
      %2304 = vmatprep.subr.mxu0 0.0
      %v2305 = vand.u32 %v107, 4294901760
      %v2306 = vsub.f32 %v107, %v2305
      %2307 = vmatpush1.msra.mxu0 %v2306
      %2308 = vmatprep.subr.mxu0 0.0
      %v2309 = vand.u32 %v106, 4294901760
      %v2310 = vsub.f32 %v106, %v2309
      %2311 = vmatpush1.msra.mxu0 %v2310
      %2312 = vmatprep.subr.mxu0 0.0
      %v2313 = vand.u32 %v105, 4294901760
      %v2314 = vsub.f32 %v105, %v2313
      %2315 = vmatpush1.msra.mxu0 %v2314
      %2316 = vmatprep.subr.mxu0 0.0
      %v2317 = vand.u32 %v104, 4294901760
      %v2318 = vsub.f32 %v104, %v2317
      %2319 = vmatpush1.msra.mxu0 %v2318
      %2320 = vmatprep.subr.mxu0 0.0
      %v2321 = vand.u32 %v103, 4294901760
      %v2322 = vsub.f32 %v103, %v2321
      %2323 = vmatpush1.msra.mxu0 %v2322
      %2324 = vmatprep.subr.mxu0 0.0
      %v2325 = vand.u32 %v102, 4294901760
      %v2326 = vsub.f32 %v102, %v2325
      %2327 = vmatpush1.msra.mxu0 %v2326
      %2328 = vmatprep.subr.mxu0 0.0
      %v2329 = vand.u32 %v101, 4294901760
      %v2330 = vsub.f32 %v101, %v2329
      %2331 = vmatpush1.msra.mxu0 %v2330
      %2332 = vmatprep.subr.mxu0 0.0
      %v2333 = vand.u32 %v100, 4294901760
      %v2334 = vsub.f32 %v100, %v2333
      %2335 = vmatpush1.msra.mxu0 %v2334
      %2336 = vmatprep.subr.mxu0 0.0
      %v2337 = vand.u32 %v99, 4294901760
      %v2338 = vsub.f32 %v99, %v2337
      %2339 = vmatpush1.msra.mxu0 %v2338
      %2340 = vmatprep.subr.mxu0 0.0
      %v2341 = vand.u32 %v98, 4294901760
      %v2342 = vsub.f32 %v98, %v2341
      %2343 = vmatpush1.msra.mxu0 %v2342
      %2344 = vmatprep.subr.mxu0 0.0
      %v2345 = vand.u32 %v97, 4294901760
      %v2346 = vsub.f32 %v97, %v2345
      %2347 = vmatpush1.msra.mxu0 %v2346
      %2348 = vmatprep.subr.mxu0 0.0
      %2349 = vmatpush2.msra.mxu0 0.0
      %2350 = vmatprep.subr.mxu0 0.0
      %2351 = vmatpush2.msra.mxu0 0.0
      %2352 = vmatprep.subr.mxu0 0.0
      %2353 = vmatpush2.msra.mxu0 0.0
      %2354 = vmatprep.subr.mxu0 0.0
      %2355 = vmatpush2.msra.mxu0 0.0
      %2356 = vmatprep.subr.mxu0 0.0
      %2357 = vmatpush2.msra.mxu0 0.0
      %2358 = vmatprep.subr.mxu0 0.0
      %2359 = vmatpush2.msra.mxu0 0.0
      %2360 = vmatprep.subr.mxu0 0.0
      %2361 = vmatpush2.msra.mxu0 0.0
      %2362 = vmatprep.subr.mxu0 0.0
      %2363 = vmatpush2.msra.mxu0 0.0
      %2364 = vmatprep.subr.mxu0 0.0
      %2365 = vmatpush2.msra.mxu0 0.0
      %2366 = vmatprep.subr.mxu0 0.0
      %2367 = vmatpush2.msra.mxu0 0.0
      %2368 = vmatprep.subr.mxu0 0.0
      %2369 = vmatpush2.msra.mxu0 0.0
      %2370 = vmatprep.subr.mxu0 0.0
      %2371 = vmatpush2.msra.mxu0 0.0
      %2372 = vmatprep.subr.mxu0 0.0
      %2373 = vmatpush2.msra.mxu0 0.0
      %2374 = vmatprep.subr.mxu0 0.0
      %2375 = vmatpush2.msra.mxu0 0.0
      %2376 = vmatprep.subr.mxu0 0.0
      %2377 = vmatpush2.msra.mxu0 0.0
      %2378 = vmatprep.subr.mxu0 0.0
      %2379 = vmatpush2.msra.mxu0 0.0
      %2380 = vmatprep.mubr.f32.mxu0 0.0
      %v2381 = vand.u32 %v2041, 4294901760
      %v2382 = vsub.f32 %v2041, %v2381
      %2383 = vmatmul.mubr.f32.gmra.mxu0 %v2382
      %v2384 = vpop.f32.mrf.mxu0
      %v2385 = vadd.f32 %v2281, %v2384
      %v2386 = vpop.f32.mrf.mxu0
      %2387 = vdwg.mxu0
      %2388 = vmatprep.subr.mxu0 0.0
      %v2389 = vand.u32 %v112, 4294901760
      %2390 = vmatpush1.msra.mxu0 %v2389
      %2391 = vmatprep.subr.mxu0 0.0
      %v2392 = vand.u32 %v111, 4294901760
      %2393 = vmatpush1.msra.mxu0 %v2392
      %2394 = vmatprep.subr.mxu0 0.0
      %v2395 = vand.u32 %v110, 4294901760
      %2396 = vmatpush1.msra.mxu0 %v2395
      %2397 = vmatprep.subr.mxu0 0.0
      %v2398 = vand.u32 %v109, 4294901760
      %2399 = vmatpush1.msra.mxu0 %v2398
      %2400 = vmatprep.subr.mxu0 0.0
      %v2401 = vand.u32 %v108, 4294901760
      %2402 = vmatpush1.msra.mxu0 %v2401
      %2403 = vmatprep.subr.mxu0 0.0
      %v2404 = vand.u32 %v107, 4294901760
      %2405 = vmatpush1.msra.mxu0 %v2404
      %2406 = vmatprep.subr.mxu0 0.0
      %v2407 = vand.u32 %v106, 4294901760
      %2408 = vmatpush1.msra.mxu0 %v2407
      %2409 = vmatprep.subr.mxu0 0.0
      %v2410 = vand.u32 %v105, 4294901760
      %2411 = vmatpush1.msra.mxu0 %v2410
      %2412 = vmatprep.subr.mxu0 0.0
      %v2413 = vand.u32 %v104, 4294901760
      %2414 = vmatpush1.msra.mxu0 %v2413
      %2415 = vmatprep.subr.mxu0 0.0
      %v2416 = vand.u32 %v103, 4294901760
      %2417 = vmatpush1.msra.mxu0 %v2416
      %2418 = vmatprep.subr.mxu0 0.0
      %v2419 = vand.u32 %v102, 4294901760
      %2420 = vmatpush1.msra.mxu0 %v2419
      %2421 = vmatprep.subr.mxu0 0.0
      %v2422 = vand.u32 %v101, 4294901760
      %2423 = vmatpush1.msra.mxu0 %v2422
      %2424 = vmatprep.subr.mxu0 0.0
      %v2425 = vand.u32 %v100, 4294901760
      %2426 = vmatpush1.msra.mxu0 %v2425
      %2427 = vmatprep.subr.mxu0 0.0
      %v2428 = vand.u32 %v99, 4294901760
      %2429 = vmatpush1.msra.mxu0 %v2428
      %2430 = vmatprep.subr.mxu0 0.0
      %v2431 = vand.u32 %v98, 4294901760
      %2432 = vmatpush1.msra.mxu0 %v2431
      %2433 = vmatprep.subr.mxu0 0.0
      %v2434 = vand.u32 %v97, 4294901760
      %2435 = vmatpush1.msra.mxu0 %v2434
      %2436 = vmatprep.subr.mxu0 0.0
      %2437 = vmatpush2.msra.mxu0 0.0
      %2438 = vmatprep.subr.mxu0 0.0
      %2439 = vmatpush2.msra.mxu0 0.0
      %2440 = vmatprep.subr.mxu0 0.0
      %2441 = vmatpush2.msra.mxu0 0.0
      %2442 = vmatprep.subr.mxu0 0.0
      %2443 = vmatpush2.msra.mxu0 0.0
      %2444 = vmatprep.subr.mxu0 0.0
      %2445 = vmatpush2.msra.mxu0 0.0
      %2446 = vmatprep.subr.mxu0 0.0
      %2447 = vmatpush2.msra.mxu0 0.0
      %2448 = vmatprep.subr.mxu0 0.0
      %2449 = vmatpush2.msra.mxu0 0.0
      %2450 = vmatprep.subr.mxu0 0.0
      %2451 = vmatpush2.msra.mxu0 0.0
      %2452 = vmatprep.subr.mxu0 0.0
      %2453 = vmatpush2.msra.mxu0 0.0
      %2454 = vmatprep.subr.mxu0 0.0
      %2455 = vmatpush2.msra.mxu0 0.0
      %2456 = vmatprep.subr.mxu0 0.0
      %2457 = vmatpush2.msra.mxu0 0.0
      %2458 = vmatprep.subr.mxu0 0.0
      %2459 = vmatpush2.msra.mxu0 0.0
      %2460 = vmatprep.subr.mxu0 0.0
      %2461 = vmatpush2.msra.mxu0 0.0
      %2462 = vmatprep.subr.mxu0 0.0
      %2463 = vmatpush2.msra.mxu0 0.0
      %2464 = vmatprep.subr.mxu0 0.0
      %2465 = vmatpush2.msra.mxu0 0.0
      %2466 = vmatprep.subr.mxu0 0.0
      %2467 = vmatpush2.msra.mxu0 0.0
      %2468 = vmatprep.mubr.f32.mxu0 0.0
      %v2469 = vand.u32 %v2041, 4294901760
      %v2470 = vsub.f32 %v2041, %v2469
      %v2471 = vand.u32 %v2470, 4294901760
      %2472 = vmatmul.mubr.f32.gmra.mxu0 %v2471
      %v2473 = vpop.f32.mrf.mxu0
      %v2474 = vadd.f32 %v2385, %v2473
      %v2475 = vpop.f32.mrf.mxu0
      %2476 = vdwg.mxu0
      %2477 = vmatprep.subr.mxu0 0.0
      %v2478 = vand.u32 %v112, 4294901760
      %v2479 = vsub.f32 %v112, %v2478
      %v2480 = vand.u32 %v2479, 4294901760
      %2481 = vmatpush1.msra.mxu0 %v2480
      %2482 = vmatprep.subr.mxu0 0.0
      %v2483 = vand.u32 %v111, 4294901760
      %v2484 = vsub.f32 %v111, %v2483
      %v2485 = vand.u32 %v2484, 4294901760
      %2486 = vmatpush1.msra.mxu0 %v2485
      %2487 = vmatprep.subr.mxu0 0.0
      %v2488 = vand.u32 %v110, 4294901760
      %v2489 = vsub.f32 %v110, %v2488
      %v2490 = vand.u32 %v2489, 4294901760
      %2491 = vmatpush1.msra.mxu0 %v2490
      %2492 = vmatprep.subr.mxu0 0.0
      %v2493 = vand.u32 %v109, 4294901760
      %v2494 = vsub.f32 %v109, %v2493
      %v2495 = vand.u32 %v2494, 4294901760
      %2496 = vmatpush1.msra.mxu0 %v2495
      %2497 = vmatprep.subr.mxu0 0.0
      %v2498 = vand.u32 %v108, 4294901760
      %v2499 = vsub.f32 %v108, %v2498
      %v2500 = vand.u32 %v2499, 4294901760
      %2501 = vmatpush1.msra.mxu0 %v2500
      %2502 = vmatprep.subr.mxu0 0.0
      %v2503 = vand.u32 %v107, 4294901760
      %v2504 = vsub.f32 %v107, %v2503
      %v2505 = vand.u32 %v2504, 4294901760
      %2506 = vmatpush1.msra.mxu0 %v2505
      %2507 = vmatprep.subr.mxu0 0.0
      %v2508 = vand.u32 %v106, 4294901760
      %v2509 = vsub.f32 %v106, %v2508
      %v2510 = vand.u32 %v2509, 4294901760
      %2511 = vmatpush1.msra.mxu0 %v2510
      %2512 = vmatprep.subr.mxu0 0.0
      %v2513 = vand.u32 %v105, 4294901760
      %v2514 = vsub.f32 %v105, %v2513
      %v2515 = vand.u32 %v2514, 4294901760
      %2516 = vmatpush1.msra.mxu0 %v2515
      %2517 = vmatprep.subr.mxu0 0.0
      %v2518 = vand.u32 %v104, 4294901760
      %v2519 = vsub.f32 %v104, %v2518
      %v2520 = vand.u32 %v2519, 4294901760
      %2521 = vmatpush1.msra.mxu0 %v2520
      %2522 = vmatprep.subr.mxu0 0.0
      %v2523 = vand.u32 %v103, 4294901760
      %v2524 = vsub.f32 %v103, %v2523
      %v2525 = vand.u32 %v2524, 4294901760
      %2526 = vmatpush1.msra.mxu0 %v2525
      %2527 = vmatprep.subr.mxu0 0.0
      %v2528 = vand.u32 %v102, 4294901760
      %v2529 = vsub.f32 %v102, %v2528
      %v2530 = vand.u32 %v2529, 4294901760
      %2531 = vmatpush1.msra.mxu0 %v2530
      %2532 = vmatprep.subr.mxu0 0.0
      %v2533 = vand.u32 %v101, 4294901760
      %v2534 = vsub.f32 %v101, %v2533
      %v2535 = vand.u32 %v2534, 4294901760
      %2536 = vmatpush1.msra.mxu0 %v2535
      %2537 = vmatprep.subr.mxu0 0.0
      %v2538 = vand.u32 %v100, 4294901760
      %v2539 = vsub.f32 %v100, %v2538
      %v2540 = vand.u32 %v2539, 4294901760
      %2541 = vmatpush1.msra.mxu0 %v2540
      %2542 = vmatprep.subr.mxu0 0.0
      %v2543 = vand.u32 %v99, 4294901760
      %v2544 = vsub.f32 %v99, %v2543
      %v2545 = vand.u32 %v2544, 4294901760
      %2546 = vmatpush1.msra.mxu0 %v2545
      %2547 = vmatprep.subr.mxu0 0.0
      %v2548 = vand.u32 %v98, 4294901760
      %v2549 = vsub.f32 %v98, %v2548
      %v2550 = vand.u32 %v2549, 4294901760
      %2551 = vmatpush1.msra.mxu0 %v2550
      %2552 = vmatprep.subr.mxu0 0.0
      %v2553 = vand.u32 %v97, 4294901760
      %v2554 = vsub.f32 %v97, %v2553
      %v2555 = vand.u32 %v2554, 4294901760
      %2556 = vmatpush1.msra.mxu0 %v2555
      %2557 = vmatprep.subr.mxu0 0.0
      %2558 = vmatpush2.msra.mxu0 0.0
      %2559 = vmatprep.subr.mxu0 0.0
      %2560 = vmatpush2.msra.mxu0 0.0
      %2561 = vmatprep.subr.mxu0 0.0
      %2562 = vmatpush2.msra.mxu0 0.0
      %2563 = vmatprep.subr.mxu0 0.0
      %2564 = vmatpush2.msra.mxu0 0.0
      %2565 = vmatprep.subr.mxu0 0.0
      %2566 = vmatpush2.msra.mxu0 0.0
      %2567 = vmatprep.subr.mxu0 0.0
      %2568 = vmatpush2.msra.mxu0 0.0
      %2569 = vmatprep.subr.mxu0 0.0
      %2570 = vmatpush2.msra.mxu0 0.0
      %2571 = vmatprep.subr.mxu0 0.0
      %2572 = vmatpush2.msra.mxu0 0.0
      %2573 = vmatprep.subr.mxu0 0.0
      %2574 = vmatpush2.msra.mxu0 0.0
      %2575 = vmatprep.subr.mxu0 0.0
      %2576 = vmatpush2.msra.mxu0 0.0
      %2577 = vmatprep.subr.mxu0 0.0
      %2578 = vmatpush2.msra.mxu0 0.0
      %2579 = vmatprep.subr.mxu0 0.0
      %2580 = vmatpush2.msra.mxu0 0.0
      %2581 = vmatprep.subr.mxu0 0.0
      %2582 = vmatpush2.msra.mxu0 0.0
      %2583 = vmatprep.subr.mxu0 0.0
      %2584 = vmatpush2.msra.mxu0 0.0
      %2585 = vmatprep.subr.mxu0 0.0
      %2586 = vmatpush2.msra.mxu0 0.0
      %2587 = vmatprep.subr.mxu0 0.0
      %2588 = vmatpush2.msra.mxu0 0.0
      %2589 = vmatprep.mubr.f32.mxu0 0.0
      %v2590 = vand.u32 %v2041, 4294901760
      %2591 = vmatmul.mubr.f32.gmra.mxu0 %v2590
      %v2592 = vpop.f32.mrf.mxu0
      %v2593 = vadd.f32 %v2474, %v2592
      %v2594 = vpop.f32.mrf.mxu0
      %2595 = vdwg.mxu0
      %2596 = vmatprep.subr.mxu0 0.0
      %v2597 = vand.u32 %v112, 4294901760
      %2598 = vmatpush1.msra.mxu0 %v2597
      %2599 = vmatprep.subr.mxu0 0.0
      %v2600 = vand.u32 %v111, 4294901760
      %2601 = vmatpush1.msra.mxu0 %v2600
      %2602 = vmatprep.subr.mxu0 0.0
      %v2603 = vand.u32 %v110, 4294901760
      %2604 = vmatpush1.msra.mxu0 %v2603
      %2605 = vmatprep.subr.mxu0 0.0
      %v2606 = vand.u32 %v109, 4294901760
      %2607 = vmatpush1.msra.mxu0 %v2606
      %2608 = vmatprep.subr.mxu0 0.0
      %v2609 = vand.u32 %v108, 4294901760
      %2610 = vmatpush1.msra.mxu0 %v2609
      %2611 = vmatprep.subr.mxu0 0.0
      %v2612 = vand.u32 %v107, 4294901760
      %2613 = vmatpush1.msra.mxu0 %v2612
      %2614 = vmatprep.subr.mxu0 0.0
      %v2615 = vand.u32 %v106, 4294901760
      %2616 = vmatpush1.msra.mxu0 %v2615
      %2617 = vmatprep.subr.mxu0 0.0
      %v2618 = vand.u32 %v105, 4294901760
      %2619 = vmatpush1.msra.mxu0 %v2618
      %2620 = vmatprep.subr.mxu0 0.0
      %v2621 = vand.u32 %v104, 4294901760
      %2622 = vmatpush1.msra.mxu0 %v2621
      %2623 = vmatprep.subr.mxu0 0.0
      %v2624 = vand.u32 %v103, 4294901760
      %2625 = vmatpush1.msra.mxu0 %v2624
      %2626 = vmatprep.subr.mxu0 0.0
      %v2627 = vand.u32 %v102, 4294901760
      %2628 = vmatpush1.msra.mxu0 %v2627
      %2629 = vmatprep.subr.mxu0 0.0
      %v2630 = vand.u32 %v101, 4294901760
      %2631 = vmatpush1.msra.mxu0 %v2630
      %2632 = vmatprep.subr.mxu0 0.0
      %v2633 = vand.u32 %v100, 4294901760
      %2634 = vmatpush1.msra.mxu0 %v2633
      %2635 = vmatprep.subr.mxu0 0.0
      %v2636 = vand.u32 %v99, 4294901760
      %2637 = vmatpush1.msra.mxu0 %v2636
      %2638 = vmatprep.subr.mxu0 0.0
      %v2639 = vand.u32 %v98, 4294901760
      %2640 = vmatpush1.msra.mxu0 %v2639
      %2641 = vmatprep.subr.mxu0 0.0
      %v2642 = vand.u32 %v97, 4294901760
      %2643 = vmatpush1.msra.mxu0 %v2642
      %2644 = vmatprep.subr.mxu0 0.0
      %2645 = vmatpush2.msra.mxu0 0.0
      %2646 = vmatprep.subr.mxu0 0.0
      %2647 = vmatpush2.msra.mxu0 0.0
      %2648 = vmatprep.subr.mxu0 0.0
      %2649 = vmatpush2.msra.mxu0 0.0
      %2650 = vmatprep.subr.mxu0 0.0
      %2651 = vmatpush2.msra.mxu0 0.0
      %2652 = vmatprep.subr.mxu0 0.0
      %2653 = vmatpush2.msra.mxu0 0.0
      %2654 = vmatprep.subr.mxu0 0.0
      %2655 = vmatpush2.msra.mxu0 0.0
      %2656 = vmatprep.subr.mxu0 0.0
      %2657 = vmatpush2.msra.mxu0 0.0
      %2658 = vmatprep.subr.mxu0 0.0
      %2659 = vmatpush2.msra.mxu0 0.0
      %2660 = vmatprep.subr.mxu0 0.0
      %2661 = vmatpush2.msra.mxu0 0.0
      %2662 = vmatprep.subr.mxu0 0.0
      %2663 = vmatpush2.msra.mxu0 0.0
      %2664 = vmatprep.subr.mxu0 0.0
      %2665 = vmatpush2.msra.mxu0 0.0
      %2666 = vmatprep.subr.mxu0 0.0
      %2667 = vmatpush2.msra.mxu0 0.0
      %2668 = vmatprep.subr.mxu0 0.0
      %2669 = vmatpush2.msra.mxu0 0.0
      %2670 = vmatprep.subr.mxu0 0.0
      %2671 = vmatpush2.msra.mxu0 0.0
      %2672 = vmatprep.subr.mxu0 0.0
      %2673 = vmatpush2.msra.mxu0 0.0
      %2674 = vmatprep.subr.mxu0 0.0
      %2675 = vmatpush2.msra.mxu0 0.0
      %2676 = vmatprep.mubr.f32.mxu0 0.0
      %v2677 = vand.u32 %v2041, 4294901760
      %2678 = vmatmul.mubr.f32.gmra.mxu0 %v2677
      %v2679 = vpop.f32.mrf.mxu0
      %v2680 = vadd.f32 %v2593, %v2679
      %v2681 = vpop.f32.mrf.mxu0
      %2682 = vdwg.mxu0
      %v2683 = vmul.f32 %v2680, 0.9
      %v2684 = vadd.f32 %v2683, 0.00078125
      %2685 = vmatprep.subr.mxu0 0.0
      %v2686 = vand.u32 %v112, 4294901760
      %2687 = vmatpush1.msra.mxu0 %v2686
      %2688 = vmatprep.subr.mxu0 0.0
      %v2689 = vand.u32 %v111, 4294901760
      %2690 = vmatpush1.msra.mxu0 %v2689
      %2691 = vmatprep.subr.mxu0 0.0
      %v2692 = vand.u32 %v110, 4294901760
      %2693 = vmatpush1.msra.mxu0 %v2692
      %2694 = vmatprep.subr.mxu0 0.0
      %v2695 = vand.u32 %v109, 4294901760
      %2696 = vmatpush1.msra.mxu0 %v2695
      %2697 = vmatprep.subr.mxu0 0.0
      %v2698 = vand.u32 %v108, 4294901760
      %2699 = vmatpush1.msra.mxu0 %v2698
      %2700 = vmatprep.subr.mxu0 0.0
      %v2701 = vand.u32 %v107, 4294901760
      %2702 = vmatpush1.msra.mxu0 %v2701
      %2703 = vmatprep.subr.mxu0 0.0
      %v2704 = vand.u32 %v106, 4294901760
      %2705 = vmatpush1.msra.mxu0 %v2704
      %2706 = vmatprep.subr.mxu0 0.0
      %v2707 = vand.u32 %v105, 4294901760
      %2708 = vmatpush1.msra.mxu0 %v2707
      %2709 = vmatprep.subr.mxu0 0.0
      %v2710 = vand.u32 %v104, 4294901760
      %2711 = vmatpush1.msra.mxu0 %v2710
      %2712 = vmatprep.subr.mxu0 0.0
      %v2713 = vand.u32 %v103, 4294901760
      %2714 = vmatpush1.msra.mxu0 %v2713
      %2715 = vmatprep.subr.mxu0 0.0
      %v2716 = vand.u32 %v102, 4294901760
      %2717 = vmatpush1.msra.mxu0 %v2716
      %2718 = vmatprep.subr.mxu0 0.0
      %v2719 = vand.u32 %v101, 4294901760
      %2720 = vmatpush1.msra.mxu0 %v2719
      %2721 = vmatprep.subr.mxu0 0.0
      %v2722 = vand.u32 %v100, 4294901760
      %2723 = vmatpush1.msra.mxu0 %v2722
      %2724 = vmatprep.subr.mxu0 0.0
      %v2725 = vand.u32 %v99, 4294901760
      %2726 = vmatpush1.msra.mxu0 %v2725
      %2727 = vmatprep.subr.mxu0 0.0
      %v2728 = vand.u32 %v98, 4294901760
      %2729 = vmatpush1.msra.mxu0 %v2728
      %2730 = vmatprep.subr.mxu0 0.0
      %v2731 = vand.u32 %v97, 4294901760
      %2732 = vmatpush1.msra.mxu0 %v2731
      %2733 = vmatprep.subr.mxu0 0.0
      %2734 = vmatpush2.msra.mxu0 0.0
      %2735 = vmatprep.subr.mxu0 0.0
      %2736 = vmatpush2.msra.mxu0 0.0
      %2737 = vmatprep.subr.mxu0 0.0
      %2738 = vmatpush2.msra.mxu0 0.0
      %2739 = vmatprep.subr.mxu0 0.0
      %2740 = vmatpush2.msra.mxu0 0.0
      %2741 = vmatprep.subr.mxu0 0.0
      %2742 = vmatpush2.msra.mxu0 0.0
      %2743 = vmatprep.subr.mxu0 0.0
      %2744 = vmatpush2.msra.mxu0 0.0
      %2745 = vmatprep.subr.mxu0 0.0
      %2746 = vmatpush2.msra.mxu0 0.0
      %2747 = vmatprep.subr.mxu0 0.0
      %2748 = vmatpush2.msra.mxu0 0.0
      %2749 = vmatprep.subr.mxu0 0.0
      %2750 = vmatpush2.msra.mxu0 0.0
      %2751 = vmatprep.subr.mxu0 0.0
      %2752 = vmatpush2.msra.mxu0 0.0
      %2753 = vmatprep.subr.mxu0 0.0
      %2754 = vmatpush2.msra.mxu0 0.0
      %2755 = vmatprep.subr.mxu0 0.0
      %2756 = vmatpush2.msra.mxu0 0.0
      %2757 = vmatprep.subr.mxu0 0.0
      %2758 = vmatpush2.msra.mxu0 0.0
      %2759 = vmatprep.subr.mxu0 0.0
      %2760 = vmatpush2.msra.mxu0 0.0
      %2761 = vmatprep.subr.mxu0 0.0
      %2762 = vmatpush2.msra.mxu0 0.0
      %2763 = vmatprep.subr.mxu0 0.0
      %2764 = vmatpush2.msra.mxu0 0.0
      %2765 = vmatprep.mubr.f32.mxu0 0.0
      %v2766 = vand.u32 %v2684, 4294901760
      %v2767 = vsub.f32 %v2684, %v2766
      %v2768 = vand.u32 %v2767, 4294901760
      %v2769 = vsub.f32 %v2767, %v2768
      %v2770 = vand.u32 %v2769, 4294901760
      %2771 = vmatmul.mubr.f32.gmra.mxu0 %v2770
      %v2772 = vpop.f32.mrf.mxu0
      %v2773 = vadd.f32 0.0, %v2772
      %v2774 = vpop.f32.mrf.mxu0
      %2775 = vdwg.mxu0
      %2776 = vmatprep.subr.mxu0 0.0
      %v2777 = vand.u32 %v112, 4294901760
      %v2778 = vsub.f32 %v112, %v2777
      %v2779 = vand.u32 %v2778, 4294901760
      %v2780 = vsub.f32 %v2778, %v2779
      %v2781 = vand.u32 %v2780, 4294901760
      %2782 = vmatpush1.msra.mxu0 %v2781
      %2783 = vmatprep.subr.mxu0 0.0
      %v2784 = vand.u32 %v111, 4294901760
      %v2785 = vsub.f32 %v111, %v2784
      %v2786 = vand.u32 %v2785, 4294901760
      %v2787 = vsub.f32 %v2785, %v2786
      %v2788 = vand.u32 %v2787, 4294901760
      %2789 = vmatpush1.msra.mxu0 %v2788
      %2790 = vmatprep.subr.mxu0 0.0
      %v2791 = vand.u32 %v110, 4294901760
      %v2792 = vsub.f32 %v110, %v2791
      %v2793 = vand.u32 %v2792, 4294901760
      %v2794 = vsub.f32 %v2792, %v2793
      %v2795 = vand.u32 %v2794, 4294901760
      %2796 = vmatpush1.msra.mxu0 %v2795
      %2797 = vmatprep.subr.mxu0 0.0
      %v2798 = vand.u32 %v109, 4294901760
      %v2799 = vsub.f32 %v109, %v2798
      %v2800 = vand.u32 %v2799, 4294901760
      %v2801 = vsub.f32 %v2799, %v2800
      %v2802 = vand.u32 %v2801, 4294901760
      %2803 = vmatpush1.msra.mxu0 %v2802
      %2804 = vmatprep.subr.mxu0 0.0
      %v2805 = vand.u32 %v108, 4294901760
      %v2806 = vsub.f32 %v108, %v2805
      %v2807 = vand.u32 %v2806, 4294901760
      %v2808 = vsub.f32 %v2806, %v2807
      %v2809 = vand.u32 %v2808, 4294901760
      %2810 = vmatpush1.msra.mxu0 %v2809
      %2811 = vmatprep.subr.mxu0 0.0
      %v2812 = vand.u32 %v107, 4294901760
      %v2813 = vsub.f32 %v107, %v2812
      %v2814 = vand.u32 %v2813, 4294901760
      %v2815 = vsub.f32 %v2813, %v2814
      %v2816 = vand.u32 %v2815, 4294901760
      %2817 = vmatpush1.msra.mxu0 %v2816
      %2818 = vmatprep.subr.mxu0 0.0
      %v2819 = vand.u32 %v106, 4294901760
      %v2820 = vsub.f32 %v106, %v2819
      %v2821 = vand.u32 %v2820, 4294901760
      %v2822 = vsub.f32 %v2820, %v2821
      %v2823 = vand.u32 %v2822, 4294901760
      %2824 = vmatpush1.msra.mxu0 %v2823
      %2825 = vmatprep.subr.mxu0 0.0
      %v2826 = vand.u32 %v105, 4294901760
      %v2827 = vsub.f32 %v105, %v2826
      %v2828 = vand.u32 %v2827, 4294901760
      %v2829 = vsub.f32 %v2827, %v2828
      %v2830 = vand.u32 %v2829, 4294901760
      %2831 = vmatpush1.msra.mxu0 %v2830
      %2832 = vmatprep.subr.mxu0 0.0
      %v2833 = vand.u32 %v104, 4294901760
      %v2834 = vsub.f32 %v104, %v2833
      %v2835 = vand.u32 %v2834, 4294901760
      %v2836 = vsub.f32 %v2834, %v2835
      %v2837 = vand.u32 %v2836, 4294901760
      %2838 = vmatpush1.msra.mxu0 %v2837
      %2839 = vmatprep.subr.mxu0 0.0
      %v2840 = vand.u32 %v103, 4294901760
      %v2841 = vsub.f32 %v103, %v2840
      %v2842 = vand.u32 %v2841, 4294901760
      %v2843 = vsub.f32 %v2841, %v2842
      %v2844 = vand.u32 %v2843, 4294901760
      %2845 = vmatpush1.msra.mxu0 %v2844
      %2846 = vmatprep.subr.mxu0 0.0
      %v2847 = vand.u32 %v102, 4294901760
      %v2848 = vsub.f32 %v102, %v2847
      %v2849 = vand.u32 %v2848, 4294901760
      %v2850 = vsub.f32 %v2848, %v2849
      %v2851 = vand.u32 %v2850, 4294901760
      %2852 = vmatpush1.msra.mxu0 %v2851
      %2853 = vmatprep.subr.mxu0 0.0
      %v2854 = vand.u32 %v101, 4294901760
      %v2855 = vsub.f32 %v101, %v2854
      %v2856 = vand.u32 %v2855, 4294901760
      %v2857 = vsub.f32 %v2855, %v2856
      %v2858 = vand.u32 %v2857, 4294901760
      %2859 = vmatpush1.msra.mxu0 %v2858
      %2860 = vmatprep.subr.mxu0 0.0
      %v2861 = vand.u32 %v100, 4294901760
      %v2862 = vsub.f32 %v100, %v2861
      %v2863 = vand.u32 %v2862, 4294901760
      %v2864 = vsub.f32 %v2862, %v2863
      %v2865 = vand.u32 %v2864, 4294901760
      %2866 = vmatpush1.msra.mxu0 %v2865
      %2867 = vmatprep.subr.mxu0 0.0
      %v2868 = vand.u32 %v99, 4294901760
      %v2869 = vsub.f32 %v99, %v2868
      %v2870 = vand.u32 %v2869, 4294901760
      %v2871 = vsub.f32 %v2869, %v2870
      %v2872 = vand.u32 %v2871, 4294901760
      %2873 = vmatpush1.msra.mxu0 %v2872
      %2874 = vmatprep.subr.mxu0 0.0
      %v2875 = vand.u32 %v98, 4294901760
      %v2876 = vsub.f32 %v98, %v2875
      %v2877 = vand.u32 %v2876, 4294901760
      %v2878 = vsub.f32 %v2876, %v2877
      %v2879 = vand.u32 %v2878, 4294901760
      %2880 = vmatpush1.msra.mxu0 %v2879
      %2881 = vmatprep.subr.mxu0 0.0
      %v2882 = vand.u32 %v97, 4294901760
      %v2883 = vsub.f32 %v97, %v2882
      %v2884 = vand.u32 %v2883, 4294901760
      %v2885 = vsub.f32 %v2883, %v2884
      %v2886 = vand.u32 %v2885, 4294901760
      %2887 = vmatpush1.msra.mxu0 %v2886
      %2888 = vmatprep.subr.mxu0 0.0
      %2889 = vmatpush2.msra.mxu0 0.0
      %2890 = vmatprep.subr.mxu0 0.0
      %2891 = vmatpush2.msra.mxu0 0.0
      %2892 = vmatprep.subr.mxu0 0.0
      %2893 = vmatpush2.msra.mxu0 0.0
      %2894 = vmatprep.subr.mxu0 0.0
      %2895 = vmatpush2.msra.mxu0 0.0
      %2896 = vmatprep.subr.mxu0 0.0
      %2897 = vmatpush2.msra.mxu0 0.0
      %2898 = vmatprep.subr.mxu0 0.0
      %2899 = vmatpush2.msra.mxu0 0.0
      %2900 = vmatprep.subr.mxu0 0.0
      %2901 = vmatpush2.msra.mxu0 0.0
      %2902 = vmatprep.subr.mxu0 0.0
      %2903 = vmatpush2.msra.mxu0 0.0
      %2904 = vmatprep.subr.mxu0 0.0
      %2905 = vmatpush2.msra.mxu0 0.0
      %2906 = vmatprep.subr.mxu0 0.0
      %2907 = vmatpush2.msra.mxu0 0.0
      %2908 = vmatprep.subr.mxu0 0.0
      %2909 = vmatpush2.msra.mxu0 0.0
      %2910 = vmatprep.subr.mxu0 0.0
      %2911 = vmatpush2.msra.mxu0 0.0
      %2912 = vmatprep.subr.mxu0 0.0
      %2913 = vmatpush2.msra.mxu0 0.0
      %2914 = vmatprep.subr.mxu0 0.0
      %2915 = vmatpush2.msra.mxu0 0.0
      %2916 = vmatprep.subr.mxu0 0.0
      %2917 = vmatpush2.msra.mxu0 0.0
      %2918 = vmatprep.subr.mxu0 0.0
      %2919 = vmatpush2.msra.mxu0 0.0
      %2920 = vmatprep.mubr.f32.mxu0 0.0
      %v2921 = vand.u32 %v2684, 4294901760
      %2922 = vmatmul.mubr.f32.gmra.mxu0 %v2921
      %v2923 = vpop.f32.mrf.mxu0
      %v2924 = vadd.f32 %v2773, %v2923
      %v2925 = vpop.f32.mrf.mxu0
      %2926 = vdwg.mxu0
      %2927 = vmatprep.subr.mxu0 0.0
      %v2928 = vand.u32 %v112, 4294901760
      %v2929 = vsub.f32 %v112, %v2928
      %2930 = vmatpush1.msra.mxu0 %v2929
      %2931 = vmatprep.subr.mxu0 0.0
      %v2932 = vand.u32 %v111, 4294901760
      %v2933 = vsub.f32 %v111, %v2932
      %2934 = vmatpush1.msra.mxu0 %v2933
      %2935 = vmatprep.subr.mxu0 0.0
      %v2936 = vand.u32 %v110, 4294901760
      %v2937 = vsub.f32 %v110, %v2936
      %2938 = vmatpush1.msra.mxu0 %v2937
      %2939 = vmatprep.subr.mxu0 0.0
      %v2940 = vand.u32 %v109, 4294901760
      %v2941 = vsub.f32 %v109, %v2940
      %2942 = vmatpush1.msra.mxu0 %v2941
      %2943 = vmatprep.subr.mxu0 0.0
      %v2944 = vand.u32 %v108, 4294901760
      %v2945 = vsub.f32 %v108, %v2944
      %2946 = vmatpush1.msra.mxu0 %v2945
      %2947 = vmatprep.subr.mxu0 0.0
      %v2948 = vand.u32 %v107, 4294901760
      %v2949 = vsub.f32 %v107, %v2948
      %2950 = vmatpush1.msra.mxu0 %v2949
      %2951 = vmatprep.subr.mxu0 0.0
      %v2952 = vand.u32 %v106, 4294901760
      %v2953 = vsub.f32 %v106, %v2952
      %2954 = vmatpush1.msra.mxu0 %v2953
      %2955 = vmatprep.subr.mxu0 0.0
      %v2956 = vand.u32 %v105, 4294901760
      %v2957 = vsub.f32 %v105, %v2956
      %2958 = vmatpush1.msra.mxu0 %v2957
      %2959 = vmatprep.subr.mxu0 0.0
      %v2960 = vand.u32 %v104, 4294901760
      %v2961 = vsub.f32 %v104, %v2960
      %2962 = vmatpush1.msra.mxu0 %v2961
      %2963 = vmatprep.subr.mxu0 0.0
      %v2964 = vand.u32 %v103, 4294901760
      %v2965 = vsub.f32 %v103, %v2964
      %2966 = vmatpush1.msra.mxu0 %v2965
      %2967 = vmatprep.subr.mxu0 0.0
      %v2968 = vand.u32 %v102, 4294901760
      %v2969 = vsub.f32 %v102, %v2968
      %2970 = vmatpush1.msra.mxu0 %v2969
      %2971 = vmatprep.subr.mxu0 0.0
      %v2972 = vand.u32 %v101, 4294901760
      %v2973 = vsub.f32 %v101, %v2972
      %2974 = vmatpush1.msra.mxu0 %v2973
      %2975 = vmatprep.subr.mxu0 0.0
      %v2976 = vand.u32 %v100, 4294901760
      %v2977 = vsub.f32 %v100, %v2976
      %2978 = vmatpush1.msra.mxu0 %v2977
      %2979 = vmatprep.subr.mxu0 0.0
      %v2980 = vand.u32 %v99, 4294901760
      %v2981 = vsub.f32 %v99, %v2980
      %2982 = vmatpush1.msra.mxu0 %v2981
      %2983 = vmatprep.subr.mxu0 0.0
      %v2984 = vand.u32 %v98, 4294901760
      %v2985 = vsub.f32 %v98, %v2984
      %2986 = vmatpush1.msra.mxu0 %v2985
      %2987 = vmatprep.subr.mxu0 0.0
      %v2988 = vand.u32 %v97, 4294901760
      %v2989 = vsub.f32 %v97, %v2988
      %2990 = vmatpush1.msra.mxu0 %v2989
      %2991 = vmatprep.subr.mxu0 0.0
      %2992 = vmatpush2.msra.mxu0 0.0
      %2993 = vmatprep.subr.mxu0 0.0
      %2994 = vmatpush2.msra.mxu0 0.0
      %2995 = vmatprep.subr.mxu0 0.0
      %2996 = vmatpush2.msra.mxu0 0.0
      %2997 = vmatprep.subr.mxu0 0.0
      %2998 = vmatpush2.msra.mxu0 0.0
      %2999 = vmatprep.subr.mxu0 0.0
      %3000 = vmatpush2.msra.mxu0 0.0
      %3001 = vmatprep.subr.mxu0 0.0
      %3002 = vmatpush2.msra.mxu0 0.0
      %3003 = vmatprep.subr.mxu0 0.0
      %3004 = vmatpush2.msra.mxu0 0.0
      %3005 = vmatprep.subr.mxu0 0.0
      %3006 = vmatpush2.msra.mxu0 0.0
      %3007 = vmatprep.subr.mxu0 0.0
      %3008 = vmatpush2.msra.mxu0 0.0
      %3009 = vmatprep.subr.mxu0 0.0
      %3010 = vmatpush2.msra.mxu0 0.0
      %3011 = vmatprep.subr.mxu0 0.0
      %3012 = vmatpush2.msra.mxu0 0.0
      %3013 = vmatprep.subr.mxu0 0.0
      %3014 = vmatpush2.msra.mxu0 0.0
      %3015 = vmatprep.subr.mxu0 0.0
      %3016 = vmatpush2.msra.mxu0 0.0
      %3017 = vmatprep.subr.mxu0 0.0
      %3018 = vmatpush2.msra.mxu0 0.0
      %3019 = vmatprep.subr.mxu0 0.0
      %3020 = vmatpush2.msra.mxu0 0.0
      %3021 = vmatprep.subr.mxu0 0.0
      %3022 = vmatpush2.msra.mxu0 0.0
      %3023 = vmatprep.mubr.f32.mxu0 0.0
      %v3024 = vand.u32 %v2684, 4294901760
      %v3025 = vsub.f32 %v2684, %v3024
      %3026 = vmatmul.mubr.f32.gmra.mxu0 %v3025
      %v3027 = vpop.f32.mrf.mxu0
      %v3028 = vadd.f32 %v2924, %v3027
      %v3029 = vpop.f32.mrf.mxu0
      %3030 = vdwg.mxu0
      %3031 = vmatprep.subr.mxu0 0.0
      %v3032 = vand.u32 %v112, 4294901760
      %3033 = vmatpush1.msra.mxu0 %v3032
      %3034 = vmatprep.subr.mxu0 0.0
      %v3035 = vand.u32 %v111, 4294901760
      %3036 = vmatpush1.msra.mxu0 %v3035
      %3037 = vmatprep.subr.mxu0 0.0
      %v3038 = vand.u32 %v110, 4294901760
      %3039 = vmatpush1.msra.mxu0 %v3038
      %3040 = vmatprep.subr.mxu0 0.0
      %v3041 = vand.u32 %v109, 4294901760
      %3042 = vmatpush1.msra.mxu0 %v3041
      %3043 = vmatprep.subr.mxu0 0.0
      %v3044 = vand.u32 %v108, 4294901760
      %3045 = vmatpush1.msra.mxu0 %v3044
      %3046 = vmatprep.subr.mxu0 0.0
      %v3047 = vand.u32 %v107, 4294901760
      %3048 = vmatpush1.msra.mxu0 %v3047
      %3049 = vmatprep.subr.mxu0 0.0
      %v3050 = vand.u32 %v106, 4294901760
      %3051 = vmatpush1.msra.mxu0 %v3050
      %3052 = vmatprep.subr.mxu0 0.0
      %v3053 = vand.u32 %v105, 4294901760
      %3054 = vmatpush1.msra.mxu0 %v3053
      %3055 = vmatprep.subr.mxu0 0.0
      %v3056 = vand.u32 %v104, 4294901760
      %3057 = vmatpush1.msra.mxu0 %v3056
      %3058 = vmatprep.subr.mxu0 0.0
      %v3059 = vand.u32 %v103, 4294901760
      %3060 = vmatpush1.msra.mxu0 %v3059
      %3061 = vmatprep.subr.mxu0 0.0
      %v3062 = vand.u32 %v102, 4294901760
      %3063 = vmatpush1.msra.mxu0 %v3062
      %3064 = vmatprep.subr.mxu0 0.0
      %v3065 = vand.u32 %v101, 4294901760
      %3066 = vmatpush1.msra.mxu0 %v3065
      %3067 = vmatprep.subr.mxu0 0.0
      %v3068 = vand.u32 %v100, 4294901760
      %3069 = vmatpush1.msra.mxu0 %v3068
      %3070 = vmatprep.subr.mxu0 0.0
      %v3071 = vand.u32 %v99, 4294901760
      %3072 = vmatpush1.msra.mxu0 %v3071
      %3073 = vmatprep.subr.mxu0 0.0
      %v3074 = vand.u32 %v98, 4294901760
      %3075 = vmatpush1.msra.mxu0 %v3074
      %3076 = vmatprep.subr.mxu0 0.0
      %v3077 = vand.u32 %v97, 4294901760
      %3078 = vmatpush1.msra.mxu0 %v3077
      %3079 = vmatprep.subr.mxu0 0.0
      %3080 = vmatpush2.msra.mxu0 0.0
      %3081 = vmatprep.subr.mxu0 0.0
      %3082 = vmatpush2.msra.mxu0 0.0
      %3083 = vmatprep.subr.mxu0 0.0
      %3084 = vmatpush2.msra.mxu0 0.0
      %3085 = vmatprep.subr.mxu0 0.0
      %3086 = vmatpush2.msra.mxu0 0.0
      %3087 = vmatprep.subr.mxu0 0.0
      %3088 = vmatpush2.msra.mxu0 0.0
      %3089 = vmatprep.subr.mxu0 0.0
      %3090 = vmatpush2.msra.mxu0 0.0
      %3091 = vmatprep.subr.mxu0 0.0
      %3092 = vmatpush2.msra.mxu0 0.0
      %3093 = vmatprep.subr.mxu0 0.0
      %3094 = vmatpush2.msra.mxu0 0.0
      %3095 = vmatprep.subr.mxu0 0.0
      %3096 = vmatpush2.msra.mxu0 0.0
      %3097 = vmatprep.subr.mxu0 0.0
      %3098 = vmatpush2.msra.mxu0 0.0
      %3099 = vmatprep.subr.mxu0 0.0
      %3100 = vmatpush2.msra.mxu0 0.0
      %3101 = vmatprep.subr.mxu0 0.0
      %3102 = vmatpush2.msra.mxu0 0.0
      %3103 = vmatprep.subr.mxu0 0.0
      %3104 = vmatpush2.msra.mxu0 0.0
      %3105 = vmatprep.subr.mxu0 0.0
      %3106 = vmatpush2.msra.mxu0 0.0
      %3107 = vmatprep.subr.mxu0 0.0
      %3108 = vmatpush2.msra.mxu0 0.0
      %3109 = vmatprep.subr.mxu0 0.0
      %3110 = vmatpush2.msra.mxu0 0.0
      %3111 = vmatprep.mubr.f32.mxu0 0.0
      %v3112 = vand.u32 %v2684, 4294901760
      %v3113 = vsub.f32 %v2684, %v3112
      %v3114 = vand.u32 %v3113, 4294901760
      %3115 = vmatmul.mubr.f32.gmra.mxu0 %v3114
      %v3116 = vpop.f32.mrf.mxu0
      %v3117 = vadd.f32 %v3028, %v3116
      %v3118 = vpop.f32.mrf.mxu0
      %3119 = vdwg.mxu0
      %3120 = vmatprep.subr.mxu0 0.0
      %v3121 = vand.u32 %v112, 4294901760
      %v3122 = vsub.f32 %v112, %v3121
      %v3123 = vand.u32 %v3122, 4294901760
      %3124 = vmatpush1.msra.mxu0 %v3123
      %3125 = vmatprep.subr.mxu0 0.0
      %v3126 = vand.u32 %v111, 4294901760
      %v3127 = vsub.f32 %v111, %v3126
      %v3128 = vand.u32 %v3127, 4294901760
      %3129 = vmatpush1.msra.mxu0 %v3128
      %3130 = vmatprep.subr.mxu0 0.0
      %v3131 = vand.u32 %v110, 4294901760
      %v3132 = vsub.f32 %v110, %v3131
      %v3133 = vand.u32 %v3132, 4294901760
      %3134 = vmatpush1.msra.mxu0 %v3133
      %3135 = vmatprep.subr.mxu0 0.0
      %v3136 = vand.u32 %v109, 4294901760
      %v3137 = vsub.f32 %v109, %v3136
      %v3138 = vand.u32 %v3137, 4294901760
      %3139 = vmatpush1.msra.mxu0 %v3138
      %3140 = vmatprep.subr.mxu0 0.0
      %v3141 = vand.u32 %v108, 4294901760
      %v3142 = vsub.f32 %v108, %v3141
      %v3143 = vand.u32 %v3142, 4294901760
      %3144 = vmatpush1.msra.mxu0 %v3143
      %3145 = vmatprep.subr.mxu0 0.0
      %v3146 = vand.u32 %v107, 4294901760
      %v3147 = vsub.f32 %v107, %v3146
      %v3148 = vand.u32 %v3147, 4294901760
      %3149 = vmatpush1.msra.mxu0 %v3148
      %3150 = vmatprep.subr.mxu0 0.0
      %v3151 = vand.u32 %v106, 4294901760
      %v3152 = vsub.f32 %v106, %v3151
      %v3153 = vand.u32 %v3152, 4294901760
      %3154 = vmatpush1.msra.mxu0 %v3153
      %3155 = vmatprep.subr.mxu0 0.0
      %v3156 = vand.u32 %v105, 4294901760
      %v3157 = vsub.f32 %v105, %v3156
      %v3158 = vand.u32 %v3157, 4294901760
      %3159 = vmatpush1.msra.mxu0 %v3158
      %3160 = vmatprep.subr.mxu0 0.0
      %v3161 = vand.u32 %v104, 4294901760
      %v3162 = vsub.f32 %v104, %v3161
      %v3163 = vand.u32 %v3162, 4294901760
      %3164 = vmatpush1.msra.mxu0 %v3163
      %3165 = vmatprep.subr.mxu0 0.0
      %v3166 = vand.u32 %v103, 4294901760
      %v3167 = vsub.f32 %v103, %v3166
      %v3168 = vand.u32 %v3167, 4294901760
      %3169 = vmatpush1.msra.mxu0 %v3168
      %3170 = vmatprep.subr.mxu0 0.0
      %v3171 = vand.u32 %v102, 4294901760
      %v3172 = vsub.f32 %v102, %v3171
      %v3173 = vand.u32 %v3172, 4294901760
      %3174 = vmatpush1.msra.mxu0 %v3173
      %3175 = vmatprep.subr.mxu0 0.0
      %v3176 = vand.u32 %v101, 4294901760
      %v3177 = vsub.f32 %v101, %v3176
      %v3178 = vand.u32 %v3177, 4294901760
      %3179 = vmatpush1.msra.mxu0 %v3178
      %3180 = vmatprep.subr.mxu0 0.0
      %v3181 = vand.u32 %v100, 4294901760
      %v3182 = vsub.f32 %v100, %v3181
      %v3183 = vand.u32 %v3182, 4294901760
      %3184 = vmatpush1.msra.mxu0 %v3183
      %3185 = vmatprep.subr.mxu0 0.0
      %v3186 = vand.u32 %v99, 4294901760
      %v3187 = vsub.f32 %v99, %v3186
      %v3188 = vand.u32 %v3187, 4294901760
      %3189 = vmatpush1.msra.mxu0 %v3188
      %3190 = vmatprep.subr.mxu0 0.0
      %v3191 = vand.u32 %v98, 4294901760
      %v3192 = vsub.f32 %v98, %v3191
      %v3193 = vand.u32 %v3192, 4294901760
      %3194 = vmatpush1.msra.mxu0 %v3193
      %3195 = vmatprep.subr.mxu0 0.0
      %v3196 = vand.u32 %v97, 4294901760
      %v3197 = vsub.f32 %v97, %v3196
      %v3198 = vand.u32 %v3197, 4294901760
      %3199 = vmatpush1.msra.mxu0 %v3198
      %3200 = vmatprep.subr.mxu0 0.0
      %3201 = vmatpush2.msra.mxu0 0.0
      %3202 = vmatprep.subr.mxu0 0.0
      %3203 = vmatpush2.msra.mxu0 0.0
      %3204 = vmatprep.subr.mxu0 0.0
      %3205 = vmatpush2.msra.mxu0 0.0
      %3206 = vmatprep.subr.mxu0 0.0
      %3207 = vmatpush2.msra.mxu0 0.0
      %3208 = vmatprep.subr.mxu0 0.0
      %3209 = vmatpush2.msra.mxu0 0.0
      %3210 = vmatprep.subr.mxu0 0.0
      %3211 = vmatpush2.msra.mxu0 0.0
      %3212 = vmatprep.subr.mxu0 0.0
      %3213 = vmatpush2.msra.mxu0 0.0
      %3214 = vmatprep.subr.mxu0 0.0
      %3215 = vmatpush2.msra.mxu0 0.0
      %3216 = vmatprep.subr.mxu0 0.0
      %3217 = vmatpush2.msra.mxu0 0.0
      %3218 = vmatprep.subr.mxu0 0.0
      %3219 = vmatpush2.msra.mxu0 0.0
      %3220 = vmatprep.subr.mxu0 0.0
      %3221 = vmatpush2.msra.mxu0 0.0
      %3222 = vmatprep.subr.mxu0 0.0
      %3223 = vmatpush2.msra.mxu0 0.0
      %3224 = vmatprep.subr.mxu0 0.0
      %3225 = vmatpush2.msra.mxu0 0.0
      %3226 = vmatprep.subr.mxu0 0.0
      %3227 = vmatpush2.msra.mxu0 0.0
      %3228 = vmatprep.subr.mxu0 0.0
      %3229 = vmatpush2.msra.mxu0 0.0
      %3230 = vmatprep.subr.mxu0 0.0
      %3231 = vmatpush2.msra.mxu0 0.0
      %3232 = vmatprep.mubr.f32.mxu0 0.0
      %v3233 = vand.u32 %v2684, 4294901760
      %3234 = vmatmul.mubr.f32.gmra.mxu0 %v3233
      %v3235 = vpop.f32.mrf.mxu0
      %v3236 = vadd.f32 %v3117, %v3235
      %v3237 = vpop.f32.mrf.mxu0
      %3238 = vdwg.mxu0
      %3239 = vmatprep.subr.mxu0 0.0
      %v3240 = vand.u32 %v112, 4294901760
      %3241 = vmatpush1.msra.mxu0 %v3240
      %3242 = vmatprep.subr.mxu0 0.0
      %v3243 = vand.u32 %v111, 4294901760
      %3244 = vmatpush1.msra.mxu0 %v3243
      %3245 = vmatprep.subr.mxu0 0.0
      %v3246 = vand.u32 %v110, 4294901760
      %3247 = vmatpush1.msra.mxu0 %v3246
      %3248 = vmatprep.subr.mxu0 0.0
      %v3249 = vand.u32 %v109, 4294901760
      %3250 = vmatpush1.msra.mxu0 %v3249
      %3251 = vmatprep.subr.mxu0 0.0
      %v3252 = vand.u32 %v108, 4294901760
      %3253 = vmatpush1.msra.mxu0 %v3252
      %3254 = vmatprep.subr.mxu0 0.0
      %v3255 = vand.u32 %v107, 4294901760
      %3256 = vmatpush1.msra.mxu0 %v3255
      %3257 = vmatprep.subr.mxu0 0.0
      %v3258 = vand.u32 %v106, 4294901760
      %3259 = vmatpush1.msra.mxu0 %v3258
      %3260 = vmatprep.subr.mxu0 0.0
      %v3261 = vand.u32 %v105, 4294901760
      %3262 = vmatpush1.msra.mxu0 %v3261
      %3263 = vmatprep.subr.mxu0 0.0
      %v3264 = vand.u32 %v104, 4294901760
      %3265 = vmatpush1.msra.mxu0 %v3264
      %3266 = vmatprep.subr.mxu0 0.0
      %v3267 = vand.u32 %v103, 4294901760
      %3268 = vmatpush1.msra.mxu0 %v3267
      %3269 = vmatprep.subr.mxu0 0.0
      %v3270 = vand.u32 %v102, 4294901760
      %3271 = vmatpush1.msra.mxu0 %v3270
      %3272 = vmatprep.subr.mxu0 0.0
      %v3273 = vand.u32 %v101, 4294901760
      %3274 = vmatpush1.msra.mxu0 %v3273
      %3275 = vmatprep.subr.mxu0 0.0
      %v3276 = vand.u32 %v100, 4294901760
      %3277 = vmatpush1.msra.mxu0 %v3276
      %3278 = vmatprep.subr.mxu0 0.0
      %v3279 = vand.u32 %v99, 4294901760
      %3280 = vmatpush1.msra.mxu0 %v3279
      %3281 = vmatprep.subr.mxu0 0.0
      %v3282 = vand.u32 %v98, 4294901760
      %3283 = vmatpush1.msra.mxu0 %v3282
      %3284 = vmatprep.subr.mxu0 0.0
      %v3285 = vand.u32 %v97, 4294901760
      %3286 = vmatpush1.msra.mxu0 %v3285
      %3287 = vmatprep.subr.mxu0 0.0
      %3288 = vmatpush2.msra.mxu0 0.0
      %3289 = vmatprep.subr.mxu0 0.0
      %3290 = vmatpush2.msra.mxu0 0.0
      %3291 = vmatprep.subr.mxu0 0.0
      %3292 = vmatpush2.msra.mxu0 0.0
      %3293 = vmatprep.subr.mxu0 0.0
      %3294 = vmatpush2.msra.mxu0 0.0
      %3295 = vmatprep.subr.mxu0 0.0
      %3296 = vmatpush2.msra.mxu0 0.0
      %3297 = vmatprep.subr.mxu0 0.0
      %3298 = vmatpush2.msra.mxu0 0.0
      %3299 = vmatprep.subr.mxu0 0.0
      %3300 = vmatpush2.msra.mxu0 0.0
      %3301 = vmatprep.subr.mxu0 0.0
      %3302 = vmatpush2.msra.mxu0 0.0
      %3303 = vmatprep.subr.mxu0 0.0
      %3304 = vmatpush2.msra.mxu0 0.0
      %3305 = vmatprep.subr.mxu0 0.0
      %3306 = vmatpush2.msra.mxu0 0.0
      %3307 = vmatprep.subr.mxu0 0.0
      %3308 = vmatpush2.msra.mxu0 0.0
      %3309 = vmatprep.subr.mxu0 0.0
      %3310 = vmatpush2.msra.mxu0 0.0
      %3311 = vmatprep.subr.mxu0 0.0
      %3312 = vmatpush2.msra.mxu0 0.0
      %3313 = vmatprep.subr.mxu0 0.0
      %3314 = vmatpush2.msra.mxu0 0.0
      %3315 = vmatprep.subr.mxu0 0.0
      %3316 = vmatpush2.msra.mxu0 0.0
      %3317 = vmatprep.subr.mxu0 0.0
      %3318 = vmatpush2.msra.mxu0 0.0
      %3319 = vmatprep.mubr.f32.mxu0 0.0
      %v3320 = vand.u32 %v2684, 4294901760
      %3321 = vmatmul.mubr.f32.gmra.mxu0 %v3320
      %v3322 = vpop.f32.mrf.mxu0
      %v3323 = vadd.f32 %v3236, %v3322
      %v3324 = vpop.f32.mrf.mxu0
      %3325 = vdwg.mxu0
      %v3326 = vmul.f32 %v3323, 0.9
      %v3327 = vadd.f32 %v3326, 0.00078125
      %3328 = vmatprep.subr.mxu0 0.0
      %v3329 = vand.u32 %v112, 4294901760
      %3330 = vmatpush1.msra.mxu0 %v3329
      %3331 = vmatprep.subr.mxu0 0.0
      %v3332 = vand.u32 %v111, 4294901760
      %3333 = vmatpush1.msra.mxu0 %v3332
      %3334 = vmatprep.subr.mxu0 0.0
      %v3335 = vand.u32 %v110, 4294901760
      %3336 = vmatpush1.msra.mxu0 %v3335
      %3337 = vmatprep.subr.mxu0 0.0
      %v3338 = vand.u32 %v109, 4294901760
      %3339 = vmatpush1.msra.mxu0 %v3338
      %3340 = vmatprep.subr.mxu0 0.0
      %v3341 = vand.u32 %v108, 4294901760
      %3342 = vmatpush1.msra.mxu0 %v3341
      %3343 = vmatprep.subr.mxu0 0.0
      %v3344 = vand.u32 %v107, 4294901760
      %3345 = vmatpush1.msra.mxu0 %v3344
      %3346 = vmatprep.subr.mxu0 0.0
      %v3347 = vand.u32 %v106, 4294901760
      %3348 = vmatpush1.msra.mxu0 %v3347
      %3349 = vmatprep.subr.mxu0 0.0
      %v3350 = vand.u32 %v105, 4294901760
      %3351 = vmatpush1.msra.mxu0 %v3350
      %3352 = vmatprep.subr.mxu0 0.0
      %v3353 = vand.u32 %v104, 4294901760
      %3354 = vmatpush1.msra.mxu0 %v3353
      %3355 = vmatprep.subr.mxu0 0.0
      %v3356 = vand.u32 %v103, 4294901760
      %3357 = vmatpush1.msra.mxu0 %v3356
      %3358 = vmatprep.subr.mxu0 0.0
      %v3359 = vand.u32 %v102, 4294901760
      %3360 = vmatpush1.msra.mxu0 %v3359
      %3361 = vmatprep.subr.mxu0 0.0
      %v3362 = vand.u32 %v101, 4294901760
      %3363 = vmatpush1.msra.mxu0 %v3362
      %3364 = vmatprep.subr.mxu0 0.0
      %v3365 = vand.u32 %v100, 4294901760
      %3366 = vmatpush1.msra.mxu0 %v3365
      %3367 = vmatprep.subr.mxu0 0.0
      %v3368 = vand.u32 %v99, 4294901760
      %3369 = vmatpush1.msra.mxu0 %v3368
      %3370 = vmatprep.subr.mxu0 0.0
      %v3371 = vand.u32 %v98, 4294901760
      %3372 = vmatpush1.msra.mxu0 %v3371
      %3373 = vmatprep.subr.mxu0 0.0
      %v3374 = vand.u32 %v97, 4294901760
      %3375 = vmatpush1.msra.mxu0 %v3374
      %3376 = vmatprep.subr.mxu0 0.0
      %3377 = vmatpush2.msra.mxu0 0.0
      %3378 = vmatprep.subr.mxu0 0.0
      %3379 = vmatpush2.msra.mxu0 0.0
      %3380 = vmatprep.subr.mxu0 0.0
      %3381 = vmatpush2.msra.mxu0 0.0
      %3382 = vmatprep.subr.mxu0 0.0
      %3383 = vmatpush2.msra.mxu0 0.0
      %3384 = vmatprep.subr.mxu0 0.0
      %3385 = vmatpush2.msra.mxu0 0.0
      %3386 = vmatprep.subr.mxu0 0.0
      %3387 = vmatpush2.msra.mxu0 0.0
      %3388 = vmatprep.subr.mxu0 0.0
      %3389 = vmatpush2.msra.mxu0 0.0
      %3390 = vmatprep.subr.mxu0 0.0
      %3391 = vmatpush2.msra.mxu0 0.0
      %3392 = vmatprep.subr.mxu0 0.0
      %3393 = vmatpush2.msra.mxu0 0.0
      %3394 = vmatprep.subr.mxu0 0.0
      %3395 = vmatpush2.msra.mxu0 0.0
      %3396 = vmatprep.subr.mxu0 0.0
      %3397 = vmatpush2.msra.mxu0 0.0
      %3398 = vmatprep.subr.mxu0 0.0
      %3399 = vmatpush2.msra.mxu0 0.0
      %3400 = vmatprep.subr.mxu0 0.0
      %3401 = vmatpush2.msra.mxu0 0.0
      %3402 = vmatprep.subr.mxu0 0.0
      %3403 = vmatpush2.msra.mxu0 0.0
      %3404 = vmatprep.subr.mxu0 0.0
      %3405 = vmatpush2.msra.mxu0 0.0
      %3406 = vmatprep.subr.mxu0 0.0
      %3407 = vmatpush2.msra.mxu0 0.0
      %3408 = vmatprep.mubr.f32.mxu0 0.0
      %v3409 = vand.u32 %v3327, 4294901760
      %v3410 = vsub.f32 %v3327, %v3409
      %v3411 = vand.u32 %v3410, 4294901760
      %v3412 = vsub.f32 %v3410, %v3411
      %v3413 = vand.u32 %v3412, 4294901760
      %3414 = vmatmul.mubr.f32.gmra.mxu0 %v3413
      %v3415 = vpop.f32.mrf.mxu0
      %v3416 = vadd.f32 0.0, %v3415
      %v3417 = vpop.f32.mrf.mxu0
      %3418 = vdwg.mxu0
      %3419 = vmatprep.subr.mxu0 0.0
      %v3420 = vand.u32 %v112, 4294901760
      %v3421 = vsub.f32 %v112, %v3420
      %v3422 = vand.u32 %v3421, 4294901760
      %v3423 = vsub.f32 %v3421, %v3422
      %v3424 = vand.u32 %v3423, 4294901760
      %3425 = vmatpush1.msra.mxu0 %v3424
      %3426 = vmatprep.subr.mxu0 0.0
      %v3427 = vand.u32 %v111, 4294901760
      %v3428 = vsub.f32 %v111, %v3427
      %v3429 = vand.u32 %v3428, 4294901760
      %v3430 = vsub.f32 %v3428, %v3429
      %v3431 = vand.u32 %v3430, 4294901760
      %3432 = vmatpush1.msra.mxu0 %v3431
      %3433 = vmatprep.subr.mxu0 0.0
      %v3434 = vand.u32 %v110, 4294901760
      %v3435 = vsub.f32 %v110, %v3434
      %v3436 = vand.u32 %v3435, 4294901760
      %v3437 = vsub.f32 %v3435, %v3436
      %v3438 = vand.u32 %v3437, 4294901760
      %3439 = vmatpush1.msra.mxu0 %v3438
      %3440 = vmatprep.subr.mxu0 0.0
      %v3441 = vand.u32 %v109, 4294901760
      %v3442 = vsub.f32 %v109, %v3441
      %v3443 = vand.u32 %v3442, 4294901760
      %v3444 = vsub.f32 %v3442, %v3443
      %v3445 = vand.u32 %v3444, 4294901760
      %3446 = vmatpush1.msra.mxu0 %v3445
      %3447 = vmatprep.subr.mxu0 0.0
      %v3448 = vand.u32 %v108, 4294901760
      %v3449 = vsub.f32 %v108, %v3448
      %v3450 = vand.u32 %v3449, 4294901760
      %v3451 = vsub.f32 %v3449, %v3450
      %v3452 = vand.u32 %v3451, 4294901760
      %3453 = vmatpush1.msra.mxu0 %v3452
      %3454 = vmatprep.subr.mxu0 0.0
      %v3455 = vand.u32 %v107, 4294901760
      %v3456 = vsub.f32 %v107, %v3455
      %v3457 = vand.u32 %v3456, 4294901760
      %v3458 = vsub.f32 %v3456, %v3457
      %v3459 = vand.u32 %v3458, 4294901760
      %3460 = vmatpush1.msra.mxu0 %v3459
      %3461 = vmatprep.subr.mxu0 0.0
      %v3462 = vand.u32 %v106, 4294901760
      %v3463 = vsub.f32 %v106, %v3462
      %v3464 = vand.u32 %v3463, 4294901760
      %v3465 = vsub.f32 %v3463, %v3464
      %v3466 = vand.u32 %v3465, 4294901760
      %3467 = vmatpush1.msra.mxu0 %v3466
      %3468 = vmatprep.subr.mxu0 0.0
      %v3469 = vand.u32 %v105, 4294901760
      %v3470 = vsub.f32 %v105, %v3469
      %v3471 = vand.u32 %v3470, 4294901760
      %v3472 = vsub.f32 %v3470, %v3471
      %v3473 = vand.u32 %v3472, 4294901760
      %3474 = vmatpush1.msra.mxu0 %v3473
      %3475 = vmatprep.subr.mxu0 0.0
      %v3476 = vand.u32 %v104, 4294901760
      %v3477 = vsub.f32 %v104, %v3476
      %v3478 = vand.u32 %v3477, 4294901760
      %v3479 = vsub.f32 %v3477, %v3478
      %v3480 = vand.u32 %v3479, 4294901760
      %3481 = vmatpush1.msra.mxu0 %v3480
      %3482 = vmatprep.subr.mxu0 0.0
      %v3483 = vand.u32 %v103, 4294901760
      %v3484 = vsub.f32 %v103, %v3483
      %v3485 = vand.u32 %v3484, 4294901760
      %v3486 = vsub.f32 %v3484, %v3485
      %v3487 = vand.u32 %v3486, 4294901760
      %3488 = vmatpush1.msra.mxu0 %v3487
      %3489 = vmatprep.subr.mxu0 0.0
      %v3490 = vand.u32 %v102, 4294901760
      %v3491 = vsub.f32 %v102, %v3490
      %v3492 = vand.u32 %v3491, 4294901760
      %v3493 = vsub.f32 %v3491, %v3492
      %v3494 = vand.u32 %v3493, 4294901760
      %3495 = vmatpush1.msra.mxu0 %v3494
      %3496 = vmatprep.subr.mxu0 0.0
      %v3497 = vand.u32 %v101, 4294901760
      %v3498 = vsub.f32 %v101, %v3497
      %v3499 = vand.u32 %v3498, 4294901760
      %v3500 = vsub.f32 %v3498, %v3499
      %v3501 = vand.u32 %v3500, 4294901760
      %3502 = vmatpush1.msra.mxu0 %v3501
      %3503 = vmatprep.subr.mxu0 0.0
      %v3504 = vand.u32 %v100, 4294901760
      %v3505 = vsub.f32 %v100, %v3504
      %v3506 = vand.u32 %v3505, 4294901760
      %v3507 = vsub.f32 %v3505, %v3506
      %v3508 = vand.u32 %v3507, 4294901760
      %3509 = vmatpush1.msra.mxu0 %v3508
      %3510 = vmatprep.subr.mxu0 0.0
      %v3511 = vand.u32 %v99, 4294901760
      %v3512 = vsub.f32 %v99, %v3511
      %v3513 = vand.u32 %v3512, 4294901760
      %v3514 = vsub.f32 %v3512, %v3513
      %v3515 = vand.u32 %v3514, 4294901760
      %3516 = vmatpush1.msra.mxu0 %v3515
      %3517 = vmatprep.subr.mxu0 0.0
      %v3518 = vand.u32 %v98, 4294901760
      %v3519 = vsub.f32 %v98, %v3518
      %v3520 = vand.u32 %v3519, 4294901760
      %v3521 = vsub.f32 %v3519, %v3520
      %v3522 = vand.u32 %v3521, 4294901760
      %3523 = vmatpush1.msra.mxu0 %v3522
      %3524 = vmatprep.subr.mxu0 0.0
      %v3525 = vand.u32 %v97, 4294901760
      %v3526 = vsub.f32 %v97, %v3525
      %v3527 = vand.u32 %v3526, 4294901760
      %v3528 = vsub.f32 %v3526, %v3527
      %v3529 = vand.u32 %v3528, 4294901760
      %3530 = vmatpush1.msra.mxu0 %v3529
      %3531 = vmatprep.subr.mxu0 0.0
      %3532 = vmatpush2.msra.mxu0 0.0
      %3533 = vmatprep.subr.mxu0 0.0
      %3534 = vmatpush2.msra.mxu0 0.0
      %3535 = vmatprep.subr.mxu0 0.0
      %3536 = vmatpush2.msra.mxu0 0.0
      %3537 = vmatprep.subr.mxu0 0.0
      %3538 = vmatpush2.msra.mxu0 0.0
      %3539 = vmatprep.subr.mxu0 0.0
      %3540 = vmatpush2.msra.mxu0 0.0
      %3541 = vmatprep.subr.mxu0 0.0
      %3542 = vmatpush2.msra.mxu0 0.0
      %3543 = vmatprep.subr.mxu0 0.0
      %3544 = vmatpush2.msra.mxu0 0.0
      %3545 = vmatprep.subr.mxu0 0.0
      %3546 = vmatpush2.msra.mxu0 0.0
      %3547 = vmatprep.subr.mxu0 0.0
      %3548 = vmatpush2.msra.mxu0 0.0
      %3549 = vmatprep.subr.mxu0 0.0
      %3550 = vmatpush2.msra.mxu0 0.0
      %3551 = vmatprep.subr.mxu0 0.0
      %3552 = vmatpush2.msra.mxu0 0.0
      %3553 = vmatprep.subr.mxu0 0.0
      %3554 = vmatpush2.msra.mxu0 0.0
      %3555 = vmatprep.subr.mxu0 0.0
      %3556 = vmatpush2.msra.mxu0 0.0
      %3557 = vmatprep.subr.mxu0 0.0
      %3558 = vmatpush2.msra.mxu0 0.0
      %3559 = vmatprep.subr.mxu0 0.0
      %3560 = vmatpush2.msra.mxu0 0.0
      %3561 = vmatprep.subr.mxu0 0.0
      %3562 = vmatpush2.msra.mxu0 0.0
      %3563 = vmatprep.mubr.f32.mxu0 0.0
      %v3564 = vand.u32 %v3327, 4294901760
      %3565 = vmatmul.mubr.f32.gmra.mxu0 %v3564
      %v3566 = vpop.f32.mrf.mxu0
      %v3567 = vadd.f32 %v3416, %v3566
      %v3568 = vpop.f32.mrf.mxu0
      %3569 = vdwg.mxu0
      %3570 = vmatprep.subr.mxu0 0.0
      %v3571 = vand.u32 %v112, 4294901760
      %v3572 = vsub.f32 %v112, %v3571
      %3573 = vmatpush1.msra.mxu0 %v3572
      %3574 = vmatprep.subr.mxu0 0.0
      %v3575 = vand.u32 %v111, 4294901760
      %v3576 = vsub.f32 %v111, %v3575
      %3577 = vmatpush1.msra.mxu0 %v3576
      %3578 = vmatprep.subr.mxu0 0.0
      %v3579 = vand.u32 %v110, 4294901760
      %v3580 = vsub.f32 %v110, %v3579
      %3581 = vmatpush1.msra.mxu0 %v3580
      %3582 = vmatprep.subr.mxu0 0.0
      %v3583 = vand.u32 %v109, 4294901760
      %v3584 = vsub.f32 %v109, %v3583
      %3585 = vmatpush1.msra.mxu0 %v3584
      %3586 = vmatprep.subr.mxu0 0.0
      %v3587 = vand.u32 %v108, 4294901760
      %v3588 = vsub.f32 %v108, %v3587
      %3589 = vmatpush1.msra.mxu0 %v3588
      %3590 = vmatprep.subr.mxu0 0.0
      %v3591 = vand.u32 %v107, 4294901760
      %v3592 = vsub.f32 %v107, %v3591
      %3593 = vmatpush1.msra.mxu0 %v3592
      %3594 = vmatprep.subr.mxu0 0.0
      %v3595 = vand.u32 %v106, 4294901760
      %v3596 = vsub.f32 %v106, %v3595
      %3597 = vmatpush1.msra.mxu0 %v3596
      %3598 = vmatprep.subr.mxu0 0.0
      %v3599 = vand.u32 %v105, 4294901760
      %v3600 = vsub.f32 %v105, %v3599
      %3601 = vmatpush1.msra.mxu0 %v3600
      %3602 = vmatprep.subr.mxu0 0.0
      %v3603 = vand.u32 %v104, 4294901760
      %v3604 = vsub.f32 %v104, %v3603
      %3605 = vmatpush1.msra.mxu0 %v3604
      %3606 = vmatprep.subr.mxu0 0.0
      %v3607 = vand.u32 %v103, 4294901760
      %v3608 = vsub.f32 %v103, %v3607
      %3609 = vmatpush1.msra.mxu0 %v3608
      %3610 = vmatprep.subr.mxu0 0.0
      %v3611 = vand.u32 %v102, 4294901760
      %v3612 = vsub.f32 %v102, %v3611
      %3613 = vmatpush1.msra.mxu0 %v3612
      %3614 = vmatprep.subr.mxu0 0.0
      %v3615 = vand.u32 %v101, 4294901760
      %v3616 = vsub.f32 %v101, %v3615
      %3617 = vmatpush1.msra.mxu0 %v3616
      %3618 = vmatprep.subr.mxu0 0.0
      %v3619 = vand.u32 %v100, 4294901760
      %v3620 = vsub.f32 %v100, %v3619
      %3621 = vmatpush1.msra.mxu0 %v3620
      %3622 = vmatprep.subr.mxu0 0.0
      %v3623 = vand.u32 %v99, 4294901760
      %v3624 = vsub.f32 %v99, %v3623
      %3625 = vmatpush1.msra.mxu0 %v3624
      %3626 = vmatprep.subr.mxu0 0.0
      %v3627 = vand.u32 %v98, 4294901760
      %v3628 = vsub.f32 %v98, %v3627
      %3629 = vmatpush1.msra.mxu0 %v3628
      %3630 = vmatprep.subr.mxu0 0.0
      %v3631 = vand.u32 %v97, 4294901760
      %v3632 = vsub.f32 %v97, %v3631
      %3633 = vmatpush1.msra.mxu0 %v3632
      %3634 = vmatprep.subr.mxu0 0.0
      %3635 = vmatpush2.msra.mxu0 0.0
      %3636 = vmatprep.subr.mxu0 0.0
      %3637 = vmatpush2.msra.mxu0 0.0
      %3638 = vmatprep.subr.mxu0 0.0
      %3639 = vmatpush2.msra.mxu0 0.0
      %3640 = vmatprep.subr.mxu0 0.0
      %3641 = vmatpush2.msra.mxu0 0.0
      %3642 = vmatprep.subr.mxu0 0.0
      %3643 = vmatpush2.msra.mxu0 0.0
      %3644 = vmatprep.subr.mxu0 0.0
      %3645 = vmatpush2.msra.mxu0 0.0
      %3646 = vmatprep.subr.mxu0 0.0
      %3647 = vmatpush2.msra.mxu0 0.0
      %3648 = vmatprep.subr.mxu0 0.0
      %3649 = vmatpush2.msra.mxu0 0.0
      %3650 = vmatprep.subr.mxu0 0.0
      %3651 = vmatpush2.msra.mxu0 0.0
      %3652 = vmatprep.subr.mxu0 0.0
      %3653 = vmatpush2.msra.mxu0 0.0
      %3654 = vmatprep.subr.mxu0 0.0
      %3655 = vmatpush2.msra.mxu0 0.0
      %3656 = vmatprep.subr.mxu0 0.0
      %3657 = vmatpush2.msra.mxu0 0.0
      %3658 = vmatprep.subr.mxu0 0.0
      %3659 = vmatpush2.msra.mxu0 0.0
      %3660 = vmatprep.subr.mxu0 0.0
      %3661 = vmatpush2.msra.mxu0 0.0
      %3662 = vmatprep.subr.mxu0 0.0
      %3663 = vmatpush2.msra.mxu0 0.0
      %3664 = vmatprep.subr.mxu0 0.0
      %3665 = vmatpush2.msra.mxu0 0.0
      %3666 = vmatprep.mubr.f32.mxu0 0.0
      %v3667 = vand.u32 %v3327, 4294901760
      %v3668 = vsub.f32 %v3327, %v3667
      %3669 = vmatmul.mubr.f32.gmra.mxu0 %v3668
      %v3670 = vpop.f32.mrf.mxu0
      %v3671 = vadd.f32 %v3567, %v3670
      %v3672 = vpop.f32.mrf.mxu0
      %3673 = vdwg.mxu0
      %3674 = vmatprep.subr.mxu0 0.0
      %v3675 = vand.u32 %v112, 4294901760
      %3676 = vmatpush1.msra.mxu0 %v3675
      %3677 = vmatprep.subr.mxu0 0.0
      %v3678 = vand.u32 %v111, 4294901760
      %3679 = vmatpush1.msra.mxu0 %v3678
      %3680 = vmatprep.subr.mxu0 0.0
      %v3681 = vand.u32 %v110, 4294901760
      %3682 = vmatpush1.msra.mxu0 %v3681
      %3683 = vmatprep.subr.mxu0 0.0
      %v3684 = vand.u32 %v109, 4294901760
      %3685 = vmatpush1.msra.mxu0 %v3684
      %3686 = vmatprep.subr.mxu0 0.0
      %v3687 = vand.u32 %v108, 4294901760
      %3688 = vmatpush1.msra.mxu0 %v3687
      %3689 = vmatprep.subr.mxu0 0.0
      %v3690 = vand.u32 %v107, 4294901760
      %3691 = vmatpush1.msra.mxu0 %v3690
      %3692 = vmatprep.subr.mxu0 0.0
      %v3693 = vand.u32 %v106, 4294901760
      %3694 = vmatpush1.msra.mxu0 %v3693
      %3695 = vmatprep.subr.mxu0 0.0
      %v3696 = vand.u32 %v105, 4294901760
      %3697 = vmatpush1.msra.mxu0 %v3696
      %3698 = vmatprep.subr.mxu0 0.0
      %v3699 = vand.u32 %v104, 4294901760
      %3700 = vmatpush1.msra.mxu0 %v3699
      %3701 = vmatprep.subr.mxu0 0.0
      %v3702 = vand.u32 %v103, 4294901760
      %3703 = vmatpush1.msra.mxu0 %v3702
      %3704 = vmatprep.subr.mxu0 0.0
      %v3705 = vand.u32 %v102, 4294901760
      %3706 = vmatpush1.msra.mxu0 %v3705
      %3707 = vmatprep.subr.mxu0 0.0
      %v3708 = vand.u32 %v101, 4294901760
      %3709 = vmatpush1.msra.mxu0 %v3708
      %3710 = vmatprep.subr.mxu0 0.0
      %v3711 = vand.u32 %v100, 4294901760
      %3712 = vmatpush1.msra.mxu0 %v3711
      %3713 = vmatprep.subr.mxu0 0.0
      %v3714 = vand.u32 %v99, 4294901760
      %3715 = vmatpush1.msra.mxu0 %v3714
      %3716 = vmatprep.subr.mxu0 0.0
      %v3717 = vand.u32 %v98, 4294901760
      %3718 = vmatpush1.msra.mxu0 %v3717
      %3719 = vmatprep.subr.mxu0 0.0
      %v3720 = vand.u32 %v97, 4294901760
      %3721 = vmatpush1.msra.mxu0 %v3720
      %3722 = vmatprep.subr.mxu0 0.0
      %3723 = vmatpush2.msra.mxu0 0.0
      %3724 = vmatprep.subr.mxu0 0.0
      %3725 = vmatpush2.msra.mxu0 0.0
      %3726 = vmatprep.subr.mxu0 0.0
      %3727 = vmatpush2.msra.mxu0 0.0
      %3728 = vmatprep.subr.mxu0 0.0
      %3729 = vmatpush2.msra.mxu0 0.0
      %3730 = vmatprep.subr.mxu0 0.0
      %3731 = vmatpush2.msra.mxu0 0.0
      %3732 = vmatprep.subr.mxu0 0.0
      %3733 = vmatpush2.msra.mxu0 0.0
      %3734 = vmatprep.subr.mxu0 0.0
      %3735 = vmatpush2.msra.mxu0 0.0
      %3736 = vmatprep.subr.mxu0 0.0
      %3737 = vmatpush2.msra.mxu0 0.0
      %3738 = vmatprep.subr.mxu0 0.0
      %3739 = vmatpush2.msra.mxu0 0.0
      %3740 = vmatprep.subr.mxu0 0.0
      %3741 = vmatpush2.msra.mxu0 0.0
      %3742 = vmatprep.subr.mxu0 0.0
      %3743 = vmatpush2.msra.mxu0 0.0
      %3744 = vmatprep.subr.mxu0 0.0
      %3745 = vmatpush2.msra.mxu0 0.0
      %3746 = vmatprep.subr.mxu0 0.0
      %3747 = vmatpush2.msra.mxu0 0.0
      %3748 = vmatprep.subr.mxu0 0.0
      %3749 = vmatpush2.msra.mxu0 0.0
      %3750 = vmatprep.subr.mxu0 0.0
      %3751 = vmatpush2.msra.mxu0 0.0
      %3752 = vmatprep.subr.mxu0 0.0
      %3753 = vmatpush2.msra.mxu0 0.0
      %3754 = vmatprep.mubr.f32.mxu0 0.0
      %v3755 = vand.u32 %v3327, 4294901760
      %v3756 = vsub.f32 %v3327, %v3755
      %v3757 = vand.u32 %v3756, 4294901760
      %3758 = vmatmul.mubr.f32.gmra.mxu0 %v3757
      %v3759 = vpop.f32.mrf.mxu0
      %v3760 = vadd.f32 %v3671, %v3759
      %v3761 = vpop.f32.mrf.mxu0
      %3762 = vdwg.mxu0
      %3763 = vmatprep.subr.mxu0 0.0
      %v3764 = vand.u32 %v112, 4294901760
      %v3765 = vsub.f32 %v112, %v3764
      %v3766 = vand.u32 %v3765, 4294901760
      %3767 = vmatpush1.msra.mxu0 %v3766
      %3768 = vmatprep.subr.mxu0 0.0
      %v3769 = vand.u32 %v111, 4294901760
      %v3770 = vsub.f32 %v111, %v3769
      %v3771 = vand.u32 %v3770, 4294901760
      %3772 = vmatpush1.msra.mxu0 %v3771
      %3773 = vmatprep.subr.mxu0 0.0
      %v3774 = vand.u32 %v110, 4294901760
      %v3775 = vsub.f32 %v110, %v3774
      %v3776 = vand.u32 %v3775, 4294901760
      %3777 = vmatpush1.msra.mxu0 %v3776
      %3778 = vmatprep.subr.mxu0 0.0
      %v3779 = vand.u32 %v109, 4294901760
      %v3780 = vsub.f32 %v109, %v3779
      %v3781 = vand.u32 %v3780, 4294901760
      %3782 = vmatpush1.msra.mxu0 %v3781
      %3783 = vmatprep.subr.mxu0 0.0
      %v3784 = vand.u32 %v108, 4294901760
      %v3785 = vsub.f32 %v108, %v3784
      %v3786 = vand.u32 %v3785, 4294901760
      %3787 = vmatpush1.msra.mxu0 %v3786
      %3788 = vmatprep.subr.mxu0 0.0
      %v3789 = vand.u32 %v107, 4294901760
      %v3790 = vsub.f32 %v107, %v3789
      %v3791 = vand.u32 %v3790, 4294901760
      %3792 = vmatpush1.msra.mxu0 %v3791
      %3793 = vmatprep.subr.mxu0 0.0
      %v3794 = vand.u32 %v106, 4294901760
      %v3795 = vsub.f32 %v106, %v3794
      %v3796 = vand.u32 %v3795, 4294901760
      %3797 = vmatpush1.msra.mxu0 %v3796
      %3798 = vmatprep.subr.mxu0 0.0
      %v3799 = vand.u32 %v105, 4294901760
      %v3800 = vsub.f32 %v105, %v3799
      %v3801 = vand.u32 %v3800, 4294901760
      %3802 = vmatpush1.msra.mxu0 %v3801
      %3803 = vmatprep.subr.mxu0 0.0
      %v3804 = vand.u32 %v104, 4294901760
      %v3805 = vsub.f32 %v104, %v3804
      %v3806 = vand.u32 %v3805, 4294901760
      %3807 = vmatpush1.msra.mxu0 %v3806
      %3808 = vmatprep.subr.mxu0 0.0
      %v3809 = vand.u32 %v103, 4294901760
      %v3810 = vsub.f32 %v103, %v3809
      %v3811 = vand.u32 %v3810, 4294901760
      %3812 = vmatpush1.msra.mxu0 %v3811
      %3813 = vmatprep.subr.mxu0 0.0
      %v3814 = vand.u32 %v102, 4294901760
      %v3815 = vsub.f32 %v102, %v3814
      %v3816 = vand.u32 %v3815, 4294901760
      %3817 = vmatpush1.msra.mxu0 %v3816
      %3818 = vmatprep.subr.mxu0 0.0
      %v3819 = vand.u32 %v101, 4294901760
      %v3820 = vsub.f32 %v101, %v3819
      %v3821 = vand.u32 %v3820, 4294901760
      %3822 = vmatpush1.msra.mxu0 %v3821
      %3823 = vmatprep.subr.mxu0 0.0
      %v3824 = vand.u32 %v100, 4294901760
      %v3825 = vsub.f32 %v100, %v3824
      %v3826 = vand.u32 %v3825, 4294901760
      %3827 = vmatpush1.msra.mxu0 %v3826
      %3828 = vmatprep.subr.mxu0 0.0
      %v3829 = vand.u32 %v99, 4294901760
      %v3830 = vsub.f32 %v99, %v3829
      %v3831 = vand.u32 %v3830, 4294901760
      %3832 = vmatpush1.msra.mxu0 %v3831
      %3833 = vmatprep.subr.mxu0 0.0
      %v3834 = vand.u32 %v98, 4294901760
      %v3835 = vsub.f32 %v98, %v3834
      %v3836 = vand.u32 %v3835, 4294901760
      %3837 = vmatpush1.msra.mxu0 %v3836
      %3838 = vmatprep.subr.mxu0 0.0
      %v3839 = vand.u32 %v97, 4294901760
      %v3840 = vsub.f32 %v97, %v3839
      %v3841 = vand.u32 %v3840, 4294901760
      %3842 = vmatpush1.msra.mxu0 %v3841
      %3843 = vmatprep.subr.mxu0 0.0
      %3844 = vmatpush2.msra.mxu0 0.0
      %3845 = vmatprep.subr.mxu0 0.0
      %3846 = vmatpush2.msra.mxu0 0.0
      %3847 = vmatprep.subr.mxu0 0.0
      %3848 = vmatpush2.msra.mxu0 0.0
      %3849 = vmatprep.subr.mxu0 0.0
      %3850 = vmatpush2.msra.mxu0 0.0
      %3851 = vmatprep.subr.mxu0 0.0
      %3852 = vmatpush2.msra.mxu0 0.0
      %3853 = vmatprep.subr.mxu0 0.0
      %3854 = vmatpush2.msra.mxu0 0.0
      %3855 = vmatprep.subr.mxu0 0.0
      %3856 = vmatpush2.msra.mxu0 0.0
      %3857 = vmatprep.subr.mxu0 0.0
      %3858 = vmatpush2.msra.mxu0 0.0
      %3859 = vmatprep.subr.mxu0 0.0
      %3860 = vmatpush2.msra.mxu0 0.0
      %3861 = vmatprep.subr.mxu0 0.0
      %3862 = vmatpush2.msra.mxu0 0.0
      %3863 = vmatprep.subr.mxu0 0.0
      %3864 = vmatpush2.msra.mxu0 0.0
      %3865 = vmatprep.subr.mxu0 0.0
      %3866 = vmatpush2.msra.mxu0 0.0
      %3867 = vmatprep.subr.mxu0 0.0
      %3868 = vmatpush2.msra.mxu0 0.0
      %3869 = vmatprep.subr.mxu0 0.0
      %3870 = vmatpush2.msra.mxu0 0.0
      %3871 = vmatprep.subr.mxu0 0.0
      %3872 = vmatpush2.msra.mxu0 0.0
      %3873 = vmatprep.subr.mxu0 0.0
      %3874 = vmatpush2.msra.mxu0 0.0
      %3875 = vmatprep.mubr.f32.mxu0 0.0
      %v3876 = vand.u32 %v3327, 4294901760
      %3877 = vmatmul.mubr.f32.gmra.mxu0 %v3876
      %v3878 = vpop.f32.mrf.mxu0
      %v3879 = vadd.f32 %v3760, %v3878
      %v3880 = vpop.f32.mrf.mxu0
      %3881 = vdwg.mxu0
      %3882 = vmatprep.subr.mxu0 0.0
      %v3883 = vand.u32 %v112, 4294901760
      %3884 = vmatpush1.msra.mxu0 %v3883
      %3885 = vmatprep.subr.mxu0 0.0
      %v3886 = vand.u32 %v111, 4294901760
      %3887 = vmatpush1.msra.mxu0 %v3886
      %3888 = vmatprep.subr.mxu0 0.0
      %v3889 = vand.u32 %v110, 4294901760
      %3890 = vmatpush1.msra.mxu0 %v3889
      %3891 = vmatprep.subr.mxu0 0.0
      %v3892 = vand.u32 %v109, 4294901760
      %3893 = vmatpush1.msra.mxu0 %v3892
      %3894 = vmatprep.subr.mxu0 0.0
      %v3895 = vand.u32 %v108, 4294901760
      %3896 = vmatpush1.msra.mxu0 %v3895
      %3897 = vmatprep.subr.mxu0 0.0
      %v3898 = vand.u32 %v107, 4294901760
      %3899 = vmatpush1.msra.mxu0 %v3898
      %3900 = vmatprep.subr.mxu0 0.0
      %v3901 = vand.u32 %v106, 4294901760
      %3902 = vmatpush1.msra.mxu0 %v3901
      %3903 = vmatprep.subr.mxu0 0.0
      %v3904 = vand.u32 %v105, 4294901760
      %3905 = vmatpush1.msra.mxu0 %v3904
      %3906 = vmatprep.subr.mxu0 0.0
      %v3907 = vand.u32 %v104, 4294901760
      %3908 = vmatpush1.msra.mxu0 %v3907
      %3909 = vmatprep.subr.mxu0 0.0
      %v3910 = vand.u32 %v103, 4294901760
      %3911 = vmatpush1.msra.mxu0 %v3910
      %3912 = vmatprep.subr.mxu0 0.0
      %v3913 = vand.u32 %v102, 4294901760
      %3914 = vmatpush1.msra.mxu0 %v3913
      %3915 = vmatprep.subr.mxu0 0.0
      %v3916 = vand.u32 %v101, 4294901760
      %3917 = vmatpush1.msra.mxu0 %v3916
      %3918 = vmatprep.subr.mxu0 0.0
      %v3919 = vand.u32 %v100, 4294901760
      %3920 = vmatpush1.msra.mxu0 %v3919
      %3921 = vmatprep.subr.mxu0 0.0
      %v3922 = vand.u32 %v99, 4294901760
      %3923 = vmatpush1.msra.mxu0 %v3922
      %3924 = vmatprep.subr.mxu0 0.0
      %v3925 = vand.u32 %v98, 4294901760
      %3926 = vmatpush1.msra.mxu0 %v3925
      %3927 = vmatprep.subr.mxu0 0.0
      %v3928 = vand.u32 %v97, 4294901760
      %3929 = vmatpush1.msra.mxu0 %v3928
      %3930 = vmatprep.subr.mxu0 0.0
      %3931 = vmatpush2.msra.mxu0 0.0
      %3932 = vmatprep.subr.mxu0 0.0
      %3933 = vmatpush2.msra.mxu0 0.0
      %3934 = vmatprep.subr.mxu0 0.0
      %3935 = vmatpush2.msra.mxu0 0.0
      %3936 = vmatprep.subr.mxu0 0.0
      %3937 = vmatpush2.msra.mxu0 0.0
      %3938 = vmatprep.subr.mxu0 0.0
      %3939 = vmatpush2.msra.mxu0 0.0
      %3940 = vmatprep.subr.mxu0 0.0
      %3941 = vmatpush2.msra.mxu0 0.0
      %3942 = vmatprep.subr.mxu0 0.0
      %3943 = vmatpush2.msra.mxu0 0.0
      %3944 = vmatprep.subr.mxu0 0.0
      %3945 = vmatpush2.msra.mxu0 0.0
      %3946 = vmatprep.subr.mxu0 0.0
      %3947 = vmatpush2.msra.mxu0 0.0
      %3948 = vmatprep.subr.mxu0 0.0
      %3949 = vmatpush2.msra.mxu0 0.0
      %3950 = vmatprep.subr.mxu0 0.0
      %3951 = vmatpush2.msra.mxu0 0.0
      %3952 = vmatprep.subr.mxu0 0.0
      %3953 = vmatpush2.msra.mxu0 0.0
      %3954 = vmatprep.subr.mxu0 0.0
      %3955 = vmatpush2.msra.mxu0 0.0
      %3956 = vmatprep.subr.mxu0 0.0
      %3957 = vmatpush2.msra.mxu0 0.0
      %3958 = vmatprep.subr.mxu0 0.0
      %3959 = vmatpush2.msra.mxu0 0.0
      %3960 = vmatprep.subr.mxu0 0.0
      %3961 = vmatpush2.msra.mxu0 0.0
      %3962 = vmatprep.mubr.f32.mxu0 0.0
      %v3963 = vand.u32 %v3327, 4294901760
      %3964 = vmatmul.mubr.f32.gmra.mxu0 %v3963
      %v3965 = vpop.f32.mrf.mxu0
      %v3966 = vadd.f32 %v3879, %v3965
      %v3967 = vpop.f32.mrf.mxu0
      %3968 = vdwg.mxu0
      %v3969 = vmul.f32 %v3966, 0.9
      %v3970 = vadd.f32 %v3969, 0.00078125
      %3971 = vmatprep.subr.mxu0 0.0
      %v3972 = vand.u32 %v112, 4294901760
      %3973 = vmatpush1.msra.mxu0 %v3972
      %3974 = vmatprep.subr.mxu0 0.0
      %v3975 = vand.u32 %v111, 4294901760
      %3976 = vmatpush1.msra.mxu0 %v3975
      %3977 = vmatprep.subr.mxu0 0.0
      %v3978 = vand.u32 %v110, 4294901760
      %3979 = vmatpush1.msra.mxu0 %v3978
      %3980 = vmatprep.subr.mxu0 0.0
      %v3981 = vand.u32 %v109, 4294901760
      %3982 = vmatpush1.msra.mxu0 %v3981
      %3983 = vmatprep.subr.mxu0 0.0
      %v3984 = vand.u32 %v108, 4294901760
      %3985 = vmatpush1.msra.mxu0 %v3984
      %3986 = vmatprep.subr.mxu0 0.0
      %v3987 = vand.u32 %v107, 4294901760
      %3988 = vmatpush1.msra.mxu0 %v3987
      %3989 = vmatprep.subr.mxu0 0.0
      %v3990 = vand.u32 %v106, 4294901760
      %3991 = vmatpush1.msra.mxu0 %v3990
      %3992 = vmatprep.subr.mxu0 0.0
      %v3993 = vand.u32 %v105, 4294901760
      %3994 = vmatpush1.msra.mxu0 %v3993
      %3995 = vmatprep.subr.mxu0 0.0
      %v3996 = vand.u32 %v104, 4294901760
      %3997 = vmatpush1.msra.mxu0 %v3996
      %3998 = vmatprep.subr.mxu0 0.0
      %v3999 = vand.u32 %v103, 4294901760
      %4000 = vmatpush1.msra.mxu0 %v3999
      %4001 = vmatprep.subr.mxu0 0.0
      %v4002 = vand.u32 %v102, 4294901760
      %4003 = vmatpush1.msra.mxu0 %v4002
      %4004 = vmatprep.subr.mxu0 0.0
      %v4005 = vand.u32 %v101, 4294901760
      %4006 = vmatpush1.msra.mxu0 %v4005
      %4007 = vmatprep.subr.mxu0 0.0
      %v4008 = vand.u32 %v100, 4294901760
      %4009 = vmatpush1.msra.mxu0 %v4008
      %4010 = vmatprep.subr.mxu0 0.0
      %v4011 = vand.u32 %v99, 4294901760
      %4012 = vmatpush1.msra.mxu0 %v4011
      %4013 = vmatprep.subr.mxu0 0.0
      %v4014 = vand.u32 %v98, 4294901760
      %4015 = vmatpush1.msra.mxu0 %v4014
      %4016 = vmatprep.subr.mxu0 0.0
      %v4017 = vand.u32 %v97, 4294901760
      %4018 = vmatpush1.msra.mxu0 %v4017
      %4019 = vmatprep.subr.mxu0 0.0
      %4020 = vmatpush2.msra.mxu0 0.0
      %4021 = vmatprep.subr.mxu0 0.0
      %4022 = vmatpush2.msra.mxu0 0.0
      %4023 = vmatprep.subr.mxu0 0.0
      %4024 = vmatpush2.msra.mxu0 0.0
      %4025 = vmatprep.subr.mxu0 0.0
      %4026 = vmatpush2.msra.mxu0 0.0
      %4027 = vmatprep.subr.mxu0 0.0
      %4028 = vmatpush2.msra.mxu0 0.0
      %4029 = vmatprep.subr.mxu0 0.0
      %4030 = vmatpush2.msra.mxu0 0.0
      %4031 = vmatprep.subr.mxu0 0.0
      %4032 = vmatpush2.msra.mxu0 0.0
      %4033 = vmatprep.subr.mxu0 0.0
      %4034 = vmatpush2.msra.mxu0 0.0
      %4035 = vmatprep.subr.mxu0 0.0
      %4036 = vmatpush2.msra.mxu0 0.0
      %4037 = vmatprep.subr.mxu0 0.0
      %4038 = vmatpush2.msra.mxu0 0.0
      %4039 = vmatprep.subr.mxu0 0.0
      %4040 = vmatpush2.msra.mxu0 0.0
      %4041 = vmatprep.subr.mxu0 0.0
      %4042 = vmatpush2.msra.mxu0 0.0
      %4043 = vmatprep.subr.mxu0 0.0
      %4044 = vmatpush2.msra.mxu0 0.0
      %4045 = vmatprep.subr.mxu0 0.0
      %4046 = vmatpush2.msra.mxu0 0.0
      %4047 = vmatprep.subr.mxu0 0.0
      %4048 = vmatpush2.msra.mxu0 0.0
      %4049 = vmatprep.subr.mxu0 0.0
      %4050 = vmatpush2.msra.mxu0 0.0
      %4051 = vmatprep.mubr.f32.mxu0 0.0
      %v4052 = vand.u32 %v3970, 4294901760
      %v4053 = vsub.f32 %v3970, %v4052
      %v4054 = vand.u32 %v4053, 4294901760
      %v4055 = vsub.f32 %v4053, %v4054
      %v4056 = vand.u32 %v4055, 4294901760
      %4057 = vmatmul.mubr.f32.gmra.mxu0 %v4056
      %v4058 = vpop.f32.mrf.mxu0
      %v4059 = vadd.f32 0.0, %v4058
      %v4060 = vpop.f32.mrf.mxu0
      %4061 = vdwg.mxu0
      %4062 = vmatprep.subr.mxu0 0.0
      %v4063 = vand.u32 %v112, 4294901760
      %v4064 = vsub.f32 %v112, %v4063
      %v4065 = vand.u32 %v4064, 4294901760
      %v4066 = vsub.f32 %v4064, %v4065
      %v4067 = vand.u32 %v4066, 4294901760
      %4068 = vmatpush1.msra.mxu0 %v4067
      %4069 = vmatprep.subr.mxu0 0.0
      %v4070 = vand.u32 %v111, 4294901760
      %v4071 = vsub.f32 %v111, %v4070
      %v4072 = vand.u32 %v4071, 4294901760
      %v4073 = vsub.f32 %v4071, %v4072
      %v4074 = vand.u32 %v4073, 4294901760
      %4075 = vmatpush1.msra.mxu0 %v4074
      %4076 = vmatprep.subr.mxu0 0.0
      %v4077 = vand.u32 %v110, 4294901760
      %v4078 = vsub.f32 %v110, %v4077
      %v4079 = vand.u32 %v4078, 4294901760
      %v4080 = vsub.f32 %v4078, %v4079
      %v4081 = vand.u32 %v4080, 4294901760
      %4082 = vmatpush1.msra.mxu0 %v4081
      %4083 = vmatprep.subr.mxu0 0.0
      %v4084 = vand.u32 %v109, 4294901760
      %v4085 = vsub.f32 %v109, %v4084
      %v4086 = vand.u32 %v4085, 4294901760
      %v4087 = vsub.f32 %v4085, %v4086
      %v4088 = vand.u32 %v4087, 4294901760
      %4089 = vmatpush1.msra.mxu0 %v4088
      %4090 = vmatprep.subr.mxu0 0.0
      %v4091 = vand.u32 %v108, 4294901760
      %v4092 = vsub.f32 %v108, %v4091
      %v4093 = vand.u32 %v4092, 4294901760
      %v4094 = vsub.f32 %v4092, %v4093
      %v4095 = vand.u32 %v4094, 4294901760
      %4096 = vmatpush1.msra.mxu0 %v4095
      %4097 = vmatprep.subr.mxu0 0.0
      %v4098 = vand.u32 %v107, 4294901760
      %v4099 = vsub.f32 %v107, %v4098
      %v4100 = vand.u32 %v4099, 4294901760
      %v4101 = vsub.f32 %v4099, %v4100
      %v4102 = vand.u32 %v4101, 4294901760
      %4103 = vmatpush1.msra.mxu0 %v4102
      %4104 = vmatprep.subr.mxu0 0.0
      %v4105 = vand.u32 %v106, 4294901760
      %v4106 = vsub.f32 %v106, %v4105
      %v4107 = vand.u32 %v4106, 4294901760
      %v4108 = vsub.f32 %v4106, %v4107
      %v4109 = vand.u32 %v4108, 4294901760
      %4110 = vmatpush1.msra.mxu0 %v4109
      %4111 = vmatprep.subr.mxu0 0.0
      %v4112 = vand.u32 %v105, 4294901760
      %v4113 = vsub.f32 %v105, %v4112
      %v4114 = vand.u32 %v4113, 4294901760
      %v4115 = vsub.f32 %v4113, %v4114
      %v4116 = vand.u32 %v4115, 4294901760
      %4117 = vmatpush1.msra.mxu0 %v4116
      %4118 = vmatprep.subr.mxu0 0.0
      %v4119 = vand.u32 %v104, 4294901760
      %v4120 = vsub.f32 %v104, %v4119
      %v4121 = vand.u32 %v4120, 4294901760
      %v4122 = vsub.f32 %v4120, %v4121
      %v4123 = vand.u32 %v4122, 4294901760
      %4124 = vmatpush1.msra.mxu0 %v4123
      %4125 = vmatprep.subr.mxu0 0.0
      %v4126 = vand.u32 %v103, 4294901760
      %v4127 = vsub.f32 %v103, %v4126
      %v4128 = vand.u32 %v4127, 4294901760
      %v4129 = vsub.f32 %v4127, %v4128
      %v4130 = vand.u32 %v4129, 4294901760
      %4131 = vmatpush1.msra.mxu0 %v4130
      %4132 = vmatprep.subr.mxu0 0.0
      %v4133 = vand.u32 %v102, 4294901760
      %v4134 = vsub.f32 %v102, %v4133
      %v4135 = vand.u32 %v4134, 4294901760
      %v4136 = vsub.f32 %v4134, %v4135
      %v4137 = vand.u32 %v4136, 4294901760
      %4138 = vmatpush1.msra.mxu0 %v4137
      %4139 = vmatprep.subr.mxu0 0.0
      %v4140 = vand.u32 %v101, 4294901760
      %v4141 = vsub.f32 %v101, %v4140
      %v4142 = vand.u32 %v4141, 4294901760
      %v4143 = vsub.f32 %v4141, %v4142
      %v4144 = vand.u32 %v4143, 4294901760
      %4145 = vmatpush1.msra.mxu0 %v4144
      %4146 = vmatprep.subr.mxu0 0.0
      %v4147 = vand.u32 %v100, 4294901760
      %v4148 = vsub.f32 %v100, %v4147
      %v4149 = vand.u32 %v4148, 4294901760
      %v4150 = vsub.f32 %v4148, %v4149
      %v4151 = vand.u32 %v4150, 4294901760
      %4152 = vmatpush1.msra.mxu0 %v4151
      %4153 = vmatprep.subr.mxu0 0.0
      %v4154 = vand.u32 %v99, 4294901760
      %v4155 = vsub.f32 %v99, %v4154
      %v4156 = vand.u32 %v4155, 4294901760
      %v4157 = vsub.f32 %v4155, %v4156
      %v4158 = vand.u32 %v4157, 4294901760
      %4159 = vmatpush1.msra.mxu0 %v4158
      %4160 = vmatprep.subr.mxu0 0.0
      %v4161 = vand.u32 %v98, 4294901760
      %v4162 = vsub.f32 %v98, %v4161
      %v4163 = vand.u32 %v4162, 4294901760
      %v4164 = vsub.f32 %v4162, %v4163
      %v4165 = vand.u32 %v4164, 4294901760
      %4166 = vmatpush1.msra.mxu0 %v4165
      %4167 = vmatprep.subr.mxu0 0.0
      %v4168 = vand.u32 %v97, 4294901760
      %v4169 = vsub.f32 %v97, %v4168
      %v4170 = vand.u32 %v4169, 4294901760
      %v4171 = vsub.f32 %v4169, %v4170
      %v4172 = vand.u32 %v4171, 4294901760
      %4173 = vmatpush1.msra.mxu0 %v4172
      %4174 = vmatprep.subr.mxu0 0.0
      %4175 = vmatpush2.msra.mxu0 0.0
      %4176 = vmatprep.subr.mxu0 0.0
      %4177 = vmatpush2.msra.mxu0 0.0
      %4178 = vmatprep.subr.mxu0 0.0
      %4179 = vmatpush2.msra.mxu0 0.0
      %4180 = vmatprep.subr.mxu0 0.0
      %4181 = vmatpush2.msra.mxu0 0.0
      %4182 = vmatprep.subr.mxu0 0.0
      %4183 = vmatpush2.msra.mxu0 0.0
      %4184 = vmatprep.subr.mxu0 0.0
      %4185 = vmatpush2.msra.mxu0 0.0
      %4186 = vmatprep.subr.mxu0 0.0
      %4187 = vmatpush2.msra.mxu0 0.0
      %4188 = vmatprep.subr.mxu0 0.0
      %4189 = vmatpush2.msra.mxu0 0.0
      %4190 = vmatprep.subr.mxu0 0.0
      %4191 = vmatpush2.msra.mxu0 0.0
      %4192 = vmatprep.subr.mxu0 0.0
      %4193 = vmatpush2.msra.mxu0 0.0
      %4194 = vmatprep.subr.mxu0 0.0
      %4195 = vmatpush2.msra.mxu0 0.0
      %4196 = vmatprep.subr.mxu0 0.0
      %4197 = vmatpush2.msra.mxu0 0.0
      %4198 = vmatprep.subr.mxu0 0.0
      %4199 = vmatpush2.msra.mxu0 0.0
      %4200 = vmatprep.subr.mxu0 0.0
      %4201 = vmatpush2.msra.mxu0 0.0
      %4202 = vmatprep.subr.mxu0 0.0
      %4203 = vmatpush2.msra.mxu0 0.0
      %4204 = vmatprep.subr.mxu0 0.0
      %4205 = vmatpush2.msra.mxu0 0.0
      %4206 = vmatprep.mubr.f32.mxu0 0.0
      %v4207 = vand.u32 %v3970, 4294901760
      %4208 = vmatmul.mubr.f32.gmra.mxu0 %v4207
      %v4209 = vpop.f32.mrf.mxu0
      %v4210 = vadd.f32 %v4059, %v4209
      %v4211 = vpop.f32.mrf.mxu0
      %4212 = vdwg.mxu0
      %4213 = vmatprep.subr.mxu0 0.0
      %v4214 = vand.u32 %v112, 4294901760
      %v4215 = vsub.f32 %v112, %v4214
      %4216 = vmatpush1.msra.mxu0 %v4215
      %4217 = vmatprep.subr.mxu0 0.0
      %v4218 = vand.u32 %v111, 4294901760
      %v4219 = vsub.f32 %v111, %v4218
      %4220 = vmatpush1.msra.mxu0 %v4219
      %4221 = vmatprep.subr.mxu0 0.0
      %v4222 = vand.u32 %v110, 4294901760
      %v4223 = vsub.f32 %v110, %v4222
      %4224 = vmatpush1.msra.mxu0 %v4223
      %4225 = vmatprep.subr.mxu0 0.0
      %v4226 = vand.u32 %v109, 4294901760
      %v4227 = vsub.f32 %v109, %v4226
      %4228 = vmatpush1.msra.mxu0 %v4227
      %4229 = vmatprep.subr.mxu0 0.0
      %v4230 = vand.u32 %v108, 4294901760
      %v4231 = vsub.f32 %v108, %v4230
      %4232 = vmatpush1.msra.mxu0 %v4231
      %4233 = vmatprep.subr.mxu0 0.0
      %v4234 = vand.u32 %v107, 4294901760
      %v4235 = vsub.f32 %v107, %v4234
      %4236 = vmatpush1.msra.mxu0 %v4235
      %4237 = vmatprep.subr.mxu0 0.0
      %v4238 = vand.u32 %v106, 4294901760
      %v4239 = vsub.f32 %v106, %v4238
      %4240 = vmatpush1.msra.mxu0 %v4239
      %4241 = vmatprep.subr.mxu0 0.0
      %v4242 = vand.u32 %v105, 4294901760
      %v4243 = vsub.f32 %v105, %v4242
      %4244 = vmatpush1.msra.mxu0 %v4243
      %4245 = vmatprep.subr.mxu0 0.0
      %v4246 = vand.u32 %v104, 4294901760
      %v4247 = vsub.f32 %v104, %v4246
      %4248 = vmatpush1.msra.mxu0 %v4247
      %4249 = vmatprep.subr.mxu0 0.0
      %v4250 = vand.u32 %v103, 4294901760
      %v4251 = vsub.f32 %v103, %v4250
      %4252 = vmatpush1.msra.mxu0 %v4251
      %4253 = vmatprep.subr.mxu0 0.0
      %v4254 = vand.u32 %v102, 4294901760
      %v4255 = vsub.f32 %v102, %v4254
      %4256 = vmatpush1.msra.mxu0 %v4255
      %4257 = vmatprep.subr.mxu0 0.0
      %v4258 = vand.u32 %v101, 4294901760
      %v4259 = vsub.f32 %v101, %v4258
      %4260 = vmatpush1.msra.mxu0 %v4259
      %4261 = vmatprep.subr.mxu0 0.0
      %v4262 = vand.u32 %v100, 4294901760
      %v4263 = vsub.f32 %v100, %v4262
      %4264 = vmatpush1.msra.mxu0 %v4263
      %4265 = vmatprep.subr.mxu0 0.0
      %v4266 = vand.u32 %v99, 4294901760
      %v4267 = vsub.f32 %v99, %v4266
      %4268 = vmatpush1.msra.mxu0 %v4267
      %4269 = vmatprep.subr.mxu0 0.0
      %v4270 = vand.u32 %v98, 4294901760
      %v4271 = vsub.f32 %v98, %v4270
      %4272 = vmatpush1.msra.mxu0 %v4271
      %4273 = vmatprep.subr.mxu0 0.0
      %v4274 = vand.u32 %v97, 4294901760
      %v4275 = vsub.f32 %v97, %v4274
      %4276 = vmatpush1.msra.mxu0 %v4275
      %4277 = vmatprep.subr.mxu0 0.0
      %4278 = vmatpush2.msra.mxu0 0.0
      %4279 = vmatprep.subr.mxu0 0.0
      %4280 = vmatpush2.msra.mxu0 0.0
      %4281 = vmatprep.subr.mxu0 0.0
      %4282 = vmatpush2.msra.mxu0 0.0
      %4283 = vmatprep.subr.mxu0 0.0
      %4284 = vmatpush2.msra.mxu0 0.0
      %4285 = vmatprep.subr.mxu0 0.0
      %4286 = vmatpush2.msra.mxu0 0.0
      %4287 = vmatprep.subr.mxu0 0.0
      %4288 = vmatpush2.msra.mxu0 0.0
      %4289 = vmatprep.subr.mxu0 0.0
      %4290 = vmatpush2.msra.mxu0 0.0
      %4291 = vmatprep.subr.mxu0 0.0
      %4292 = vmatpush2.msra.mxu0 0.0
      %4293 = vmatprep.subr.mxu0 0.0
      %4294 = vmatpush2.msra.mxu0 0.0
      %4295 = vmatprep.subr.mxu0 0.0
      %4296 = vmatpush2.msra.mxu0 0.0
      %4297 = vmatprep.subr.mxu0 0.0
      %4298 = vmatpush2.msra.mxu0 0.0
      %4299 = vmatprep.subr.mxu0 0.0
      %4300 = vmatpush2.msra.mxu0 0.0
      %4301 = vmatprep.subr.mxu0 0.0
      %4302 = vmatpush2.msra.mxu0 0.0
      %4303 = vmatprep.subr.mxu0 0.0
      %4304 = vmatpush2.msra.mxu0 0.0
      %4305 = vmatprep.subr.mxu0 0.0
      %4306 = vmatpush2.msra.mxu0 0.0
      %4307 = vmatprep.subr.mxu0 0.0
      %4308 = vmatpush2.msra.mxu0 0.0
      %4309 = vmatprep.mubr.f32.mxu0 0.0
      %v4310 = vand.u32 %v3970, 4294901760
      %v4311 = vsub.f32 %v3970, %v4310
      %4312 = vmatmul.mubr.f32.gmra.mxu0 %v4311
      %v4313 = vpop.f32.mrf.mxu0
      %v4314 = vadd.f32 %v4210, %v4313
      %v4315 = vpop.f32.mrf.mxu0
      %4316 = vdwg.mxu0
      %4317 = vmatprep.subr.mxu0 0.0
      %v4318 = vand.u32 %v112, 4294901760
      %4319 = vmatpush1.msra.mxu0 %v4318
      %4320 = vmatprep.subr.mxu0 0.0
      %v4321 = vand.u32 %v111, 4294901760
      %4322 = vmatpush1.msra.mxu0 %v4321
      %4323 = vmatprep.subr.mxu0 0.0
      %v4324 = vand.u32 %v110, 4294901760
      %4325 = vmatpush1.msra.mxu0 %v4324
      %4326 = vmatprep.subr.mxu0 0.0
      %v4327 = vand.u32 %v109, 4294901760
      %4328 = vmatpush1.msra.mxu0 %v4327
      %4329 = vmatprep.subr.mxu0 0.0
      %v4330 = vand.u32 %v108, 4294901760
      %4331 = vmatpush1.msra.mxu0 %v4330
      %4332 = vmatprep.subr.mxu0 0.0
      %v4333 = vand.u32 %v107, 4294901760
      %4334 = vmatpush1.msra.mxu0 %v4333
      %4335 = vmatprep.subr.mxu0 0.0
      %v4336 = vand.u32 %v106, 4294901760
      %4337 = vmatpush1.msra.mxu0 %v4336
      %4338 = vmatprep.subr.mxu0 0.0
      %v4339 = vand.u32 %v105, 4294901760
      %4340 = vmatpush1.msra.mxu0 %v4339
      %4341 = vmatprep.subr.mxu0 0.0
      %v4342 = vand.u32 %v104, 4294901760
      %4343 = vmatpush1.msra.mxu0 %v4342
      %4344 = vmatprep.subr.mxu0 0.0
      %v4345 = vand.u32 %v103, 4294901760
      %4346 = vmatpush1.msra.mxu0 %v4345
      %4347 = vmatprep.subr.mxu0 0.0
      %v4348 = vand.u32 %v102, 4294901760
      %4349 = vmatpush1.msra.mxu0 %v4348
      %4350 = vmatprep.subr.mxu0 0.0
      %v4351 = vand.u32 %v101, 4294901760
      %4352 = vmatpush1.msra.mxu0 %v4351
      %4353 = vmatprep.subr.mxu0 0.0
      %v4354 = vand.u32 %v100, 4294901760
      %4355 = vmatpush1.msra.mxu0 %v4354
      %4356 = vmatprep.subr.mxu0 0.0
      %v4357 = vand.u32 %v99, 4294901760
      %4358 = vmatpush1.msra.mxu0 %v4357
      %4359 = vmatprep.subr.mxu0 0.0
      %v4360 = vand.u32 %v98, 4294901760
      %4361 = vmatpush1.msra.mxu0 %v4360
      %4362 = vmatprep.subr.mxu0 0.0
      %v4363 = vand.u32 %v97, 4294901760
      %4364 = vmatpush1.msra.mxu0 %v4363
      %4365 = vmatprep.subr.mxu0 0.0
      %4366 = vmatpush2.msra.mxu0 0.0
      %4367 = vmatprep.subr.mxu0 0.0
      %4368 = vmatpush2.msra.mxu0 0.0
      %4369 = vmatprep.subr.mxu0 0.0
      %4370 = vmatpush2.msra.mxu0 0.0
      %4371 = vmatprep.subr.mxu0 0.0
      %4372 = vmatpush2.msra.mxu0 0.0
      %4373 = vmatprep.subr.mxu0 0.0
      %4374 = vmatpush2.msra.mxu0 0.0
      %4375 = vmatprep.subr.mxu0 0.0
      %4376 = vmatpush2.msra.mxu0 0.0
      %4377 = vmatprep.subr.mxu0 0.0
      %4378 = vmatpush2.msra.mxu0 0.0
      %4379 = vmatprep.subr.mxu0 0.0
      %4380 = vmatpush2.msra.mxu0 0.0
      %4381 = vmatprep.subr.mxu0 0.0
      %4382 = vmatpush2.msra.mxu0 0.0
      %4383 = vmatprep.subr.mxu0 0.0
      %4384 = vmatpush2.msra.mxu0 0.0
      %4385 = vmatprep.subr.mxu0 0.0
      %4386 = vmatpush2.msra.mxu0 0.0
      %4387 = vmatprep.subr.mxu0 0.0
      %4388 = vmatpush2.msra.mxu0 0.0
      %4389 = vmatprep.subr.mxu0 0.0
      %4390 = vmatpush2.msra.mxu0 0.0
      %4391 = vmatprep.subr.mxu0 0.0
      %4392 = vmatpush2.msra.mxu0 0.0
      %4393 = vmatprep.subr.mxu0 0.0
      %4394 = vmatpush2.msra.mxu0 0.0
      %4395 = vmatprep.subr.mxu0 0.0
      %4396 = vmatpush2.msra.mxu0 0.0
      %4397 = vmatprep.mubr.f32.mxu0 0.0
      %v4398 = vand.u32 %v3970, 4294901760
      %v4399 = vsub.f32 %v3970, %v4398
      %v4400 = vand.u32 %v4399, 4294901760
      %4401 = vmatmul.mubr.f32.gmra.mxu0 %v4400
      %v4402 = vpop.f32.mrf.mxu0
      %v4403 = vadd.f32 %v4314, %v4402
      %v4404 = vpop.f32.mrf.mxu0
      %4405 = vdwg.mxu0
      %4406 = vmatprep.subr.mxu0 0.0
      %v4407 = vand.u32 %v112, 4294901760
      %v4408 = vsub.f32 %v112, %v4407
      %v4409 = vand.u32 %v4408, 4294901760
      %4410 = vmatpush1.msra.mxu0 %v4409
      %4411 = vmatprep.subr.mxu0 0.0
      %v4412 = vand.u32 %v111, 4294901760
      %v4413 = vsub.f32 %v111, %v4412
      %v4414 = vand.u32 %v4413, 4294901760
      %4415 = vmatpush1.msra.mxu0 %v4414
      %4416 = vmatprep.subr.mxu0 0.0
      %v4417 = vand.u32 %v110, 4294901760
      %v4418 = vsub.f32 %v110, %v4417
      %v4419 = vand.u32 %v4418, 4294901760
      %4420 = vmatpush1.msra.mxu0 %v4419
      %4421 = vmatprep.subr.mxu0 0.0
      %v4422 = vand.u32 %v109, 4294901760
      %v4423 = vsub.f32 %v109, %v4422
      %v4424 = vand.u32 %v4423, 4294901760
      %4425 = vmatpush1.msra.mxu0 %v4424
      %4426 = vmatprep.subr.mxu0 0.0
      %v4427 = vand.u32 %v108, 4294901760
      %v4428 = vsub.f32 %v108, %v4427
      %v4429 = vand.u32 %v4428, 4294901760
      %4430 = vmatpush1.msra.mxu0 %v4429
      %4431 = vmatprep.subr.mxu0 0.0
      %v4432 = vand.u32 %v107, 4294901760
      %v4433 = vsub.f32 %v107, %v4432
      %v4434 = vand.u32 %v4433, 4294901760
      %4435 = vmatpush1.msra.mxu0 %v4434
      %4436 = vmatprep.subr.mxu0 0.0
      %v4437 = vand.u32 %v106, 4294901760
      %v4438 = vsub.f32 %v106, %v4437
      %v4439 = vand.u32 %v4438, 4294901760
      %4440 = vmatpush1.msra.mxu0 %v4439
      %4441 = vmatprep.subr.mxu0 0.0
      %v4442 = vand.u32 %v105, 4294901760
      %v4443 = vsub.f32 %v105, %v4442
      %v4444 = vand.u32 %v4443, 4294901760
      %4445 = vmatpush1.msra.mxu0 %v4444
      %4446 = vmatprep.subr.mxu0 0.0
      %v4447 = vand.u32 %v104, 4294901760
      %v4448 = vsub.f32 %v104, %v4447
      %v4449 = vand.u32 %v4448, 4294901760
      %4450 = vmatpush1.msra.mxu0 %v4449
      %4451 = vmatprep.subr.mxu0 0.0
      %v4452 = vand.u32 %v103, 4294901760
      %v4453 = vsub.f32 %v103, %v4452
      %v4454 = vand.u32 %v4453, 4294901760
      %4455 = vmatpush1.msra.mxu0 %v4454
      %4456 = vmatprep.subr.mxu0 0.0
      %v4457 = vand.u32 %v102, 4294901760
      %v4458 = vsub.f32 %v102, %v4457
      %v4459 = vand.u32 %v4458, 4294901760
      %4460 = vmatpush1.msra.mxu0 %v4459
      %4461 = vmatprep.subr.mxu0 0.0
      %v4462 = vand.u32 %v101, 4294901760
      %v4463 = vsub.f32 %v101, %v4462
      %v4464 = vand.u32 %v4463, 4294901760
      %4465 = vmatpush1.msra.mxu0 %v4464
      %4466 = vmatprep.subr.mxu0 0.0
      %v4467 = vand.u32 %v100, 4294901760
      %v4468 = vsub.f32 %v100, %v4467
      %v4469 = vand.u32 %v4468, 4294901760
      %4470 = vmatpush1.msra.mxu0 %v4469
      %4471 = vmatprep.subr.mxu0 0.0
      %v4472 = vand.u32 %v99, 4294901760
      %v4473 = vsub.f32 %v99, %v4472
      %v4474 = vand.u32 %v4473, 4294901760
      %4475 = vmatpush1.msra.mxu0 %v4474
      %4476 = vmatprep.subr.mxu0 0.0
      %v4477 = vand.u32 %v98, 4294901760
      %v4478 = vsub.f32 %v98, %v4477
      %v4479 = vand.u32 %v4478, 4294901760
      %4480 = vmatpush1.msra.mxu0 %v4479
      %4481 = vmatprep.subr.mxu0 0.0
      %v4482 = vand.u32 %v97, 4294901760
      %v4483 = vsub.f32 %v97, %v4482
      %v4484 = vand.u32 %v4483, 4294901760
      %4485 = vmatpush1.msra.mxu0 %v4484
      %4486 = vmatprep.subr.mxu0 0.0
      %4487 = vmatpush2.msra.mxu0 0.0
      %4488 = vmatprep.subr.mxu0 0.0
      %4489 = vmatpush2.msra.mxu0 0.0
      %4490 = vmatprep.subr.mxu0 0.0
      %4491 = vmatpush2.msra.mxu0 0.0
      %4492 = vmatprep.subr.mxu0 0.0
      %4493 = vmatpush2.msra.mxu0 0.0
      %4494 = vmatprep.subr.mxu0 0.0
      %4495 = vmatpush2.msra.mxu0 0.0
      %4496 = vmatprep.subr.mxu0 0.0
      %4497 = vmatpush2.msra.mxu0 0.0
      %4498 = vmatprep.subr.mxu0 0.0
      %4499 = vmatpush2.msra.mxu0 0.0
      %4500 = vmatprep.subr.mxu0 0.0
      %4501 = vmatpush2.msra.mxu0 0.0
      %4502 = vmatprep.subr.mxu0 0.0
      %4503 = vmatpush2.msra.mxu0 0.0
      %4504 = vmatprep.subr.mxu0 0.0
      %4505 = vmatpush2.msra.mxu0 0.0
      %4506 = vmatprep.subr.mxu0 0.0
      %4507 = vmatpush2.msra.mxu0 0.0
      %4508 = vmatprep.subr.mxu0 0.0
      %4509 = vmatpush2.msra.mxu0 0.0
      %4510 = vmatprep.subr.mxu0 0.0
      %4511 = vmatpush2.msra.mxu0 0.0
      %4512 = vmatprep.subr.mxu0 0.0
      %4513 = vmatpush2.msra.mxu0 0.0
      %4514 = vmatprep.subr.mxu0 0.0
      %4515 = vmatpush2.msra.mxu0 0.0
      %4516 = vmatprep.subr.mxu0 0.0
      %4517 = vmatpush2.msra.mxu0 0.0
      %4518 = vmatprep.mubr.f32.mxu0 0.0
      %v4519 = vand.u32 %v3970, 4294901760
      %4520 = vmatmul.mubr.f32.gmra.mxu0 %v4519
      %v4521 = vpop.f32.mrf.mxu0
      %v4522 = vadd.f32 %v4403, %v4521
      %v4523 = vpop.f32.mrf.mxu0
      %4524 = vdwg.mxu0
      %4525 = vmatprep.subr.mxu0 0.0
      %v4526 = vand.u32 %v112, 4294901760
      %4527 = vmatpush1.msra.mxu0 %v4526
      %4528 = vmatprep.subr.mxu0 0.0
      %v4529 = vand.u32 %v111, 4294901760
      %4530 = vmatpush1.msra.mxu0 %v4529
      %4531 = vmatprep.subr.mxu0 0.0
      %v4532 = vand.u32 %v110, 4294901760
      %4533 = vmatpush1.msra.mxu0 %v4532
      %4534 = vmatprep.subr.mxu0 0.0
      %v4535 = vand.u32 %v109, 4294901760
      %4536 = vmatpush1.msra.mxu0 %v4535
      %4537 = vmatprep.subr.mxu0 0.0
      %v4538 = vand.u32 %v108, 4294901760
      %4539 = vmatpush1.msra.mxu0 %v4538
      %4540 = vmatprep.subr.mxu0 0.0
      %v4541 = vand.u32 %v107, 4294901760
      %4542 = vmatpush1.msra.mxu0 %v4541
      %4543 = vmatprep.subr.mxu0 0.0
      %v4544 = vand.u32 %v106, 4294901760
      %4545 = vmatpush1.msra.mxu0 %v4544
      %4546 = vmatprep.subr.mxu0 0.0
      %v4547 = vand.u32 %v105, 4294901760
      %4548 = vmatpush1.msra.mxu0 %v4547
      %4549 = vmatprep.subr.mxu0 0.0
      %v4550 = vand.u32 %v104, 4294901760
      %4551 = vmatpush1.msra.mxu0 %v4550
      %4552 = vmatprep.subr.mxu0 0.0
      %v4553 = vand.u32 %v103, 4294901760
      %4554 = vmatpush1.msra.mxu0 %v4553
      %4555 = vmatprep.subr.mxu0 0.0
      %v4556 = vand.u32 %v102, 4294901760
      %4557 = vmatpush1.msra.mxu0 %v4556
      %4558 = vmatprep.subr.mxu0 0.0
      %v4559 = vand.u32 %v101, 4294901760
      %4560 = vmatpush1.msra.mxu0 %v4559
      %4561 = vmatprep.subr.mxu0 0.0
      %v4562 = vand.u32 %v100, 4294901760
      %4563 = vmatpush1.msra.mxu0 %v4562
      %4564 = vmatprep.subr.mxu0 0.0
      %v4565 = vand.u32 %v99, 4294901760
      %4566 = vmatpush1.msra.mxu0 %v4565
      %4567 = vmatprep.subr.mxu0 0.0
      %v4568 = vand.u32 %v98, 4294901760
      %4569 = vmatpush1.msra.mxu0 %v4568
      %4570 = vmatprep.subr.mxu0 0.0
      %v4571 = vand.u32 %v97, 4294901760
      %4572 = vmatpush1.msra.mxu0 %v4571
      %4573 = vmatprep.subr.mxu0 0.0
      %4574 = vmatpush2.msra.mxu0 0.0
      %4575 = vmatprep.subr.mxu0 0.0
      %4576 = vmatpush2.msra.mxu0 0.0
      %4577 = vmatprep.subr.mxu0 0.0
      %4578 = vmatpush2.msra.mxu0 0.0
      %4579 = vmatprep.subr.mxu0 0.0
      %4580 = vmatpush2.msra.mxu0 0.0
      %4581 = vmatprep.subr.mxu0 0.0
      %4582 = vmatpush2.msra.mxu0 0.0
      %4583 = vmatprep.subr.mxu0 0.0
      %4584 = vmatpush2.msra.mxu0 0.0
      %4585 = vmatprep.subr.mxu0 0.0
      %4586 = vmatpush2.msra.mxu0 0.0
      %4587 = vmatprep.subr.mxu0 0.0
      %4588 = vmatpush2.msra.mxu0 0.0
      %4589 = vmatprep.subr.mxu0 0.0
      %4590 = vmatpush2.msra.mxu0 0.0
      %4591 = vmatprep.subr.mxu0 0.0
      %4592 = vmatpush2.msra.mxu0 0.0
      %4593 = vmatprep.subr.mxu0 0.0
      %4594 = vmatpush2.msra.mxu0 0.0
      %4595 = vmatprep.subr.mxu0 0.0
      %4596 = vmatpush2.msra.mxu0 0.0
      %4597 = vmatprep.subr.mxu0 0.0
      %4598 = vmatpush2.msra.mxu0 0.0
      %4599 = vmatprep.subr.mxu0 0.0
      %4600 = vmatpush2.msra.mxu0 0.0
      %4601 = vmatprep.subr.mxu0 0.0
      %4602 = vmatpush2.msra.mxu0 0.0
      %4603 = vmatprep.subr.mxu0 0.0
      %4604 = vmatpush2.msra.mxu0 0.0
      %4605 = vmatprep.mubr.f32.mxu0 0.0
      %v4606 = vand.u32 %v3970, 4294901760
      %4607 = vmatmul.mubr.f32.gmra.mxu0 %v4606
      %v4608 = vpop.f32.mrf.mxu0
      %v4609 = vadd.f32 %v4522, %v4608
      %v4610 = vpop.f32.mrf.mxu0
      %4611 = vdwg.mxu0
      %v4612 = vmul.f32 %v4609, 0.9
      %v4613 = vadd.f32 %v4612, 0.00078125
      %4614 = vmatprep.subr.mxu0 0.0
      %v4615 = vand.u32 %v112, 4294901760
      %4616 = vmatpush1.msra.mxu0 %v4615
      %4617 = vmatprep.subr.mxu0 0.0
      %v4618 = vand.u32 %v111, 4294901760
      %4619 = vmatpush1.msra.mxu0 %v4618
      %4620 = vmatprep.subr.mxu0 0.0
      %v4621 = vand.u32 %v110, 4294901760
      %4622 = vmatpush1.msra.mxu0 %v4621
      %4623 = vmatprep.subr.mxu0 0.0
      %v4624 = vand.u32 %v109, 4294901760
      %4625 = vmatpush1.msra.mxu0 %v4624
      %4626 = vmatprep.subr.mxu0 0.0
      %v4627 = vand.u32 %v108, 4294901760
      %4628 = vmatpush1.msra.mxu0 %v4627
      %4629 = vmatprep.subr.mxu0 0.0
      %v4630 = vand.u32 %v107, 4294901760
      %4631 = vmatpush1.msra.mxu0 %v4630
      %4632 = vmatprep.subr.mxu0 0.0
      %v4633 = vand.u32 %v106, 4294901760
      %4634 = vmatpush1.msra.mxu0 %v4633
      %4635 = vmatprep.subr.mxu0 0.0
      %v4636 = vand.u32 %v105, 4294901760
      %4637 = vmatpush1.msra.mxu0 %v4636
      %4638 = vmatprep.subr.mxu0 0.0
      %v4639 = vand.u32 %v104, 4294901760
      %4640 = vmatpush1.msra.mxu0 %v4639
      %4641 = vmatprep.subr.mxu0 0.0
      %v4642 = vand.u32 %v103, 4294901760
      %4643 = vmatpush1.msra.mxu0 %v4642
      %4644 = vmatprep.subr.mxu0 0.0
      %v4645 = vand.u32 %v102, 4294901760
      %4646 = vmatpush1.msra.mxu0 %v4645
      %4647 = vmatprep.subr.mxu0 0.0
      %v4648 = vand.u32 %v101, 4294901760
      %4649 = vmatpush1.msra.mxu0 %v4648
      %4650 = vmatprep.subr.mxu0 0.0
      %v4651 = vand.u32 %v100, 4294901760
      %4652 = vmatpush1.msra.mxu0 %v4651
      %4653 = vmatprep.subr.mxu0 0.0
      %v4654 = vand.u32 %v99, 4294901760
      %4655 = vmatpush1.msra.mxu0 %v4654
      %4656 = vmatprep.subr.mxu0 0.0
      %v4657 = vand.u32 %v98, 4294901760
      %4658 = vmatpush1.msra.mxu0 %v4657
      %4659 = vmatprep.subr.mxu0 0.0
      %v4660 = vand.u32 %v97, 4294901760
      %4661 = vmatpush1.msra.mxu0 %v4660
      %4662 = vmatprep.subr.mxu0 0.0
      %4663 = vmatpush2.msra.mxu0 0.0
      %4664 = vmatprep.subr.mxu0 0.0
      %4665 = vmatpush2.msra.mxu0 0.0
      %4666 = vmatprep.subr.mxu0 0.0
      %4667 = vmatpush2.msra.mxu0 0.0
      %4668 = vmatprep.subr.mxu0 0.0
      %4669 = vmatpush2.msra.mxu0 0.0
      %4670 = vmatprep.subr.mxu0 0.0
      %4671 = vmatpush2.msra.mxu0 0.0
      %4672 = vmatprep.subr.mxu0 0.0
      %4673 = vmatpush2.msra.mxu0 0.0
      %4674 = vmatprep.subr.mxu0 0.0
      %4675 = vmatpush2.msra.mxu0 0.0
      %4676 = vmatprep.subr.mxu0 0.0
      %4677 = vmatpush2.msra.mxu0 0.0
      %4678 = vmatprep.subr.mxu0 0.0
      %4679 = vmatpush2.msra.mxu0 0.0
      %4680 = vmatprep.subr.mxu0 0.0
      %4681 = vmatpush2.msra.mxu0 0.0
      %4682 = vmatprep.subr.mxu0 0.0
      %4683 = vmatpush2.msra.mxu0 0.0
      %4684 = vmatprep.subr.mxu0 0.0
      %4685 = vmatpush2.msra.mxu0 0.0
      %4686 = vmatprep.subr.mxu0 0.0
      %4687 = vmatpush2.msra.mxu0 0.0
      %4688 = vmatprep.subr.mxu0 0.0
      %4689 = vmatpush2.msra.mxu0 0.0
      %4690 = vmatprep.subr.mxu0 0.0
      %4691 = vmatpush2.msra.mxu0 0.0
      %4692 = vmatprep.subr.mxu0 0.0
      %4693 = vmatpush2.msra.mxu0 0.0
      %4694 = vmatprep.mubr.f32.mxu0 0.0
      %v4695 = vand.u32 %v4613, 4294901760
      %v4696 = vsub.f32 %v4613, %v4695
      %v4697 = vand.u32 %v4696, 4294901760
      %v4698 = vsub.f32 %v4696, %v4697
      %v4699 = vand.u32 %v4698, 4294901760
      %4700 = vmatmul.mubr.f32.gmra.mxu0 %v4699
      %v4701 = vpop.f32.mrf.mxu0
      %v4702 = vadd.f32 0.0, %v4701
      %v4703 = vpop.f32.mrf.mxu0
      %4704 = vdwg.mxu0
      %4705 = vmatprep.subr.mxu0 0.0
      %v4706 = vand.u32 %v112, 4294901760
      %v4707 = vsub.f32 %v112, %v4706
      %v4708 = vand.u32 %v4707, 4294901760
      %v4709 = vsub.f32 %v4707, %v4708
      %v4710 = vand.u32 %v4709, 4294901760
      %4711 = vmatpush1.msra.mxu0 %v4710
      %4712 = vmatprep.subr.mxu0 0.0
      %v4713 = vand.u32 %v111, 4294901760
      %v4714 = vsub.f32 %v111, %v4713
      %v4715 = vand.u32 %v4714, 4294901760
      %v4716 = vsub.f32 %v4714, %v4715
      %v4717 = vand.u32 %v4716, 4294901760
      %4718 = vmatpush1.msra.mxu0 %v4717
      %4719 = vmatprep.subr.mxu0 0.0
      %v4720 = vand.u32 %v110, 4294901760
      %v4721 = vsub.f32 %v110, %v4720
      %v4722 = vand.u32 %v4721, 4294901760
      %v4723 = vsub.f32 %v4721, %v4722
      %v4724 = vand.u32 %v4723, 4294901760
      %4725 = vmatpush1.msra.mxu0 %v4724
      %4726 = vmatprep.subr.mxu0 0.0
      %v4727 = vand.u32 %v109, 4294901760
      %v4728 = vsub.f32 %v109, %v4727
      %v4729 = vand.u32 %v4728, 4294901760
      %v4730 = vsub.f32 %v4728, %v4729
      %v4731 = vand.u32 %v4730, 4294901760
      %4732 = vmatpush1.msra.mxu0 %v4731
      %4733 = vmatprep.subr.mxu0 0.0
      %v4734 = vand.u32 %v108, 4294901760
      %v4735 = vsub.f32 %v108, %v4734
      %v4736 = vand.u32 %v4735, 4294901760
      %v4737 = vsub.f32 %v4735, %v4736
      %v4738 = vand.u32 %v4737, 4294901760
      %4739 = vmatpush1.msra.mxu0 %v4738
      %4740 = vmatprep.subr.mxu0 0.0
      %v4741 = vand.u32 %v107, 4294901760
      %v4742 = vsub.f32 %v107, %v4741
      %v4743 = vand.u32 %v4742, 4294901760
      %v4744 = vsub.f32 %v4742, %v4743
      %v4745 = vand.u32 %v4744, 4294901760
      %4746 = vmatpush1.msra.mxu0 %v4745
      %4747 = vmatprep.subr.mxu0 0.0
      %v4748 = vand.u32 %v106, 4294901760
      %v4749 = vsub.f32 %v106, %v4748
      %v4750 = vand.u32 %v4749, 4294901760
      %v4751 = vsub.f32 %v4749, %v4750
      %v4752 = vand.u32 %v4751, 4294901760
      %4753 = vmatpush1.msra.mxu0 %v4752
      %4754 = vmatprep.subr.mxu0 0.0
      %v4755 = vand.u32 %v105, 4294901760
      %v4756 = vsub.f32 %v105, %v4755
      %v4757 = vand.u32 %v4756, 4294901760
      %v4758 = vsub.f32 %v4756, %v4757
      %v4759 = vand.u32 %v4758, 4294901760
      %4760 = vmatpush1.msra.mxu0 %v4759
      %4761 = vmatprep.subr.mxu0 0.0
      %v4762 = vand.u32 %v104, 4294901760
      %v4763 = vsub.f32 %v104, %v4762
      %v4764 = vand.u32 %v4763, 4294901760
      %v4765 = vsub.f32 %v4763, %v4764
      %v4766 = vand.u32 %v4765, 4294901760
      %4767 = vmatpush1.msra.mxu0 %v4766
      %4768 = vmatprep.subr.mxu0 0.0
      %v4769 = vand.u32 %v103, 4294901760
      %v4770 = vsub.f32 %v103, %v4769
      %v4771 = vand.u32 %v4770, 4294901760
      %v4772 = vsub.f32 %v4770, %v4771
      %v4773 = vand.u32 %v4772, 4294901760
      %4774 = vmatpush1.msra.mxu0 %v4773
      %4775 = vmatprep.subr.mxu0 0.0
      %v4776 = vand.u32 %v102, 4294901760
      %v4777 = vsub.f32 %v102, %v4776
      %v4778 = vand.u32 %v4777, 4294901760
      %v4779 = vsub.f32 %v4777, %v4778
      %v4780 = vand.u32 %v4779, 4294901760
      %4781 = vmatpush1.msra.mxu0 %v4780
      %4782 = vmatprep.subr.mxu0 0.0
      %v4783 = vand.u32 %v101, 4294901760
      %v4784 = vsub.f32 %v101, %v4783
      %v4785 = vand.u32 %v4784, 4294901760
      %v4786 = vsub.f32 %v4784, %v4785
      %v4787 = vand.u32 %v4786, 4294901760
      %4788 = vmatpush1.msra.mxu0 %v4787
      %4789 = vmatprep.subr.mxu0 0.0
      %v4790 = vand.u32 %v100, 4294901760
      %v4791 = vsub.f32 %v100, %v4790
      %v4792 = vand.u32 %v4791, 4294901760
      %v4793 = vsub.f32 %v4791, %v4792
      %v4794 = vand.u32 %v4793, 4294901760
      %4795 = vmatpush1.msra.mxu0 %v4794
      %4796 = vmatprep.subr.mxu0 0.0
      %v4797 = vand.u32 %v99, 4294901760
      %v4798 = vsub.f32 %v99, %v4797
      %v4799 = vand.u32 %v4798, 4294901760
      %v4800 = vsub.f32 %v4798, %v4799
      %v4801 = vand.u32 %v4800, 4294901760
      %4802 = vmatpush1.msra.mxu0 %v4801
      %4803 = vmatprep.subr.mxu0 0.0
      %v4804 = vand.u32 %v98, 4294901760
      %v4805 = vsub.f32 %v98, %v4804
      %v4806 = vand.u32 %v4805, 4294901760
      %v4807 = vsub.f32 %v4805, %v4806
      %v4808 = vand.u32 %v4807, 4294901760
      %4809 = vmatpush1.msra.mxu0 %v4808
      %4810 = vmatprep.subr.mxu0 0.0
      %v4811 = vand.u32 %v97, 4294901760
      %v4812 = vsub.f32 %v97, %v4811
      %v4813 = vand.u32 %v4812, 4294901760
      %v4814 = vsub.f32 %v4812, %v4813
      %v4815 = vand.u32 %v4814, 4294901760
      %4816 = vmatpush1.msra.mxu0 %v4815
      %4817 = vmatprep.subr.mxu0 0.0
      %4818 = vmatpush2.msra.mxu0 0.0
      %4819 = vmatprep.subr.mxu0 0.0
      %4820 = vmatpush2.msra.mxu0 0.0
      %4821 = vmatprep.subr.mxu0 0.0
      %4822 = vmatpush2.msra.mxu0 0.0
      %4823 = vmatprep.subr.mxu0 0.0
      %4824 = vmatpush2.msra.mxu0 0.0
      %4825 = vmatprep.subr.mxu0 0.0
      %4826 = vmatpush2.msra.mxu0 0.0
      %4827 = vmatprep.subr.mxu0 0.0
      %4828 = vmatpush2.msra.mxu0 0.0
      %4829 = vmatprep.subr.mxu0 0.0
      %4830 = vmatpush2.msra.mxu0 0.0
      %4831 = vmatprep.subr.mxu0 0.0
      %4832 = vmatpush2.msra.mxu0 0.0
      %4833 = vmatprep.subr.mxu0 0.0
      %4834 = vmatpush2.msra.mxu0 0.0
      %4835 = vmatprep.subr.mxu0 0.0
      %4836 = vmatpush2.msra.mxu0 0.0
      %4837 = vmatprep.subr.mxu0 0.0
      %4838 = vmatpush2.msra.mxu0 0.0
      %4839 = vmatprep.subr.mxu0 0.0
      %4840 = vmatpush2.msra.mxu0 0.0
      %4841 = vmatprep.subr.mxu0 0.0
      %4842 = vmatpush2.msra.mxu0 0.0
      %4843 = vmatprep.subr.mxu0 0.0
      %4844 = vmatpush2.msra.mxu0 0.0
      %4845 = vmatprep.subr.mxu0 0.0
      %4846 = vmatpush2.msra.mxu0 0.0
      %4847 = vmatprep.subr.mxu0 0.0
      %4848 = vmatpush2.msra.mxu0 0.0
      %4849 = vmatprep.mubr.f32.mxu0 0.0
      %v4850 = vand.u32 %v4613, 4294901760
      %4851 = vmatmul.mubr.f32.gmra.mxu0 %v4850
      %v4852 = vpop.f32.mrf.mxu0
      %v4853 = vadd.f32 %v4702, %v4852
      %v4854 = vpop.f32.mrf.mxu0
      %4855 = vdwg.mxu0
      %4856 = vmatprep.subr.mxu0 0.0
      %v4857 = vand.u32 %v112, 4294901760
      %v4858 = vsub.f32 %v112, %v4857
      %4859 = vmatpush1.msra.mxu0 %v4858
      %4860 = vmatprep.subr.mxu0 0.0
      %v4861 = vand.u32 %v111, 4294901760
      %v4862 = vsub.f32 %v111, %v4861
      %4863 = vmatpush1.msra.mxu0 %v4862
      %4864 = vmatprep.subr.mxu0 0.0
      %v4865 = vand.u32 %v110, 4294901760
      %v4866 = vsub.f32 %v110, %v4865
      %4867 = vmatpush1.msra.mxu0 %v4866
      %4868 = vmatprep.subr.mxu0 0.0
      %v4869 = vand.u32 %v109, 4294901760
      %v4870 = vsub.f32 %v109, %v4869
      %4871 = vmatpush1.msra.mxu0 %v4870
      %4872 = vmatprep.subr.mxu0 0.0
      %v4873 = vand.u32 %v108, 4294901760
      %v4874 = vsub.f32 %v108, %v4873
      %4875 = vmatpush1.msra.mxu0 %v4874
      %4876 = vmatprep.subr.mxu0 0.0
      %v4877 = vand.u32 %v107, 4294901760
      %v4878 = vsub.f32 %v107, %v4877
      %4879 = vmatpush1.msra.mxu0 %v4878
      %4880 = vmatprep.subr.mxu0 0.0
      %v4881 = vand.u32 %v106, 4294901760
      %v4882 = vsub.f32 %v106, %v4881
      %4883 = vmatpush1.msra.mxu0 %v4882
      %4884 = vmatprep.subr.mxu0 0.0
      %v4885 = vand.u32 %v105, 4294901760
      %v4886 = vsub.f32 %v105, %v4885
      %4887 = vmatpush1.msra.mxu0 %v4886
      %4888 = vmatprep.subr.mxu0 0.0
      %v4889 = vand.u32 %v104, 4294901760
      %v4890 = vsub.f32 %v104, %v4889
      %4891 = vmatpush1.msra.mxu0 %v4890
      %4892 = vmatprep.subr.mxu0 0.0
      %v4893 = vand.u32 %v103, 4294901760
      %v4894 = vsub.f32 %v103, %v4893
      %4895 = vmatpush1.msra.mxu0 %v4894
      %4896 = vmatprep.subr.mxu0 0.0
      %v4897 = vand.u32 %v102, 4294901760
      %v4898 = vsub.f32 %v102, %v4897
      %4899 = vmatpush1.msra.mxu0 %v4898
      %4900 = vmatprep.subr.mxu0 0.0
      %v4901 = vand.u32 %v101, 4294901760
      %v4902 = vsub.f32 %v101, %v4901
      %4903 = vmatpush1.msra.mxu0 %v4902
      %4904 = vmatprep.subr.mxu0 0.0
      %v4905 = vand.u32 %v100, 4294901760
      %v4906 = vsub.f32 %v100, %v4905
      %4907 = vmatpush1.msra.mxu0 %v4906
      %4908 = vmatprep.subr.mxu0 0.0
      %v4909 = vand.u32 %v99, 4294901760
      %v4910 = vsub.f32 %v99, %v4909
      %4911 = vmatpush1.msra.mxu0 %v4910
      %4912 = vmatprep.subr.mxu0 0.0
      %v4913 = vand.u32 %v98, 4294901760
      %v4914 = vsub.f32 %v98, %v4913
      %4915 = vmatpush1.msra.mxu0 %v4914
      %4916 = vmatprep.subr.mxu0 0.0
      %v4917 = vand.u32 %v97, 4294901760
      %v4918 = vsub.f32 %v97, %v4917
      %4919 = vmatpush1.msra.mxu0 %v4918
      %4920 = vmatprep.subr.mxu0 0.0
      %4921 = vmatpush2.msra.mxu0 0.0
      %4922 = vmatprep.subr.mxu0 0.0
      %4923 = vmatpush2.msra.mxu0 0.0
      %4924 = vmatprep.subr.mxu0 0.0
      %4925 = vmatpush2.msra.mxu0 0.0
      %4926 = vmatprep.subr.mxu0 0.0
      %4927 = vmatpush2.msra.mxu0 0.0
      %4928 = vmatprep.subr.mxu0 0.0
      %4929 = vmatpush2.msra.mxu0 0.0
      %4930 = vmatprep.subr.mxu0 0.0
      %4931 = vmatpush2.msra.mxu0 0.0
      %4932 = vmatprep.subr.mxu0 0.0
      %4933 = vmatpush2.msra.mxu0 0.0
      %4934 = vmatprep.subr.mxu0 0.0
      %4935 = vmatpush2.msra.mxu0 0.0
      %4936 = vmatprep.subr.mxu0 0.0
      %4937 = vmatpush2.msra.mxu0 0.0
      %4938 = vmatprep.subr.mxu0 0.0
      %4939 = vmatpush2.msra.mxu0 0.0
      %4940 = vmatprep.subr.mxu0 0.0
      %4941 = vmatpush2.msra.mxu0 0.0
      %4942 = vmatprep.subr.mxu0 0.0
      %4943 = vmatpush2.msra.mxu0 0.0
      %4944 = vmatprep.subr.mxu0 0.0
      %4945 = vmatpush2.msra.mxu0 0.0
      %4946 = vmatprep.subr.mxu0 0.0
      %4947 = vmatpush2.msra.mxu0 0.0
      %4948 = vmatprep.subr.mxu0 0.0
      %4949 = vmatpush2.msra.mxu0 0.0
      %4950 = vmatprep.subr.mxu0 0.0
      %4951 = vmatpush2.msra.mxu0 0.0
      %4952 = vmatprep.mubr.f32.mxu0 0.0
      %v4953 = vand.u32 %v4613, 4294901760
      %v4954 = vsub.f32 %v4613, %v4953
      %4955 = vmatmul.mubr.f32.gmra.mxu0 %v4954
      %v4956 = vpop.f32.mrf.mxu0
      %v4957 = vadd.f32 %v4853, %v4956
      %v4958 = vpop.f32.mrf.mxu0
      %4959 = vdwg.mxu0
      %4960 = vmatprep.subr.mxu0 0.0
      %v4961 = vand.u32 %v112, 4294901760
      %4962 = vmatpush1.msra.mxu0 %v4961
      %4963 = vmatprep.subr.mxu0 0.0
      %v4964 = vand.u32 %v111, 4294901760
      %4965 = vmatpush1.msra.mxu0 %v4964
      %4966 = vmatprep.subr.mxu0 0.0
      %v4967 = vand.u32 %v110, 4294901760
      %4968 = vmatpush1.msra.mxu0 %v4967
      %4969 = vmatprep.subr.mxu0 0.0
      %v4970 = vand.u32 %v109, 4294901760
      %4971 = vmatpush1.msra.mxu0 %v4970
      %4972 = vmatprep.subr.mxu0 0.0
      %v4973 = vand.u32 %v108, 4294901760
      %4974 = vmatpush1.msra.mxu0 %v4973
      %4975 = vmatprep.subr.mxu0 0.0
      %v4976 = vand.u32 %v107, 4294901760
      %4977 = vmatpush1.msra.mxu0 %v4976
      %4978 = vmatprep.subr.mxu0 0.0
      %v4979 = vand.u32 %v106, 4294901760
      %4980 = vmatpush1.msra.mxu0 %v4979
      %4981 = vmatprep.subr.mxu0 0.0
      %v4982 = vand.u32 %v105, 4294901760
      %4983 = vmatpush1.msra.mxu0 %v4982
      %4984 = vmatprep.subr.mxu0 0.0
      %v4985 = vand.u32 %v104, 4294901760
      %4986 = vmatpush1.msra.mxu0 %v4985
      %4987 = vmatprep.subr.mxu0 0.0
      %v4988 = vand.u32 %v103, 4294901760
      %4989 = vmatpush1.msra.mxu0 %v4988
      %4990 = vmatprep.subr.mxu0 0.0
      %v4991 = vand.u32 %v102, 4294901760
      %4992 = vmatpush1.msra.mxu0 %v4991
      %4993 = vmatprep.subr.mxu0 0.0
      %v4994 = vand.u32 %v101, 4294901760
      %4995 = vmatpush1.msra.mxu0 %v4994
      %4996 = vmatprep.subr.mxu0 0.0
      %v4997 = vand.u32 %v100, 4294901760
      %4998 = vmatpush1.msra.mxu0 %v4997
      %4999 = vmatprep.subr.mxu0 0.0
      %v5000 = vand.u32 %v99, 4294901760
      %5001 = vmatpush1.msra.mxu0 %v5000
      %5002 = vmatprep.subr.mxu0 0.0
      %v5003 = vand.u32 %v98, 4294901760
      %5004 = vmatpush1.msra.mxu0 %v5003
      %5005 = vmatprep.subr.mxu0 0.0
      %v5006 = vand.u32 %v97, 4294901760
      %5007 = vmatpush1.msra.mxu0 %v5006
      %5008 = vmatprep.subr.mxu0 0.0
      %5009 = vmatpush2.msra.mxu0 0.0
      %5010 = vmatprep.subr.mxu0 0.0
      %5011 = vmatpush2.msra.mxu0 0.0
      %5012 = vmatprep.subr.mxu0 0.0
      %5013 = vmatpush2.msra.mxu0 0.0
      %5014 = vmatprep.subr.mxu0 0.0
      %5015 = vmatpush2.msra.mxu0 0.0
      %5016 = vmatprep.subr.mxu0 0.0
      %5017 = vmatpush2.msra.mxu0 0.0
      %5018 = vmatprep.subr.mxu0 0.0
      %5019 = vmatpush2.msra.mxu0 0.0
      %5020 = vmatprep.subr.mxu0 0.0
      %5021 = vmatpush2.msra.mxu0 0.0
      %5022 = vmatprep.subr.mxu0 0.0
      %5023 = vmatpush2.msra.mxu0 0.0
      %5024 = vmatprep.subr.mxu0 0.0
      %5025 = vmatpush2.msra.mxu0 0.0
      %5026 = vmatprep.subr.mxu0 0.0
      %5027 = vmatpush2.msra.mxu0 0.0
      %5028 = vmatprep.subr.mxu0 0.0
      %5029 = vmatpush2.msra.mxu0 0.0
      %5030 = vmatprep.subr.mxu0 0.0
      %5031 = vmatpush2.msra.mxu0 0.0
      %5032 = vmatprep.subr.mxu0 0.0
      %5033 = vmatpush2.msra.mxu0 0.0
      %5034 = vmatprep.subr.mxu0 0.0
      %5035 = vmatpush2.msra.mxu0 0.0
      %5036 = vmatprep.subr.mxu0 0.0
      %5037 = vmatpush2.msra.mxu0 0.0
      %5038 = vmatprep.subr.mxu0 0.0
      %5039 = vmatpush2.msra.mxu0 0.0
      %5040 = vmatprep.mubr.f32.mxu0 0.0
      %v5041 = vand.u32 %v4613, 4294901760
      %v5042 = vsub.f32 %v4613, %v5041
      %v5043 = vand.u32 %v5042, 4294901760
      %5044 = vmatmul.mubr.f32.gmra.mxu0 %v5043
      %v5045 = vpop.f32.mrf.mxu0
      %v5046 = vadd.f32 %v4957, %v5045
      %v5047 = vpop.f32.mrf.mxu0
      %5048 = vdwg.mxu0
      %5049 = vmatprep.subr.mxu0 0.0
      %v5050 = vand.u32 %v112, 4294901760
      %v5051 = vsub.f32 %v112, %v5050
      %v5052 = vand.u32 %v5051, 4294901760
      %5053 = vmatpush1.msra.mxu0 %v5052
      %5054 = vmatprep.subr.mxu0 0.0
      %v5055 = vand.u32 %v111, 4294901760
      %v5056 = vsub.f32 %v111, %v5055
      %v5057 = vand.u32 %v5056, 4294901760
      %5058 = vmatpush1.msra.mxu0 %v5057
      %5059 = vmatprep.subr.mxu0 0.0
      %v5060 = vand.u32 %v110, 4294901760
      %v5061 = vsub.f32 %v110, %v5060
      %v5062 = vand.u32 %v5061, 4294901760
      %5063 = vmatpush1.msra.mxu0 %v5062
      %5064 = vmatprep.subr.mxu0 0.0
      %v5065 = vand.u32 %v109, 4294901760
      %v5066 = vsub.f32 %v109, %v5065
      %v5067 = vand.u32 %v5066, 4294901760
      %5068 = vmatpush1.msra.mxu0 %v5067
      %5069 = vmatprep.subr.mxu0 0.0
      %v5070 = vand.u32 %v108, 4294901760
      %v5071 = vsub.f32 %v108, %v5070
      %v5072 = vand.u32 %v5071, 4294901760
      %5073 = vmatpush1.msra.mxu0 %v5072
      %5074 = vmatprep.subr.mxu0 0.0
      %v5075 = vand.u32 %v107, 4294901760
      %v5076 = vsub.f32 %v107, %v5075
      %v5077 = vand.u32 %v5076, 4294901760
      %5078 = vmatpush1.msra.mxu0 %v5077
      %5079 = vmatprep.subr.mxu0 0.0
      %v5080 = vand.u32 %v106, 4294901760
      %v5081 = vsub.f32 %v106, %v5080
      %v5082 = vand.u32 %v5081, 4294901760
      %5083 = vmatpush1.msra.mxu0 %v5082
      %5084 = vmatprep.subr.mxu0 0.0
      %v5085 = vand.u32 %v105, 4294901760
      %v5086 = vsub.f32 %v105, %v5085
      %v5087 = vand.u32 %v5086, 4294901760
      %5088 = vmatpush1.msra.mxu0 %v5087
      %5089 = vmatprep.subr.mxu0 0.0
      %v5090 = vand.u32 %v104, 4294901760
      %v5091 = vsub.f32 %v104, %v5090
      %v5092 = vand.u32 %v5091, 4294901760
      %5093 = vmatpush1.msra.mxu0 %v5092
      %5094 = vmatprep.subr.mxu0 0.0
      %v5095 = vand.u32 %v103, 4294901760
      %v5096 = vsub.f32 %v103, %v5095
      %v5097 = vand.u32 %v5096, 4294901760
      %5098 = vmatpush1.msra.mxu0 %v5097
      %5099 = vmatprep.subr.mxu0 0.0
      %v5100 = vand.u32 %v102, 4294901760
      %v5101 = vsub.f32 %v102, %v5100
      %v5102 = vand.u32 %v5101, 4294901760
      %5103 = vmatpush1.msra.mxu0 %v5102
      %5104 = vmatprep.subr.mxu0 0.0
      %v5105 = vand.u32 %v101, 4294901760
      %v5106 = vsub.f32 %v101, %v5105
      %v5107 = vand.u32 %v5106, 4294901760
      %5108 = vmatpush1.msra.mxu0 %v5107
      %5109 = vmatprep.subr.mxu0 0.0
      %v5110 = vand.u32 %v100, 4294901760
      %v5111 = vsub.f32 %v100, %v5110
      %v5112 = vand.u32 %v5111, 4294901760
      %5113 = vmatpush1.msra.mxu0 %v5112
      %5114 = vmatprep.subr.mxu0 0.0
      %v5115 = vand.u32 %v99, 4294901760
      %v5116 = vsub.f32 %v99, %v5115
      %v5117 = vand.u32 %v5116, 4294901760
      %5118 = vmatpush1.msra.mxu0 %v5117
      %5119 = vmatprep.subr.mxu0 0.0
      %v5120 = vand.u32 %v98, 4294901760
      %v5121 = vsub.f32 %v98, %v5120
      %v5122 = vand.u32 %v5121, 4294901760
      %5123 = vmatpush1.msra.mxu0 %v5122
      %5124 = vmatprep.subr.mxu0 0.0
      %v5125 = vand.u32 %v97, 4294901760
      %v5126 = vsub.f32 %v97, %v5125
      %v5127 = vand.u32 %v5126, 4294901760
      %5128 = vmatpush1.msra.mxu0 %v5127
      %5129 = vmatprep.subr.mxu0 0.0
      %5130 = vmatpush2.msra.mxu0 0.0
      %5131 = vmatprep.subr.mxu0 0.0
      %5132 = vmatpush2.msra.mxu0 0.0
      %5133 = vmatprep.subr.mxu0 0.0
      %5134 = vmatpush2.msra.mxu0 0.0
      %5135 = vmatprep.subr.mxu0 0.0
      %5136 = vmatpush2.msra.mxu0 0.0
      %5137 = vmatprep.subr.mxu0 0.0
      %5138 = vmatpush2.msra.mxu0 0.0
      %5139 = vmatprep.subr.mxu0 0.0
      %5140 = vmatpush2.msra.mxu0 0.0
      %5141 = vmatprep.subr.mxu0 0.0
      %5142 = vmatpush2.msra.mxu0 0.0
      %5143 = vmatprep.subr.mxu0 0.0
      %5144 = vmatpush2.msra.mxu0 0.0
      %5145 = vmatprep.subr.mxu0 0.0
      %5146 = vmatpush2.msra.mxu0 0.0
      %5147 = vmatprep.subr.mxu0 0.0
      %5148 = vmatpush2.msra.mxu0 0.0
      %5149 = vmatprep.subr.mxu0 0.0
      %5150 = vmatpush2.msra.mxu0 0.0
      %5151 = vmatprep.subr.mxu0 0.0
      %5152 = vmatpush2.msra.mxu0 0.0
      %5153 = vmatprep.subr.mxu0 0.0
      %5154 = vmatpush2.msra.mxu0 0.0
      %5155 = vmatprep.subr.mxu0 0.0
      %5156 = vmatpush2.msra.mxu0 0.0
      %5157 = vmatprep.subr.mxu0 0.0
      %5158 = vmatpush2.msra.mxu0 0.0
      %5159 = vmatprep.subr.mxu0 0.0
      %5160 = vmatpush2.msra.mxu0 0.0
      %5161 = vmatprep.mubr.f32.mxu0 0.0
      %v5162 = vand.u32 %v4613, 4294901760
      %5163 = vmatmul.mubr.f32.gmra.mxu0 %v5162
      %v5164 = vpop.f32.mrf.mxu0
      %v5165 = vadd.f32 %v5046, %v5164
      %v5166 = vpop.f32.mrf.mxu0
      %5167 = vdwg.mxu0
      %5168 = vmatprep.subr.mxu0 0.0
      %v5169 = vand.u32 %v112, 4294901760
      %5170 = vmatpush1.msra.mxu0 %v5169
      %5171 = vmatprep.subr.mxu0 0.0
      %v5172 = vand.u32 %v111, 4294901760
      %5173 = vmatpush1.msra.mxu0 %v5172
      %5174 = vmatprep.subr.mxu0 0.0
      %v5175 = vand.u32 %v110, 4294901760
      %5176 = vmatpush1.msra.mxu0 %v5175
      %5177 = vmatprep.subr.mxu0 0.0
      %v5178 = vand.u32 %v109, 4294901760
      %5179 = vmatpush1.msra.mxu0 %v5178
      %5180 = vmatprep.subr.mxu0 0.0
      %v5181 = vand.u32 %v108, 4294901760
      %5182 = vmatpush1.msra.mxu0 %v5181
      %5183 = vmatprep.subr.mxu0 0.0
      %v5184 = vand.u32 %v107, 4294901760
      %5185 = vmatpush1.msra.mxu0 %v5184
      %5186 = vmatprep.subr.mxu0 0.0
      %v5187 = vand.u32 %v106, 4294901760
      %5188 = vmatpush1.msra.mxu0 %v5187
      %5189 = vmatprep.subr.mxu0 0.0
      %v5190 = vand.u32 %v105, 4294901760
      %5191 = vmatpush1.msra.mxu0 %v5190
      %5192 = vmatprep.subr.mxu0 0.0
      %v5193 = vand.u32 %v104, 4294901760
      %5194 = vmatpush1.msra.mxu0 %v5193
      %5195 = vmatprep.subr.mxu0 0.0
      %v5196 = vand.u32 %v103, 4294901760
      %5197 = vmatpush1.msra.mxu0 %v5196
      %5198 = vmatprep.subr.mxu0 0.0
      %v5199 = vand.u32 %v102, 4294901760
      %5200 = vmatpush1.msra.mxu0 %v5199
      %5201 = vmatprep.subr.mxu0 0.0
      %v5202 = vand.u32 %v101, 4294901760
      %5203 = vmatpush1.msra.mxu0 %v5202
      %5204 = vmatprep.subr.mxu0 0.0
      %v5205 = vand.u32 %v100, 4294901760
      %5206 = vmatpush1.msra.mxu0 %v5205
      %5207 = vmatprep.subr.mxu0 0.0
      %v5208 = vand.u32 %v99, 4294901760
      %5209 = vmatpush1.msra.mxu0 %v5208
      %5210 = vmatprep.subr.mxu0 0.0
      %v5211 = vand.u32 %v98, 4294901760
      %5212 = vmatpush1.msra.mxu0 %v5211
      %5213 = vmatprep.subr.mxu0 0.0
      %v5214 = vand.u32 %v97, 4294901760
      %5215 = vmatpush1.msra.mxu0 %v5214
      %5216 = vmatprep.subr.mxu0 0.0
      %5217 = vmatpush2.msra.mxu0 0.0
      %5218 = vmatprep.subr.mxu0 0.0
      %5219 = vmatpush2.msra.mxu0 0.0
      %5220 = vmatprep.subr.mxu0 0.0
      %5221 = vmatpush2.msra.mxu0 0.0
      %5222 = vmatprep.subr.mxu0 0.0
      %5223 = vmatpush2.msra.mxu0 0.0
      %5224 = vmatprep.subr.mxu0 0.0
      %5225 = vmatpush2.msra.mxu0 0.0
      %5226 = vmatprep.subr.mxu0 0.0
      %5227 = vmatpush2.msra.mxu0 0.0
      %5228 = vmatprep.subr.mxu0 0.0
      %5229 = vmatpush2.msra.mxu0 0.0
      %5230 = vmatprep.subr.mxu0 0.0
      %5231 = vmatpush2.msra.mxu0 0.0
      %5232 = vmatprep.subr.mxu0 0.0
      %5233 = vmatpush2.msra.mxu0 0.0
      %5234 = vmatprep.subr.mxu0 0.0
      %5235 = vmatpush2.msra.mxu0 0.0
      %5236 = vmatprep.subr.mxu0 0.0
      %5237 = vmatpush2.msra.mxu0 0.0
      %5238 = vmatprep.subr.mxu0 0.0
      %5239 = vmatpush2.msra.mxu0 0.0
      %5240 = vmatprep.subr.mxu0 0.0
      %5241 = vmatpush2.msra.mxu0 0.0
      %5242 = vmatprep.subr.mxu0 0.0
      %5243 = vmatpush2.msra.mxu0 0.0
      %5244 = vmatprep.subr.mxu0 0.0
      %5245 = vmatpush2.msra.mxu0 0.0
      %5246 = vmatprep.subr.mxu0 0.0
      %5247 = vmatpush2.msra.mxu0 0.0
      %5248 = vmatprep.mubr.f32.mxu0 0.0
      %v5249 = vand.u32 %v4613, 4294901760
      %5250 = vmatmul.mubr.f32.gmra.mxu0 %v5249
      %v5251 = vpop.f32.mrf.mxu0
      %v5252 = vadd.f32 %v5165, %v5251
      %v5253 = vpop.f32.mrf.mxu0
      %5254 = vdwg.mxu0
      %v5255 = vmul.f32 %v5252, 0.9
      %v5256 = vadd.f32 %v5255, 0.00078125
      %v5257 = vsub.f32 %v5256, %v88
      %v5258 = vmul.f32 %v5257, %v5257
      %vm5259 = vcmask 1040384
      %v5260 = vsel %vm5259, %v5258, 0.0
      %5261 = vadd.xlane.f32.xlu0 %v5260
      %v5262 = vpop.xlane.xlu0 %5261
      %v5263 = vrot.slane %v5262, 4
      %v5264 = vadd.f32 %v5262, %v5263
      %v5265 = vrot.slane %v5264, 2
      %v5266 = vadd.f32 %v5264, %v5265
      %v5267 = vrot.slane %v5266, 1
      %v5268 = vadd.f32 %v5266, %v5267
      %s5269 = vtos %v5268
      %s5270 = sadd.s32 %s90, 8
    $region44: #{pagerank.1} parent=1 // loop_footer
      _
    $region45: #{pagerank.1} parent=1 // loop_footer_branch
      %87 = sbr.rel target = $region41
    $region46: #{pagerank.1} parent=1 // loop_exit
      _
    %5271 = vst [vmem:[#allocation4] sm:$0x1] %v88
    // Predicated region
    $region47: #{pagerank.1} parent=1 // pred_check
      _
    $region48: #{pagerank.1} parent=1 // pred_check_branch
      %5273 = sbr.rel (0) target = $region50
    $region49: #{pagerank.1} parent=1 // pred_region
      %s5275 = ssub.s32 16, 16
      %5276 = vsyncadd [#allocation5], %s5275
      %s5278 = sshll.u32 [#allocation4], 4
      %s5279 = int_to_ptr.vmem [resolvable:$true] %s5278
      %5281 = dma.vmem_to_hbm [thread:$0]  %s5279, 16, %s2, [#allocation5]
    $region50: #{pagerank.1} parent=1 // pred_fallthru
      _
    // Predicated region
    $region51: #{pagerank.1} parent=1 // pred_check
      _
    $region52: #{pagerank.1} parent=1 // pred_check_branch
      %5283 = sbr.rel (0) target = $region54
    $region53: #{pagerank.1} parent=1 // pred_region
      %5284 = dma.done [#allocation5], 16
    $region54: #{pagerank.1} parent=1 // pred_fallthru
      _
    %5285 = vsyncpa [#allocation5], 1
  %5286 = vsyncmov [#allocation3]
  %s5287 = vpop.sfrf %5286
  %p5288 = scmp.eq.s32.totalorder %s5287, 0
  %p5289 = pneg %p5288
  %5291 = shalt.err (%p5289)

</llo_original>
